<compile_context>
chip_gen: v6e
topology: v6e:2x2x1
jax: 0.10.0
libtpu: 0.0.40
codegen_flags: <defaults>
</compile_context>

<pallas_src>
import functools

import jax
import jax.numpy as jnp
from jax import lax
from jax.experimental import pallas as pl
from jax.experimental.pallas import tpu as pltpu


_COMPILER_PARAMS = pltpu.CompilerParams(
    dimension_semantics=("parallel",),          # grid over batch; v7x megacore
    vmem_limit_bytes=16 * 1024 * 1024,          # actual use is a few MiB
)


# ---------------------------------------------------------------------------
# Pallas kernels
# ---------------------------------------------------------------------------
def _conv_pool_kernel(a_ref, w_ref, b_ref, o_ref):
    """Fused conv (transposed matmul) + 2x2 max-pool + bias + ReLU.

    a_ref: (1, 4, K, P)   quadrant-ordered transposed im2col patches
                          (quadrant q = pooling-window corner (q//2, q%2))
    w_ref: (Cout, K)      repacked conv weight
    b_ref: (Cout, 1)      bias (broadcast along the lane/spatial dim)
    o_ref: (1, Cout, P)   pooled output, lane-dense (last dim = spatial P)
    """
    w = w_ref[...]
    acc = None
    for q in range(4):
        y = jnp.dot(w, a_ref[0, q], preferred_element_type=jnp.float32)
        acc = y if acc is None else jnp.maximum(acc, y)
    # relu(max_q(y_q) + b) == max_q(relu(y_q + b)) since bias is shared.
    o_ref[0] = jnp.maximum(acc + b_ref[...], 0.0)


def _conv_pool_fc_kernel(a_ref, w2_ref, b2_ref, wfc1_ref, bfc1_ref,
                         wfc2_ref, bfc2_ref, wfc3_ref, bfc3_ref,
                         o_ref, p_scratch, *, cout):
    """conv2 + bias + ReLU + 2x2 max-pool + fc1 + ReLU + fc2 + ReLU + fc3.

    a_ref:     (1, 4, K2, P2)  quadrant-ordered transposed im2col patches
    w2_ref:    (cout, K2)      conv2 weight;  b2_ref: (cout, 1)
    wfc1_ref:  (cout, P2, F1)  fc1 weight in PyTorch NCHW-flatten (c, p) order
    bfc1_ref:  (1, F1)
    wfc2_ref:  (F1, F2), bfc2_ref: (1, F2)
    wfc3_ref:  (F2, F3), bfc3_ref: (1, F3)
    o_ref:     (1, 1, F3)      logits for this image
    p_scratch: (cout, P2)      VMEM scratch holding the pooled conv2 output
    """
    w2 = w2_ref[...]
    acc = None
    for q in range(4):
        y = jnp.dot(w2, a_ref[0, q], preferred_element_type=jnp.float32)
        acc = y if acc is None else jnp.maximum(acc, y)
    p_scratch[...] = jnp.maximum(acc + b2_ref[...], 0.0)

    # fc1: contract over (channel, spatial) — exactly PyTorch's
    # x.view(-1, 16*13*13) order — done as `cout` small (1,P2)@(P2,F1) dots so
    # no in-kernel cross-tile reshape/flatten is needed.
    h = bfc1_ref[...]                                            # (1, F1)
    for c in range(cout):
        h = h + jnp.dot(p_scratch[c:c + 1, :], wfc1_ref[c],
                        preferred_element_type=jnp.float32)
    h = jnp.maximum(h, 0.0)

    # TODO(synk): nn.Dropout(0.5) is identity at inference; training-mode
    # stochastic dropout intentionally not implemented.
    h = jnp.maximum(
        jnp.dot(h, wfc2_ref[...], preferred_element_type=jnp.float32)
        + bfc2_ref[...], 0.0)
    out = (jnp.dot(h, wfc3_ref[...], preferred_element_type=jnp.float32)
           + bfc3_ref[...])
    o_ref[0] = out


# ---------------------------------------------------------------------------
# JAX glue: quadrant-ordered transposed im2col
# ---------------------------------------------------------------------------
def _quadrant_patches_t(x, kh, kw):
    """Quadrant-ordered transposed im2col for a fused (conv + 2x2 max-pool).

    x: (N, C, H, W)  ->  (N, 4, kh*kw*C, PH*PW) with PH=(H-kh+1)//2 etc.
    Row order is (di, dj, ci) (matches the weight repack); column order is
    (ph, pw); quadrant q encodes the pooling-window corner (q//2, q%2).
    """
    N, C, H, W = x.shape
    OH, OW = H - kh + 1, W - kw + 1
    PH, PW = OH // 2, OW // 2
    assert OH % 2 == 0 and OW % 2 == 0, "2x2 max-pool needs even conv output"
    quads = []
    for a in (0, 1):
        for b in (0, 1):
            taps = [
                x[:, :, a + di: a + di + 2 * PH: 2,
                        b + dj: b + dj + 2 * PW: 2]
                for di in range(kh) for dj in range(kw)
            ]                                          # each (N, C, PH, PW)
            t = jnp.stack(taps, axis=1)                # (N, kh*kw, C, PH, PW)
            quads.append(t.reshape(N, kh * kw * C, PH * PW))
    return jnp.stack(quads, axis=1)                    # (N, 4, kh*kw*C, PH*PW)


# ---------------------------------------------------------------------------
# Kernel wrappers
# ---------------------------------------------------------------------------
def conv_relu_pool(x_nchw, w_t, b_col, kh=5, kw=5):
    """conv(kh x kw, valid, stride 1) + bias + ReLU + 2x2 max-pool.

    x_nchw: (N, C, H, W), w_t: (Cout, kh*kw*C), b_col: (Cout, 1)
    returns: (N, Cout, PH, PW)
    """
    N, C, H, W = x_nchw.shape
    PH, PW = (H - kh + 1) // 2, (W - kw + 1) // 2
    P = PH * PW
    cout, K = w_t.shape
    a = _quadrant_patches_t(x_nchw.astype(jnp.float32), kh, kw)   # (N,4,K,P)
    out = pl.pallas_call(
        _conv_pool_kernel,
        out_shape=jax.ShapeDtypeStruct((N, cout, P), jnp.float32),
        grid=(N,),
        in_specs=[
            pl.BlockSpec((1, 4, K, P), lambda n: (n, 0, 0, 0)),
            pl.BlockSpec((cout, K), lambda n: (0, 0)),
            pl.BlockSpec((cout, 1), lambda n: (0, 0)),
        ],
        out_specs=pl.BlockSpec((1, cout, P), lambda n: (n, 0, 0)),
        compiler_params=_COMPILER_PARAMS,
    )(a, w_t, b_col)
    return out.reshape(N, cout, PH, PW)


def conv_pool_fc_head(x_nchw, kp, kh=5, kw=5):
    """conv2 + ReLU + 2x2 max-pool + fc1 + ReLU + fc2 + ReLU + fc3."""
    N, C, H, W = x_nchw.shape
    PH, PW = (H - kh + 1) // 2, (W - kw + 1) // 2
    P = PH * PW
    cout, K = kp["w2_t"].shape
    f1 = kp["wfc1"].shape[-1]
    f2 = kp["wfc2"].shape[-1]
    f3 = kp["wfc3"].shape[-1]
    a = _quadrant_patches_t(x_nchw.astype(jnp.float32), kh, kw)   # (N,4,K,P)
    kernel = functools.partial(_conv_pool_fc_kernel, cout=cout)
    out = pl.pallas_call(
        kernel,
        out_shape=jax.ShapeDtypeStruct((N, 1, f3), jnp.float32),
        grid=(N,),
        in_specs=[
            pl.BlockSpec((1, 4, K, P), lambda n: (n, 0, 0, 0)),
            pl.BlockSpec((cout, K), lambda n: (0, 0)),
            pl.BlockSpec((cout, 1), lambda n: (0, 0)),
            pl.BlockSpec((cout, P, f1), lambda n: (0, 0, 0)),
            pl.BlockSpec((1, f1), lambda n: (0, 0)),
            pl.BlockSpec((f1, f2), lambda n: (0, 0)),
            pl.BlockSpec((1, f2), lambda n: (0, 0)),
            pl.BlockSpec((f2, f3), lambda n: (0, 0)),
            pl.BlockSpec((1, f3), lambda n: (0, 0)),
        ],
        out_specs=pl.BlockSpec((1, 1, f3), lambda n: (n, 0, 0)),
        scratch_shapes=[pltpu.VMEM((cout, P), jnp.float32)],
        compiler_params=_COMPILER_PARAMS,
    )(a, kp["w2_t"], kp["b2_col"], kp["wfc1"], kp["bfc1"],
      kp["wfc2"], kp["bfc2"], kp["wfc3"], kp["bfc3"])
    return out.reshape(N, f3)


# ---------------------------------------------------------------------------
# Parameter prep (one-time, host-side) and forward pass
# ---------------------------------------------------------------------------
def prepare_params(params):
    """One-time repack of PyTorch-shaped weights into kernel layouts."""
    c1 = params["conv1_w"]                       # (6, 3, 5, 5)
    c2 = params["conv2_w"]                       # (16, 6, 5, 5)
    cout2 = c2.shape[0]
    p2 = 13 * 13
    f32 = jnp.float32
    return {
        # conv: (Cout, Cin, KH, KW) -> (Cout, KH*KW*Cin), tap order (di,dj,ci)
        # matching _quadrant_patches_t row order.
        "w1_t": jnp.transpose(c1, (0, 2, 3, 1)).reshape(c1.shape[0], -1).astype(f32),
        "b1_col": params["conv1_b"].reshape(-1, 1).astype(f32),
        "w2_t": jnp.transpose(c2, (0, 2, 3, 1)).reshape(cout2, -1).astype(f32),
        "b2_col": params["conv2_b"].reshape(-1, 1).astype(f32),
        # fc1: (120, 16*13*13) -> (16, 169, 120); PyTorch's view() flattens in
        # (c, h, w) order, which is exactly this (c, p) layout.
        "wfc1": params["fc1_w"].T.reshape(cout2, p2, -1).astype(f32),
        "bfc1": params["fc1_b"].reshape(1, -1).astype(f32),
        "wfc2": params["fc2_w"].T.astype(f32),
        "bfc2": params["fc2_b"].reshape(1, -1).astype(f32),
        "wfc3": params["fc3_w"].T.astype(f32),
        "bfc3": params["fc3_b"].reshape(1, -1).astype(f32),
    }


def simple_cnn_forward(x_nchw, kp):
    x = x_nchw.astype(jnp.float32)                        # (N, 3, 64, 64)
    x = conv_relu_pool(x, kp["w1_t"], kp["b1_col"])       # (N, 6, 30, 30)
    return conv_pool_fc_head(x, kp)                       # (N, 2)


# ---------------------------------------------------------------------------
# Pure-JAX reference (matches the PyTorch module) and synthetic params
# ---------------------------------------------------------------------------
def reference_forward(x, params):
    hi = lax.Precision.HIGHEST

    def conv(x, w, b):
        y = lax.conv_general_dilated(
            x, w, window_strides=(1, 1), padding="VALID",
            dimension_numbers=("NCHW", "OIHW", "NCHW"), precision=hi)
        return y + b[None, :, None, None]

    def pool(x):
        return lax.reduce_window(x, -jnp.inf, lax.max,
                                 (1, 1, 2, 2), (1, 1, 2, 2), "VALID")

    x = pool(jax.nn.relu(conv(x, params["conv1_w"], params["conv1_b"])))
    x = pool(jax.nn.relu(conv(x, params["conv2_w"], params["conv2_b"])))
    x = x.reshape(x.shape[0], -1)
    x = jax.nn.relu(jnp.dot(x, params["fc1_w"].T, precision=hi) + params["fc1_b"])
    x = jax.nn.relu(jnp.dot(x, params["fc2_w"].T, precision=hi) + params["fc2_b"])
    return jnp.dot(x, params["fc3_w"].T, precision=hi) + params["fc3_b"]


def init_params(key):
    """Deterministic synthetic parameters with PyTorch shapes."""
    ks = jax.random.split(key, 10)
    s = 0.05
    return {
        "conv1_w": s * jax.random.normal(ks[0], (6, 3, 5, 5), jnp.float32),
        "conv1_b": s * jax.random.normal(ks[1], (6,), jnp.float32),
        "conv2_w": s * jax.random.normal(ks[2], (16, 6, 5, 5), jnp.float32),
        "conv2_b": s * jax.random.normal(ks[3], (16,), jnp.float32),
        "fc1_w": s * jax.random.normal(ks[4], (120, 16 * 13 * 13), jnp.float32),
        "fc1_b": s * jax.random.normal(ks[5], (120,), jnp.float32),
        "fc2_w": s * jax.random.normal(ks[6], (84, 120), jnp.float32),
        "fc2_b": s * jax.random.normal(ks[7], (84,), jnp.float32),
        "fc3_w": s * jax.random.normal(ks[8], (2, 84), jnp.float32),
        "fc3_b": s * jax.random.normal(ks[9], (2,), jnp.float32),
    }


if __name__ == "__main__":
    key = jax.random.PRNGKey(0)
    k_x, k_p = jax.random.split(key)
    # Spatial size 64 is forced by fc1 = Linear(16*13*13, 120):
    # ((64-4)/2 - 4)/2 = 13.
    x = jax.random.normal(k_x, (2, 3, 64, 64), jnp.float32)
    params = init_params(k_p)
    kparams = prepare_params(params)        # one-time host-side weight repack

    fwd = jax.jit(simple_cnn_forward)
    out = fwd(x, kparams)
    jax.block_until_ready(out)
    assert out.shape == (2, 2) and out.dtype == jnp.float32

    ref = reference_forward(x, params)
    err = float(jnp.max(jnp.abs(out - ref)))
    assert err < 1e-2, f"mismatch vs reference: max abs err {err}"
    print("KERNEL_OK")
</pallas_src>

<mosaic_0001>
module attributes {stable_mosaic.version = 11 : i64} {
  func.func @_conv_pool_kernel(%arg0: i32, %arg1: memref<1x4x75x900xf32, #tpu.memory_space<vmem>>, %arg2: memref<6x75xf32, #tpu.memory_space<vmem>>, %arg3: memref<6x1xf32, #tpu.memory_space<vmem>>, %arg4: memref<1x6x900xf32, #tpu.memory_space<vmem>>) attributes {dimension_semantics = [#tpu.dimension_semantics<parallel>], iteration_bounds = array<i64: 2>, scalar_prefetch = 0 : i64, scratch_operands = 0 : i64, tpu.core_type = #tpu.core_type<tc>, window_params = [{transform_indices = @transform_0, window_bounds = array<i64: 1, 4, 75, 900>}, {pipeline_mode = #tpu.pipeline_mode<synchronous>, transform_indices = @transform_1, window_bounds = array<i64: 6, 75>}, {pipeline_mode = #tpu.pipeline_mode<synchronous>, transform_indices = @transform_2, window_bounds = array<i64: 6, 1>}, {transform_indices = @transform_3, window_bounds = array<i64: 1, 6, 900>}]} {
    %c0 = arith.constant 0 : index
    %c0_0 = arith.constant 0 : index
    %0 = vector.load %arg2[%c0, %c0_0] : memref<6x75xf32, #tpu.memory_space<vmem>>, vector<6x75xf32>
    %c0_1 = arith.constant 0 : index
    %c0_2 = arith.constant 0 : index
    %c0_3 = arith.constant 0 : index
    %c0_4 = arith.constant 0 : index
    %1 = vector.load %arg1[%c0_1, %c0_2, %c0_3, %c0_4] : memref<1x4x75x900xf32, #tpu.memory_space<vmem>>, vector<1x1x75x900xf32>
    %2 = vector.shape_cast %1 : vector<1x1x75x900xf32> to vector<75x900xf32>
    %cst = arith.constant dense<0.000000e+00> : vector<6x900xf32>
    %3 = tpu.matmul %0, %2, %cst {dimension_numbers = #tpu.dot_dimension_numbers<[1], [0], [0], [1], [0, 0, 1, 1], [], []>} : vector<6x75xf32>, vector<75x900xf32>, vector<6x900xf32> -> vector<6x900xf32>
    %c0_5 = arith.constant 0 : index
    %c1 = arith.constant 1 : index
    %c0_6 = arith.constant 0 : index
    %c0_7 = arith.constant 0 : index
    %4 = vector.load %arg1[%c0_5, %c1, %c0_6, %c0_7] : memref<1x4x75x900xf32, #tpu.memory_space<vmem>>, vector<1x1x75x900xf32>
    %5 = vector.shape_cast %4 : vector<1x1x75x900xf32> to vector<75x900xf32>
    %cst_8 = arith.constant dense<0.000000e+00> : vector<6x900xf32>
    %6 = tpu.matmul %0, %5, %cst_8 {dimension_numbers = #tpu.dot_dimension_numbers<[1], [0], [0], [1], [0, 0, 1, 1], [], []>} : vector<6x75xf32>, vector<75x900xf32>, vector<6x900xf32> -> vector<6x900xf32>
    %7 = arith.maximumf %3, %6 : vector<6x900xf32>
    %c0_9 = arith.constant 0 : index
    %c2 = arith.constant 2 : index
    %c0_10 = arith.constant 0 : index
    %c0_11 = arith.constant 0 : index
    %8 = vector.load %arg1[%c0_9, %c2, %c0_10, %c0_11] : memref<1x4x75x900xf32, #tpu.memory_space<vmem>>, vector<1x1x75x900xf32>
    %9 = vector.shape_cast %8 : vector<1x1x75x900xf32> to vector<75x900xf32>
    %cst_12 = arith.constant dense<0.000000e+00> : vector<6x900xf32>
    %10 = tpu.matmul %0, %9, %cst_12 {dimension_numbers = #tpu.dot_dimension_numbers<[1], [0], [0], [1], [0, 0, 1, 1], [], []>} : vector<6x75xf32>, vector<75x900xf32>, vector<6x900xf32> -> vector<6x900xf32>
    %11 = arith.maximumf %7, %10 : vector<6x900xf32>
    %c0_13 = arith.constant 0 : index
    %c3 = arith.constant 3 : index
    %c0_14 = arith.constant 0 : index
    %c0_15 = arith.constant 0 : index
    %12 = vector.load %arg1[%c0_13, %c3, %c0_14, %c0_15] : memref<1x4x75x900xf32, #tpu.memory_space<vmem>>, vector<1x1x75x900xf32>
    %13 = vector.shape_cast %12 : vector<1x1x75x900xf32> to vector<75x900xf32>
    %cst_16 = arith.constant dense<0.000000e+00> : vector<6x900xf32>
    %14 = tpu.matmul %0, %13, %cst_16 {dimension_numbers = #tpu.dot_dimension_numbers<[1], [0], [0], [1], [0, 0, 1, 1], [], []>} : vector<6x75xf32>, vector<75x900xf32>, vector<6x900xf32> -> vector<6x900xf32>
    %15 = arith.maximumf %11, %14 : vector<6x900xf32>
    %c0_17 = arith.constant 0 : index
    %c0_18 = arith.constant 0 : index
    %16 = vector.load %arg3[%c0_17, %c0_18] : memref<6x1xf32, #tpu.memory_space<vmem>>, vector<6x1xf32>
    %17 = vector.broadcast %16 : vector<6x1xf32> to vector<6x900xf32>
    %18 = arith.addf %15, %17 : vector<6x900xf32>
    %cst_19 = arith.constant 0.000000e+00 : f32
    %19 = vector.broadcast %cst_19 : f32 to vector<6x900xf32>
    %20 = arith.maximumf %18, %19 : vector<6x900xf32>
    %c0_20 = arith.constant 0 : index
    %c0_21 = arith.constant 0 : index
    %c0_22 = arith.constant 0 : index
    %21 = vector.load %arg4[%c0_20, %c0_21, %c0_22] : memref<1x6x900xf32, #tpu.memory_space<vmem>>, vector<1x6x900xf32>
    %22 = vector.shape_cast %21 : vector<1x6x900xf32> to vector<6x900xf32>
    %23 = vector.shape_cast %20 : vector<6x900xf32> to vector<1x6x900xf32>
    tpu.vector_store %arg4[%c0_20, %c0_21, %c0_22], %23 {strides = array<i32>} : memref<1x6x900xf32, #tpu.memory_space<vmem>>, vector<1x6x900xf32>,
    return
  }
  func.func @transform_0(%arg0: i32) -> (i32, i32, i32, i32) {
    %c0_i32 = arith.constant 0 : i32
    %c0_i32_0 = arith.constant 0 : i32
    %c0_i32_1 = arith.constant 0 : i32
    %c0_i32_2 = arith.constant 0 : i32
    return %arg0, %c0_i32, %c0_i32_0, %c0_i32_1 : i32, i32, i32, i32
  }
  func.func @transform_1(%arg0: i32) -> (i32, i32) {
    %c0_i32 = arith.constant 0 : i32
    %c0_i32_0 = arith.constant 0 : i32
    %c0_i32_1 = arith.constant 0 : i32
    return %c0_i32, %c0_i32_0 : i32, i32
  }
  func.func @transform_2(%arg0: i32) -> (i32, i32) {
    %c0_i32 = arith.constant 0 : i32
    %c0_i32_0 = arith.constant 0 : i32
    %c0_i32_1 = arith.constant 0 : i32
    return %c0_i32, %c0_i32_0 : i32, i32
  }
  func.func @transform_3(%arg0: i32) -> (i32, i32, i32) {
    %c0_i32 = arith.constant 0 : i32
    %c0_i32_0 = arith.constant 0 : i32
    %c0_i32_1 = arith.constant 0 : i32
    return %arg0, %c0_i32, %c0_i32_0 : i32, i32, i32
  }
}

module attributes {stable_mosaic.version = 11 : i64} {
  func.func @_conv_pool_fc_kernel(%arg0: i32, %arg1: memref<1x4x150x169xf32, #tpu.memory_space<vmem>>, %arg2: memref<16x150xf32, #tpu.memory_space<vmem>>, %arg3: memref<16x1xf32, #tpu.memory_space<vmem>>, %arg4: memref<16x169x120xf32, #tpu.memory_space<vmem>>, %arg5: memref<1x120xf32, #tpu.memory_space<vmem>>, %arg6: memref<120x84xf32, #tpu.memory_space<vmem>>, %arg7: memref<1x84xf32, #tpu.memory_space<vmem>>, %arg8: memref<84x2xf32, #tpu.memory_space<vmem>>, %arg9: memref<1x2xf32, #tpu.memory_space<vmem>>, %arg10: memref<1x1x2xf32, #tpu.memory_space<vmem>>, %arg11: memref<16x169xf32, #tpu.memory_space<vmem>>) attributes {dimension_semantics = [#tpu.dimension_semantics<parallel>], iteration_bounds = array<i64: 2>, scalar_prefetch = 0 : i64, scratch_operands = 1 : i64, tpu.core_type = #tpu.core_type<tc>, window_params = [{transform_indices = @transform_0, window_bounds = array<i64: 1, 4, 150, 169>}, {pipeline_mode = #tpu.pipeline_mode<synchronous>, transform_indices = @transform_1, window_bounds = array<i64: 16, 150>}, {pipeline_mode = #tpu.pipeline_mode<synchronous>, transform_indices = @transform_2, window_bounds = array<i64: 16, 1>}, {pipeline_mode = #tpu.pipeline_mode<synchronous>, transform_indices = @transform_3, window_bounds = array<i64: 16, 169, 120>}, {pipeline_mode = #tpu.pipeline_mode<synchronous>, transform_indices = @transform_4, window_bounds = array<i64: 1, 120>}, {pipeline_mode = #tpu.pipeline_mode<synchronous>, transform_indices = @transform_5, window_bounds = array<i64: 120, 84>}, {pipeline_mode = #tpu.pipeline_mode<synchronous>, transform_indices = @transform_6, window_bounds = array<i64: 1, 84>}, {pipeline_mode = #tpu.pipeline_mode<synchronous>, transform_indices = @transform_7, window_bounds = array<i64: 84, 2>}, {pipeline_mode = #tpu.pipeline_mode<synchronous>, transform_indices = @transform_8, window_bounds = array<i64: 1, 2>}, {transform_indices = @transform_9, window_bounds = array<i64: 1, 1, 2>}]} {
    %c0 = arith.constant 0 : index
    %c0_0 = arith.constant 0 : index
    %0 = vector.load %arg2[%c0, %c0_0] : memref<16x150xf32, #tpu.memory_space<vmem>>, vector<16x150xf32>
    %c0_1 = arith.constant 0 : index
    %c0_2 = arith.constant 0 : index
    %c0_3 = arith.constant 0 : index
    %c0_4 = arith.constant 0 : index
    %1 = vector.load %arg1[%c0_1, %c0_2, %c0_3, %c0_4] : memref<1x4x150x169xf32, #tpu.memory_space<vmem>>, vector<1x1x150x169xf32>
    %2 = vector.shape_cast %1 : vector<1x1x150x169xf32> to vector<150x169xf32>
    %cst = arith.constant dense<0.000000e+00> : vector<16x169xf32>
    %3 = tpu.matmul %0, %2, %cst {dimension_numbers = #tpu.dot_dimension_numbers<[1], [0], [0], [1], [0, 0, 1, 1], [], []>} : vector<16x150xf32>, vector<150x169xf32>, vector<16x169xf32> -> vector<16x169xf32>
    %c0_5 = arith.constant 0 : index
    %c1 = arith.constant 1 : index
    %c0_6 = arith.constant 0 : index
    %c0_7 = arith.constant 0 : index
    %4 = vector.load %arg1[%c0_5, %c1, %c0_6, %c0_7] : memref<1x4x150x169xf32, #tpu.memory_space<vmem>>, vector<1x1x150x169xf32>
    %5 = vector.shape_cast %4 : vector<1x1x150x169xf32> to vector<150x169xf32>
    %cst_8 = arith.constant dense<0.000000e+00> : vector<16x169xf32>
    %6 = tpu.matmul %0, %5, %cst_8 {dimension_numbers = #tpu.dot_dimension_numbers<[1], [0], [0], [1], [0, 0, 1, 1], [], []>} : vector<16x150xf32>, vector<150x169xf32>, vector<16x169xf32> -> vector<16x169xf32>
    %7 = arith.maximumf %3, %6 : vector<16x169xf32>
    %c0_9 = arith.constant 0 : index
    %c2 = arith.constant 2 : index
    %c0_10 = arith.constant 0 : index
    %c0_11 = arith.constant 0 : index
    %8 = vector.load %arg1[%c0_9, %c2, %c0_10, %c0_11] : memref<1x4x150x169xf32, #tpu.memory_space<vmem>>, vector<1x1x150x169xf32>
    %9 = vector.shape_cast %8 : vector<1x1x150x169xf32> to vector<150x169xf32>
    %cst_12 = arith.constant dense<0.000000e+00> : vector<16x169xf32>
    %10 = tpu.matmul %0, %9, %cst_12 {dimension_numbers = #tpu.dot_dimension_numbers<[1], [0], [0], [1], [0, 0, 1, 1], [], []>} : vector<16x150xf32>, vector<150x169xf32>, vector<16x169xf32> -> vector<16x169xf32>
    %11 = arith.maximumf %7, %10 : vector<16x169xf32>
    %c0_13 = arith.constant 0 : index
    %c3 = arith.constant 3 : index
    %c0_14 = arith.constant 0 : index
    %c0_15 = arith.constant 0 : index
    %12 = vector.load %arg1[%c0_13, %c3, %c0_14, %c0_15] : memref<1x4x150x169xf32, #tpu.memory_space<vmem>>, vector<1x1x150x169xf32>
    %13 = vector.shape_cast %12 : vector<1x1x150x169xf32> to vector<150x169xf32>
    %cst_16 = arith.constant dense<0.000000e+00> : vector<16x169xf32>
    %14 = tpu.matmul %0, %13, %cst_16 {dimension_numbers = #tpu.dot_dimension_numbers<[1], [0], [0], [1], [0, 0, 1, 1], [], []>} : vector<16x150xf32>, vector<150x169xf32>, vector<16x169xf32> -> vector<16x169xf32>
    %15 = arith.maximumf %11, %14 : vector<16x169xf32>
    %c0_17 = arith.constant 0 : index
    %c0_18 = arith.constant 0 : index
    %16 = vector.load %arg3[%c0_17, %c0_18] : memref<16x1xf32, #tpu.memory_space<vmem>>, vector<16x1xf32>
    %17 = vector.broadcast %16 : vector<16x1xf32> to vector<16x169xf32>
    %18 = arith.addf %15, %17 : vector<16x169xf32>
    %cst_19 = arith.constant 0.000000e+00 : f32
    %19 = vector.broadcast %cst_19 : f32 to vector<16x169xf32>
    %20 = arith.maximumf %18, %19 : vector<16x169xf32>
    %c0_20 = arith.constant 0 : index
    %c0_21 = arith.constant 0 : index
    %21 = vector.load %arg11[%c0_20, %c0_21] : memref<16x169xf32, #tpu.memory_space<vmem>>, vector<16x169xf32>
    tpu.vector_store %arg11[%c0_20, %c0_21], %20 {strides = array<i32>} : memref<16x169xf32, #tpu.memory_space<vmem>>, vector<16x169xf32>,
    %c0_22 = arith.constant 0 : index
    %c0_23 = arith.constant 0 : index
    %22 = vector.load %arg5[%c0_22, %c0_23] : memref<1x120xf32, #tpu.memory_space<vmem>>, vector<1x120xf32>
    %c0_24 = arith.constant 0 : index
    %c0_25 = arith.constant 0 : index
    %23 = vector.load %arg11[%c0_24, %c0_25] : memref<16x169xf32, #tpu.memory_space<vmem>>, vector<1x169xf32>
    %c0_26 = arith.constant 0 : index
    %c0_27 = arith.constant 0 : index
    %c0_28 = arith.constant 0 : index
    %24 = vector.load %arg4[%c0_26, %c0_27, %c0_28] : memref<16x169x120xf32, #tpu.memory_space<vmem>>, vector<1x169x120xf32>
    %25 = vector.shape_cast %24 : vector<1x169x120xf32> to vector<169x120xf32>
    %cst_29 = arith.constant dense<0.000000e+00> : vector<1x120xf32>
    %26 = tpu.matmul %23, %25, %cst_29 {dimension_numbers = #tpu.dot_dimension_numbers<[1], [0], [0], [1], [0, 0, 1, 1], [], []>} : vector<1x169xf32>, vector<169x120xf32>, vector<1x120xf32> -> vector<1x120xf32>
    %27 = arith.addf %22, %26 : vector<1x120xf32>
    %c1_30 = arith.constant 1 : index
    %c0_31 = arith.constant 0 : index
    %28 = vector.load %arg11[%c1_30, %c0_31] : memref<16x169xf32, #tpu.memory_space<vmem>>, vector<1x169xf32>
    %c1_32 = arith.constant 1 : index
    %c0_33 = arith.constant 0 : index
    %c0_34 = arith.constant 0 : index
    %29 = vector.load %arg4[%c1_32, %c0_33, %c0_34] : memref<16x169x120xf32, #tpu.memory_space<vmem>>, vector<1x169x120xf32>
    %30 = vector.shape_cast %29 : vector<1x169x120xf32> to vector<169x120xf32>
    %cst_35 = arith.constant dense<0.000000e+00> : vector<1x120xf32>
    %31 = tpu.matmul %28, %30, %cst_35 {dimension_numbers = #tpu.dot_dimension_numbers<[1], [0], [0], [1], [0, 0, 1, 1], [], []>} : vector<1x169xf32>, vector<169x120xf32>, vector<1x120xf32> -> vector<1x120xf32>
    %32 = arith.addf %27, %31 : vector<1x120xf32>
    %c2_36 = arith.constant 2 : index
    %c0_37 = arith.constant 0 : index
    %33 = vector.load %arg11[%c2_36, %c0_37] : memref<16x169xf32, #tpu.memory_space<vmem>>, vector<1x169xf32>
    %c2_38 = arith.constant 2 : index
    %c0_39 = arith.constant 0 : index
    %c0_40 = arith.constant 0 : index
    %34 = vector.load %arg4[%c2_38, %c0_39, %c0_40] : memref<16x169x120xf32, #tpu.memory_space<vmem>>, vector<1x169x120xf32>
    %35 = vector.shape_cast %34 : vector<1x169x120xf32> to vector<169x120xf32>
    %cst_41 = arith.constant dense<0.000000e+00> : vector<1x120xf32>
    %36 = tpu.matmul %33, %35, %cst_41 {dimension_numbers = #tpu.dot_dimension_numbers<[1], [0], [0], [1], [0, 0, 1, 1], [], []>} : vector<1x169xf32>, vector<169x120xf32>, vector<1x120xf32> -> vector<1x120xf32>
    %37 = arith.addf %32, %36 : vector<1x120xf32>
    %c3_42 = arith.constant 3 : index
    %c0_43 = arith.constant 0 : index
    %38 = vector.load %arg11[%c3_42, %c0_43] : memref<16x169xf32, #tpu.memory_space<vmem>>, vector<1x169xf32>
    %c3_44 = arith.constant 3 : index
    %c0_45 = arith.constant 0 : index
    %c0_46 = arith.constant 0 : index
    %39 = vector.load %arg4[%c3_44, %c0_45, %c0_46] : memref<16x169x120xf32, #tpu.memory_space<vmem>>, vector<1x169x120xf32>
    %40 = vector.shape_cast %39 : vector<1x169x120xf32> to vector<169x120xf32>
    %cst_47 = arith.constant dense<0.000000e+00> : vector<1x120xf32>
    %41 = tpu.matmul %38, %40, %cst_47 {dimension_numbers = #tpu.dot_dimension_numbers<[1], [0], [0], [1], [0, 0, 1, 1], [], []>} : vector<1x169xf32>, vector<169x120xf32>, vector<1x120xf32> -> vector<1x120xf32>
    %42 = arith.addf %37, %41 : vector<1x120xf32>
    %c4 = arith.constant 4 : index
    %c0_48 = arith.constant 0 : index
    %43 = vector.load %arg11[%c4, %c0_48] : memref<16x169xf32, #tpu.memory_space<vmem>>, vector<1x169xf32>
    %c4_49 = arith.constant 4 : index
    %c0_50 = arith.constant 0 : index
    %c0_51 = arith.constant 0 : index
    %44 = vector.load %arg4[%c4_49, %c0_50, %c0_51] : memref<16x169x120xf32, #tpu.memory_space<vmem>>, vector<1x169x120xf32>
    %45 = vector.shape_cast %44 : vector<1x169x120xf32> to vector<169x120xf32>
    %cst_52 = arith.constant dense<0.000000e+00> : vector<1x120xf32>
    %46 = tpu.matmul %43, %45, %cst_52 {dimension_numbers = #tpu.dot_dimension_numbers<[1], [0], [0], [1], [0, 0, 1, 1], [], []>} : vector<1x169xf32>, vector<169x120xf32>, vector<1x120xf32> -> vector<1x120xf32>
    %47 = arith.addf %42, %46 : vector<1x120xf32>
    %c5 = arith.constant 5 : index
    %c0_53 = arith.constant 0 : index
    %48 = vector.load %arg11[%c5, %c0_53] : memref<16x169xf32, #tpu.memory_space<vmem>>, vector<1x169xf32>
    %c5_54 = arith.constant 5 : index
    %c0_55 = arith.constant 0 : index
    %c0_56 = arith.constant 0 : index
    %49 = vector.load %arg4[%c5_54, %c0_55, %c0_56] : memref<16x169x120xf32, #tpu.memory_space<vmem>>, vector<1x169x120xf32>
    %50 = vector.shape_cast %49 : vector<1x169x120xf32> to vector<169x120xf32>
    %cst_57 = arith.constant dense<0.000000e+00> : vector<1x120xf32>
    %51 = tpu.matmul %48, %50, %cst_57 {dimension_numbers = #tpu.dot_dimension_numbers<[1], [0], [0], [1], [0, 0, 1, 1], [], []>} : vector<1x169xf32>, vector<169x120xf32>, vector<1x120xf32> -> vector<1x120xf32>
    %52 = arith.addf %47, %51 : vector<1x120xf32>
    %c6 = arith.constant 6 : index
    %c0_58 = arith.constant 0 : index
    %53 = vector.load %arg11[%c6, %c0_58] : memref<16x169xf32, #tpu.memory_space<vmem>>, vector<1x169xf32>
    %c6_59 = arith.constant 6 : index
    %c0_60 = arith.constant 0 : index
    %c0_61 = arith.constant 0 : index
    %54 = vector.load %arg4[%c6_59, %c0_60, %c0_61] : memref<16x169x120xf32, #tpu.memory_space<vmem>>, vector<1x169x120xf32>
    %55 = vector.shape_cast %54 : vector<1x169x120xf32> to vector<169x120xf32>
    %cst_62 = arith.constant dense<0.000000e+00> : vector<1x120xf32>
    %56 = tpu.matmul %53, %55, %cst_62 {dimension_numbers = #tpu.dot_dimension_numbers<[1], [0], [0], [1], [0, 0, 1, 1], [], []>} : vector<1x169xf32>, vector<169x120xf32>, vector<1x120xf32> -> vector<1x120xf32>
    %57 = arith.addf %52, %56 : vector<1x120xf32>
    %c7 = arith.constant 7 : index
    %c0_63 = arith.constant 0 : index
    %58 = vector.load %arg11[%c7, %c0_63] : memref<16x169xf32, #tpu.memory_space<vmem>>, vector<1x169xf32>
    %c7_64 = arith.constant 7 : index
    %c0_65 = arith.constant 0 : index
    %c0_66 = arith.constant 0 : index
    %59 = vector.load %arg4[%c7_64, %c0_65, %c0_66] : memref<16x169x120xf32, #tpu.memory_space<vmem>>, vector<1x169x120xf32>
    %60 = vector.shape_cast %59 : vector<1x169x120xf32> to vector<169x120xf32>
    %cst_67 = arith.constant dense<0.000000e+00> : vector<1x120xf32>
    %61 = tpu.matmul %58, %60, %cst_67 {dimension_numbers = #tpu.dot_dimension_numbers<[1], [0], [0], [1], [0, 0, 1, 1], [], []>} : vector<1x169xf32>, vector<169x120xf32>, vector<1x120xf32> -> vector<1x120xf32>
    %62 = arith.addf %57, %61 : vector<1x120xf32>
    %c8 = arith.constant 8 : index
    %c0_68 = arith.constant 0 : index
    %63 = vector.load %arg11[%c8, %c0_68] : memref<16x169xf32, #tpu.memory_space<vmem>>, vector<1x169xf32>
    %c8_69 = arith.constant 8 : index
    %c0_70 = arith.constant 0 : index
    %c0_71 = arith.constant 0 : index
    %64 = vector.load %arg4[%c8_69, %c0_70, %c0_71] : memref<16x169x120xf32, #tpu.memory_space<vmem>>, vector<1x169x120xf32>
    %65 = vector.shape_cast %64 : vector<1x169x120xf32> to vector<169x120xf32>
    %cst_72 = arith.constant dense<0.000000e+00> : vector<1x120xf32>
    %66 = tpu.matmul %63, %65, %cst_72 {dimension_numbers = #tpu.dot_dimension_numbers<[1], [0], [0], [1], [0, 0, 1, 1], [], []>} : vector<1x169xf32>, vector<169x120xf32>, vector<1x120xf32> -> vector<1x120xf32>
    %67 = arith.addf %62, %66 : vector<1x120xf32>
    %c9 = arith.constant 9 : index
    %c0_73 = arith.constant 0 : index
    %68 = vector.load %arg11[%c9, %c0_73] : memref<16x169xf32, #tpu.memory_space<vmem>>, vector<1x169xf32>
    %c9_74 = arith.constant 9 : index
    %c0_75 = arith.constant 0 : index
    %c0_76 = arith.constant 0 : index
    %69 = vector.load %arg4[%c9_74, %c0_75, %c0_76] : memref<16x169x120xf32, #tpu.memory_space<vmem>>, vector<1x169x120xf32>
    %70 = vector.shape_cast %69 : vector<1x169x120xf32> to vector<169x120xf32>
    %cst_77 = arith.constant dense<0.000000e+00> : vector<1x120xf32>
    %71 = tpu.matmul %68, %70, %cst_77 {dimension_numbers = #tpu.dot_dimension_numbers<[1], [0], [0], [1], [0, 0, 1, 1], [], []>} : vector<1x169xf32>, vector<169x120xf32>, vector<1x120xf32> -> vector<1x120xf32>
    %72 = arith.addf %67, %71 : vector<1x120xf32>
    %c10 = arith.constant 10 : index
    %c0_78 = arith.constant 0 : index
    %73 = vector.load %arg11[%c10, %c0_78] : memref<16x169xf32, #tpu.memory_space<vmem>>, vector<1x169xf32>
    %c10_79 = arith.constant 10 : index
    %c0_80 = arith.constant 0 : index
    %c0_81 = arith.constant 0 : index
    %74 = vector.load %arg4[%c10_79, %c0_80, %c0_81] : memref<16x169x120xf32, #tpu.memory_space<vmem>>, vector<1x169x120xf32>
    %75 = vector.shape_cast %74 : vector<1x169x120xf32> to vector<169x120xf32>
    %cst_82 = arith.constant dense<0.000000e+00> : vector<1x120xf32>
    %76 = tpu.matmul %73, %75, %cst_82 {dimension_numbers = #tpu.dot_dimension_numbers<[1], [0], [0], [1], [0, 0, 1, 1], [], []>} : vector<1x169xf32>, vector<169x120xf32>, vector<1x120xf32> -> vector<1x120xf32>
    %77 = arith.addf %72, %76 : vector<1x120xf32>
    %c11 = arith.constant 11 : index
    %c0_83 = arith.constant 0 : index
    %78 = vector.load %arg11[%c11, %c0_83] : memref<16x169xf32, #tpu.memory_space<vmem>>, vector<1x169xf32>
    %c11_84 = arith.constant 11 : index
    %c0_85 = arith.constant 0 : index
    %c0_86 = arith.constant 0 : index
    %79 = vector.load %arg4[%c11_84, %c0_85, %c0_86] : memref<16x169x120xf32, #tpu.memory_space<vmem>>, vector<1x169x120xf32>
    %80 = vector.shape_cast %79 : vector<1x169x120xf32> to vector<169x120xf32>
    %cst_87 = arith.constant dense<0.000000e+00> : vector<1x120xf32>
    %81 = tpu.matmul %78, %80, %cst_87 {dimension_numbers = #tpu.dot_dimension_numbers<[1], [0], [0], [1], [0, 0, 1, 1], [], []>} : vector<1x169xf32>, vector<169x120xf32>, vector<1x120xf32> -> vector<1x120xf32>
    %82 = arith.addf %77, %81 : vector<1x120xf32>
    %c12 = arith.constant 12 : index
    %c0_88 = arith.constant 0 : index
    %83 = vector.load %arg11[%c12, %c0_88] : memref<16x169xf32, #tpu.memory_space<vmem>>, vector<1x169xf32>
    %c12_89 = arith.constant 12 : index
    %c0_90 = arith.constant 0 : index
    %c0_91 = arith.constant 0 : index
    %84 = vector.load %arg4[%c12_89, %c0_90, %c0_91] : memref<16x169x120xf32, #tpu.memory_space<vmem>>, vector<1x169x120xf32>
    %85 = vector.shape_cast %84 : vector<1x169x120xf32> to vector<169x120xf32>
    %cst_92 = arith.constant dense<0.000000e+00> : vector<1x120xf32>
    %86 = tpu.matmul %83, %85, %cst_92 {dimension_numbers = #tpu.dot_dimension_numbers<[1], [0], [0], [1], [0, 0, 1, 1], [], []>} : vector<1x169xf32>, vector<169x120xf32>, vector<1x120xf32> -> vector<1x120xf32>
    %87 = arith.addf %82, %86 : vector<1x120xf32>
    %c13 = arith.constant 13 : index
    %c0_93 = arith.constant 0 : index
    %88 = vector.load %arg11[%c13, %c0_93] : memref<16x169xf32, #tpu.memory_space<vmem>>, vector<1x169xf32>
    %c13_94 = arith.constant 13 : index
    %c0_95 = arith.constant 0 : index
    %c0_96 = arith.constant 0 : index
    %89 = vector.load %arg4[%c13_94, %c0_95, %c0_96] : memref<16x169x120xf32, #tpu.memory_space<vmem>>, vector<1x169x120xf32>
    %90 = vector.shape_cast %89 : vector<1x169x120xf32> to vector<169x120xf32>
    %cst_97 = arith.constant dense<0.000000e+00> : vector<1x120xf32>
    %91 = tpu.matmul %88, %90, %cst_97 {dimension_numbers = #tpu.dot_dimension_numbers<[1], [0], [0], [1], [0, 0, 1, 1], [], []>} : vector<1x169xf32>, vector<169x120xf32>, vector<1x120xf32> -> vector<1x120xf32>
    %92 = arith.addf %87, %91 : vector<1x120xf32>
    %c14 = arith.constant 14 : index
    %c0_98 = arith.constant 0 : index
    %93 = vector.load %arg11[%c14, %c0_98] : memref<16x169xf32, #tpu.memory_space<vmem>>, vector<1x169xf32>
    %c14_99 = arith.constant 14 : index
    %c0_100 = arith.constant 0 : index
    %c0_101 = arith.constant 0 : index
    %94 = vector.load %arg4[%c14_99, %c0_100, %c0_101] : memref<16x169x120xf32, #tpu.memory_space<vmem>>, vector<1x169x120xf32>
    %95 = vector.shape_cast %94 : vector<1x169x120xf32> to vector<169x120xf32>
    %cst_102 = arith.constant dense<0.000000e+00> : vector<1x120xf32>
    %96 = tpu.matmul %93, %95, %cst_102 {dimension_numbers = #tpu.dot_dimension_numbers<[1], [0], [0], [1], [0, 0, 1, 1], [], []>} : vector<1x169xf32>, vector<169x120xf32>, vector<1x120xf32> -> vector<1x120xf32>
    %97 = arith.addf %92, %96 : vector<1x120xf32>
    %c15 = arith.constant 15 : index
    %c0_103 = arith.constant 0 : index
    %98 = vector.load %arg11[%c15, %c0_103] : memref<16x169xf32, #tpu.memory_space<vmem>>, vector<1x169xf32>
    %c15_104 = arith.constant 15 : index
    %c0_105 = arith.constant 0 : index
    %c0_106 = arith.constant 0 : index
    %99 = vector.load %arg4[%c15_104, %c0_105, %c0_106] : memref<16x169x120xf32, #tpu.memory_space<vmem>>, vector<1x169x120xf32>
    %100 = vector.shape_cast %99 : vector<1x169x120xf32> to vector<169x120xf32>
    %cst_107 = arith.constant dense<0.000000e+00> : vector<1x120xf32>
    %101 = tpu.matmul %98, %100, %cst_107 {dimension_numbers = #tpu.dot_dimension_numbers<[1], [0], [0], [1], [0, 0, 1, 1], [], []>} : vector<1x169xf32>, vector<169x120xf32>, vector<1x120xf32> -> vector<1x120xf32>
    %102 = arith.addf %97, %101 : vector<1x120xf32>
    %cst_108 = arith.constant 0.000000e+00 : f32
    %103 = vector.broadcast %cst_108 : f32 to vector<1x120xf32>
    %104 = arith.maximumf %102, %103 : vector<1x120xf32>
    %c0_109 = arith.constant 0 : index
    %c0_110 = arith.constant 0 : index
    %105 = vector.load %arg6[%c0_109, %c0_110] : memref<120x84xf32, #tpu.memory_space<vmem>>, vector<120x84xf32>
    %cst_111 = arith.constant dense<0.000000e+00> : vector<1x84xf32>
    %106 = tpu.matmul %104, %105, %cst_111 {dimension_numbers = #tpu.dot_dimension_numbers<[1], [0], [0], [1], [0, 0, 1, 1], [], []>} : vector<1x120xf32>, vector<120x84xf32>, vector<1x84xf32> -> vector<1x84xf32>
    %c0_112 = arith.constant 0 : index
    %c0_113 = arith.constant 0 : index
    %107 = vector.load %arg7[%c0_112, %c0_113] : memref<1x84xf32, #tpu.memory_space<vmem>>, vector<1x84xf32>
    %108 = arith.addf %106, %107 : vector<1x84xf32>
    %cst_114 = arith.constant 0.000000e+00 : f32
    %109 = vector.broadcast %cst_114 : f32 to vector<1x84xf32>
    %110 = arith.maximumf %108, %109 : vector<1x84xf32>
    %c0_115 = arith.constant 0 : index
    %c0_116 = arith.constant 0 : index
    %111 = vector.load %arg8[%c0_115, %c0_116] : memref<84x2xf32, #tpu.memory_space<vmem>>, vector<84x2xf32>
    %cst_117 = arith.constant dense<0.000000e+00> : vector<1x2xf32>
    %112 = tpu.matmul %110, %111, %cst_117 {dimension_numbers = #tpu.dot_dimension_numbers<[1], [0], [0], [1], [0, 0, 1, 1], [], []>} : vector<1x84xf32>, vector<84x2xf32>, vector<1x2xf32> -> vector<1x2xf32>
    %c0_118 = arith.constant 0 : index
    %c0_119 = arith.constant 0 : index
    %113 = vector.load %arg9[%c0_118, %c0_119] : memref<1x2xf32, #tpu.memory_space<vmem>>, vector<1x2xf32>
    %114 = arith.addf %112, %113 : vector<1x2xf32>
    %c0_120 = arith.constant 0 : index
    %c0_121 = arith.constant 0 : index
    %c0_122 = arith.constant 0 : index
    %115 = vector.load %arg10[%c0_120, %c0_121, %c0_122] : memref<1x1x2xf32, #tpu.memory_space<vmem>>, vector<1x1x2xf32>
    %116 = vector.shape_cast %115 : vector<1x1x2xf32> to vector<1x2xf32>
    %117 = vector.shape_cast %114 : vector<1x2xf32> to vector<1x1x2xf32>
    tpu.vector_store %arg10[%c0_120, %c0_121, %c0_122], %117 {strides = array<i32>} : memref<1x1x2xf32, #tpu.memory_space<vmem>>, vector<1x1x2xf32>,
    return
  }
  func.func @transform_0(%arg0: i32) -> (i32, i32, i32, i32) {
    %c0_i32 = arith.constant 0 : i32
    %c0_i32_0 = arith.constant 0 : i32
    %c0_i32_1 = arith.constant 0 : i32
    %c0_i32_2 = arith.constant 0 : i32
    return %arg0, %c0_i32, %c0_i32_0, %c0_i32_1 : i32, i32, i32, i32
  }
  func.func @transform_1(%arg0: i32) -> (i32, i32) {
    %c0_i32 = arith.constant 0 : i32
    %c0_i32_0 = arith.constant 0 : i32
    %c0_i32_1 = arith.constant 0 : i32
    return %c0_i32, %c0_i32_0 : i32, i32
  }
  func.func @transform_2(%arg0: i32) -> (i32, i32) {
    %c0_i32 = arith.constant 0 : i32
    %c0_i32_0 = arith.constant 0 : i32
    %c0_i32_1 = arith.constant 0 : i32
    return %c0_i32, %c0_i32_0 : i32, i32
  }
  func.func @transform_3(%arg0: i32) -> (i32, i32, i32) {
    %c0_i32 = arith.constant 0 : i32
    %c0_i32_0 = arith.constant 0 : i32
    %c0_i32_1 = arith.constant 0 : i32
    %c0_i32_2 = arith.constant 0 : i32
    return %c0_i32, %c0_i32_0, %c0_i32_1 : i32, i32, i32
  }
  func.func @transform_4(%arg0: i32) -> (i32, i32) {
    %c0_i32 = arith.constant 0 : i32
    %c0_i32_0 = arith.constant 0 : i32
    %c0_i32_1 = arith.constant 0 : i32
    return %c0_i32, %c0_i32_0 : i32, i32
  }
  func.func @transform_5(%arg0: i32) -> (i32, i32) {
    %c0_i32 = arith.constant 0 : i32
    %c0_i32_0 = arith.constant 0 : i32
    %c0_i32_1 = arith.constant 0 : i32
    return %c0_i32, %c0_i32_0 : i32, i32
  }
  func.func @transform_6(%arg0: i32) -> (i32, i32) {
    %c0_i32 = arith.constant 0 : i32
    %c0_i32_0 = arith.constant 0 : i32
    %c0_i32_1 = arith.constant 0 : i32
    return %c0_i32, %c0_i32_0 : i32, i32
  }
  func.func @transform_7(%arg0: i32) -> (i32, i32) {
    %c0_i32 = arith.constant 0 : i32
    %c0_i32_0 = arith.constant 0 : i32
    %c0_i32_1 = arith.constant 0 : i32
    return %c0_i32, %c0_i32_0 : i32, i32
  }
  func.func @transform_8(%arg0: i32) -> (i32, i32) {
    %c0_i32 = arith.constant 0 : i32
    %c0_i32_0 = arith.constant 0 : i32
    %c0_i32_1 = arith.constant 0 : i32
    return %c0_i32, %c0_i32_0 : i32, i32
  }
  func.func @transform_9(%arg0: i32) -> (i32, i32, i32) {
    %c0_i32 = arith.constant 0 : i32
    %c0_i32_0 = arith.constant 0 : i32
    %c0_i32_1 = arith.constant 0 : i32
    return %arg0, %c0_i32, %c0_i32_0 : i32, i32, i32
  }
}

</mosaic_0001>

<llo_original>
// kernel: simple_cnn_forward.2
$region0: #{simple_cnn_forward.2}
  #allocation0 [shape = 'u32[]', space=smem, size = 0x4, offset = 0x4, fixed_abs, tag = 'smem constant byte address 0x4 - core index']
  #allocation1 [shape = 'u32[144,128]{1,0:T(1,128)}', space=vmem, size = 0x12000, scoped, tag = 'internal scratch']
  %s0 = inlined_call_operand.vmem [shape: f32[2,4,75,900], index: 0, kind: input, shape index: {}]
  %s1 = inlined_call_operand.vmem [shape: f32[6,75], index: 1, kind: input, shape index: {}]
  %s2 = inlined_call_operand.vmem [shape: f32[6,1], index: 2, kind: input, shape index: {}]
  %s3 = inlined_call_operand.vmem [shape: f32[2,6,900], index: 3, kind: output, shape index: {}]
  %s4 = sld [smem:[#allocation0]]
  $region45: #{simple_cnn_forward.2} parent=0
    _
  %s6 = ssub.s32 1, %s4
  %s7 = scalar_select 0, %s6, %s4
  loop: start=0, step=1, limit=4
  $region2: #{simple_cnn_forward.2} parent=0 // loop_pre_header
    _
  $region3: #{simple_cnn_forward.2} parent=0 // loop_header
    %s9 = sphi 0, %s13
    %p10 = scmp.ge.s32.totalorder %s9, 4
    %s19 = sphi 0, %s21
    %s22 = sphi 0, %s19
    %s23 = sphi 0, %s22
    %s39 = sphi 0, %s23
    %s43 = sphi 0, %s43
    %s45 = sphi 0, %s43
    %s46 = sphi 0, %s45
    %s60 = sphi 0, %s46
    %s64 = sphi 0, %s64
    %s66 = sphi 0, %s64
    %s67 = sphi 0, %s66
    %s81 = sphi 0, %s67
    %s87 = sphi 0, %s89
    %s90 = sphi 0, %s87
    %s91 = sphi 0, %s90
    %s107 = sphi 0, %s91
  $region4: #{simple_cnn_forward.2} parent=0 // loop_header_branch
    %12 = sbr.rel (%p10) target = $region8
  $region5: #{simple_cnn_forward.2} parent=0 // loop_body
    %s14 = ssub.s32 %s9, 1
    %s15 = ssub.s32 %s9, 2
    %s16 = sadd.s32 %s9, 1
    %s17 = ssub.s32 %s9, %s16
    %p18 = scmp.eq.s32.totalorder %s17, 0
    %s20 = sadd.s32 %s19, 1
    %s21 = scalar_select %p18, %s19, %s20
    %p24 = pneg %p18
    %p25 = scmp.eq.s32.totalorder %s9, 1
    %p26 = por %p24, %p25
    %p27 = scmp.ne.s32.totalorder %s19, %s22
    %p28 = scmp.eq.s32.totalorder %s9, 0
    %p29 = por %p27, %p28
    %p30 = scmp.ne.s32.totalorder %s19, %s22
    %p31 = scmp.eq.s32.totalorder %s14, 1
    %p32 = por %p30, %p31
    %p33 = scmp.ne.s32.totalorder %s22, %s23
    %p34 = scmp.eq.s32.totalorder %s14, 0
    %p35 = por %p33, %p34
    %p36 = scmp.ne.s32.totalorder %s22, %s23
    %p37 = scmp.eq.s32.totalorder %s15, 1
    %p38 = por %p36, %p37
    %p40 = scmp.ne.s32.totalorder %s23, %s39
    %p41 = scmp.eq.s32.totalorder %s15, 0
    %p42 = por %p40, %p41
    %s44 = sadd.s32 %s43, 1
    %p47 = scmp.eq.s32.totalorder %s9, 1
    %p48 = scmp.ne.s32.totalorder %s43, %s45
    %p49 = scmp.eq.s32.totalorder %s9, 0
    %p50 = por %p48, %p49
    %p51 = scmp.ne.s32.totalorder %s43, %s45
    %p52 = scmp.eq.s32.totalorder %s14, 1
    %p53 = por %p51, %p52
    %p54 = scmp.ne.s32.totalorder %s45, %s46
    %p55 = scmp.eq.s32.totalorder %s14, 0
    %p56 = por %p54, %p55
    %p57 = scmp.ne.s32.totalorder %s45, %s46
    %p58 = scmp.eq.s32.totalorder %s15, 1
    %p59 = por %p57, %p58
    %p61 = scmp.ne.s32.totalorder %s46, %s60
    %p62 = scmp.eq.s32.totalorder %s15, 0
    %p63 = por %p61, %p62
    %s65 = sadd.s32 %s64, 1
    %p68 = scmp.eq.s32.totalorder %s9, 1
    %p69 = scmp.ne.s32.totalorder %s64, %s66
    %p70 = scmp.eq.s32.totalorder %s9, 0
    %p71 = por %p69, %p70
    %p72 = scmp.ne.s32.totalorder %s64, %s66
    %p73 = scmp.eq.s32.totalorder %s14, 1
    %p74 = por %p72, %p73
    %p75 = scmp.ne.s32.totalorder %s66, %s67
    %p76 = scmp.eq.s32.totalorder %s14, 0
    %p77 = por %p75, %p76
    %p78 = scmp.ne.s32.totalorder %s66, %s67
    %p79 = scmp.eq.s32.totalorder %s15, 1
    %p80 = por %p78, %p79
    %p82 = scmp.ne.s32.totalorder %s67, %s81
    %p83 = scmp.eq.s32.totalorder %s15, 0
    %p84 = por %p82, %p83
    %s85 = ssub.s32 %s9, %s16
    %p86 = scmp.eq.s32.totalorder %s85, 0
    %s88 = sadd.s32 %s87, 1
    %s89 = scalar_select %p86, %s87, %s88
    %p92 = pneg %p86
    %p93 = scmp.eq.s32.totalorder %s9, 1
    %p94 = por %p92, %p93
    %p95 = scmp.ne.s32.totalorder %s87, %s90
    %p96 = scmp.eq.s32.totalorder %s9, 0
    %p97 = por %p95, %p96
    %p98 = scmp.ne.s32.totalorder %s87, %s90
    %p99 = scmp.eq.s32.totalorder %s14, 1
    %p100 = por %p98, %p99
    %p101 = scmp.ne.s32.totalorder %s90, %s91
    %p102 = scmp.eq.s32.totalorder %s14, 0
    %p103 = por %p101, %p102
    %p104 = scmp.ne.s32.totalorder %s90, %s91
    %p105 = scmp.eq.s32.totalorder %s15, 1
    %p106 = por %p104, %p105
    %p108 = scmp.ne.s32.totalorder %s91, %s107
    %p109 = scmp.eq.s32.totalorder %s15, 0
    %p110 = por %p108, %p109
    %p111 = scmp.le.s32.totalorder 1, %s9
    %p112 = scmp.lt.s32.totalorder %s9, 3
    %p113 = pnand %p111, %p112
    %p114 = pneg %p113
    // Predicated region
    $region9: #{simple_cnn_forward.2} parent=5 // pred_check
      _
    $region10: #{simple_cnn_forward.2} parent=5 // pred_check_branch
      %116 = sbr.rel (%p113) target = $region12
    $region11: #{simple_cnn_forward.2} parent=5 // pred_region
      %s117 = ssub.s32 %s9, 1
      // Predicated region
      $region13: #{simple_cnn_forward.2} parent=11 // pred_check
        %p118 = pneg %p56
      $region14: #{simple_cnn_forward.2} parent=11 // pred_check_branch
        %120 = sbr.rel (%p118) target = $region16
      $region15: #{simple_cnn_forward.2} parent=11 // pred_region
        _
      $region16: #{simple_cnn_forward.2} parent=11 // pred_fallthru
        _
      // Predicated region
      $region17: #{simple_cnn_forward.2} parent=11 // pred_check
        %p121 = pneg %p77
      $region18: #{simple_cnn_forward.2} parent=11 // pred_check_branch
        %123 = sbr.rel (%p121) target = $region20
      $region19: #{simple_cnn_forward.2} parent=11 // pred_region
        _
      $region20: #{simple_cnn_forward.2} parent=11 // pred_fallthru
        _
    $region12: #{simple_cnn_forward.2} parent=5 // pred_fallthru
      _
    %p124 = scmp.lt.s32.totalorder %s9, 2
    // Predicated region
    $region21: #{simple_cnn_forward.2} parent=5 // pred_check
      %p125 = pneg %p124
    $region22: #{simple_cnn_forward.2} parent=5 // pred_check_branch
      %127 = sbr.rel (%p125) target = $region24
    $region23: #{simple_cnn_forward.2} parent=5 // pred_region
      // Predicated region
      $region25: #{simple_cnn_forward.2} parent=23 // pred_check
        %p128 = pneg %p29
      $region26: #{simple_cnn_forward.2} parent=23 // pred_check_branch
        %130 = sbr.rel (%p128) target = $region28
      $region27: #{simple_cnn_forward.2} parent=23 // pred_region
        %p131 = scmp.lt.s32.totalorder %s9, 1
        %s132 = scalar_select %p131, %s9, 1
        %s133 = smul.addr %s132, 320
        %s134 = smul.addr %s133, 8
        %s135 = scalar_lea.vmem %s0, %s134
      $region28: #{simple_cnn_forward.2} parent=23 // pred_fallthru
        _
    $region24: #{simple_cnn_forward.2} parent=5 // pred_fallthru
      _
    %p136 = scmp.le.s32.totalorder 1, %s9
    %p137 = scmp.lt.s32.totalorder %s9, 3
    %p138 = pnand %p136, %p137
    %p139 = pneg %p138
    // Predicated region
    $region29: #{simple_cnn_forward.2} parent=5 // pred_check
      _
    $region30: #{simple_cnn_forward.2} parent=5 // pred_check_branch
      %141 = sbr.rel (%p138) target = $region32
    $region31: #{simple_cnn_forward.2} parent=5 // pred_region
      %s142 = ssub.s32 %s9, 1
      %p143 = scmp.lt.s32.totalorder %s14, 1
      %s144 = scalar_select %p143, %s14, 1
      %s145 = smul.addr %s144, 320
      %s146 = smul.addr %s145, 8
      %s147 = scalar_lea.vmem %s0, %s146
      %p148 = pneg %p35
      %p149 = pneg %p32
      %p150 = pneg %p56
      %p151 = pneg %p53
      %p152 = pneg %p77
      %p153 = pneg %p74
      %p154 = pneg %p103
      %p155 = pneg %p100
      %p156 = scmp.lt.s32.totalorder %s14, 1
      %s157 = scalar_select %p156, %s14, 1
      %s158 = smul.addr %s157, 8
      %s159 = smul.addr %s158, 8
      %s160 = scalar_lea.vmem %s3, %s159
      %p161 = scmp.lt.s32.totalorder %s14, 1
      %s162 = scalar_select %p161, %s14, 1
      %s163 = smul.addr %s162, 320
      %s164 = smul.addr %s163, 8
      %s165 = scalar_lea.vmem %s0, %s164
      %p166 = scmp.lt.s32.totalorder %s14, 1
      %s167 = scalar_select %p166, %s14, 1
      %s168 = smul.addr %s167, 8
      %s169 = smul.addr %s168, 8
      %s170 = scalar_lea.vmem %s3, %s169
      %v171 = vld [vmem:[%s1] sm:$0x3f]
      %v172 = vld [vmem:[%s165] sm:$0xff]
      %v173 = vld [vmem:[%s165 + $0x8] sm:$0xff]
      %v174 = vld [vmem:[%s165 + $0x10] sm:$0xff]
      %v175 = vld [vmem:[%s165 + $0x18] sm:$0xff]
      %v176 = vld [vmem:[%s165 + $0x20] sm:$0xff]
      %v177 = vld [vmem:[%s165 + $0x28] sm:$0xff]
      %v178 = vld [vmem:[%s165 + $0x30] sm:$0xff]
      %v179 = vld [vmem:[%s165 + $0x38] sm:$0xff]
      %v180 = vld [vmem:[%s165 + $0x40] sm:$0xff]
      %v181 = vld [vmem:[%s165 + $0x48] sm:$0xff]
      %v182 = vld [vmem:[%s165 + $0x50] sm:$0xff]
      %v183 = vld [vmem:[%s165 + $0x58] sm:$0xff]
      %v184 = vld [vmem:[%s165 + $0x60] sm:$0xff]
      %v185 = vld [vmem:[%s165 + $0x68] sm:$0xff]
      %v186 = vld [vmem:[%s165 + $0x70] sm:$0xff]
      %v187 = vld [vmem:[%s165 + $0x78] sm:$0xff]
      %v188 = vld [vmem:[%s165 + $0x80] sm:$0xff]
      %v189 = vld [vmem:[%s165 + $0x88] sm:$0xff]
      %v190 = vld [vmem:[%s165 + $0x90] sm:$0xff]
      %v191 = vld [vmem:[%s165 + $0x98] sm:$0xff]
      %v192 = vld [vmem:[%s165 + $0xa0] sm:$0xff]
      %v193 = vld [vmem:[%s165 + $0xa8] sm:$0xff]
      %v194 = vld [vmem:[%s165 + $0xb0] sm:$0xff]
      %v195 = vld [vmem:[%s165 + $0xb8] sm:$0xff]
      %v196 = vld [vmem:[%s165 + $0xc0] sm:$0xff]
      %v197 = vld [vmem:[%s165 + $0xc8] sm:$0xff]
      %v198 = vld [vmem:[%s165 + $0xd0] sm:$0xff]
      %v199 = vld [vmem:[%s165 + $0xd8] sm:$0xff]
      %v200 = vld [vmem:[%s165 + $0xe0] sm:$0xff]
      %v201 = vld [vmem:[%s165 + $0xe8] sm:$0xff]
      %v202 = vld [vmem:[%s165 + $0xf0] sm:$0xff]
      %v203 = vld [vmem:[%s165 + $0xf8] sm:$0xff]
      %v204 = vld [vmem:[%s165 + $0x100] sm:$0xff]
      %v205 = vld [vmem:[%s165 + $0x108] sm:$0xff]
      %v206 = vld [vmem:[%s165 + $0x110] sm:$0xff]
      %v207 = vld [vmem:[%s165 + $0x118] sm:$0xff]
      %v208 = vld [vmem:[%s165 + $0x120] sm:$0xff]
      %v209 = vld [vmem:[%s165 + $0x128] sm:$0xff]
      %v210 = vld [vmem:[%s165 + $0x130] sm:$0xff]
      %v211 = vld [vmem:[%s165 + $0x138] sm:$0xff]
      %v212 = vld [vmem:[%s165 + $0x140] sm:$0xff]
      %v213 = vld [vmem:[%s165 + $0x148] sm:$0xff]
      %v214 = vld [vmem:[%s165 + $0x150] sm:$0xff]
      %v215 = vld [vmem:[%s165 + $0x158] sm:$0xff]
      %v216 = vld [vmem:[%s165 + $0x160] sm:$0xff]
      %v217 = vld [vmem:[%s165 + $0x168] sm:$0xff]
      %v218 = vld [vmem:[%s165 + $0x170] sm:$0xff]
      %v219 = vld [vmem:[%s165 + $0x178] sm:$0xff]
      %v220 = vld [vmem:[%s165 + $0x180] sm:$0xff]
      %v221 = vld [vmem:[%s165 + $0x188] sm:$0xff]
      %v222 = vld [vmem:[%s165 + $0x190] sm:$0xff]
      %v223 = vld [vmem:[%s165 + $0x198] sm:$0xff]
      %v224 = vld [vmem:[%s165 + $0x1a0] sm:$0xff]
      %v225 = vld [vmem:[%s165 + $0x1a8] sm:$0xff]
      %v226 = vld [vmem:[%s165 + $0x1b0] sm:$0xff]
      %v227 = vld [vmem:[%s165 + $0x1b8] sm:$0xff]
      %v228 = vld [vmem:[%s165 + $0x1c0] sm:$0xff]
      %v229 = vld [vmem:[%s165 + $0x1c8] sm:$0xff]
      %v230 = vld [vmem:[%s165 + $0x1d0] sm:$0xff]
      %v231 = vld [vmem:[%s165 + $0x1d8] sm:$0xff]
      %v232 = vld [vmem:[%s165 + $0x1e0] sm:$0xff]
      %v233 = vld [vmem:[%s165 + $0x1e8] sm:$0xff]
      %v234 = vld [vmem:[%s165 + $0x1f0] sm:$0xff]
      %v235 = vld [vmem:[%s165 + $0x1f8] sm:$0xff]
      %v236 = vld [vmem:[%s165 + $0x200] sm:$0xff]
      %v237 = vld [vmem:[%s165 + $0x208] sm:$0xff]
      %v238 = vld [vmem:[%s165 + $0x210] sm:$0xff]
      %v239 = vld [vmem:[%s165 + $0x218] sm:$0xff]
      %v240 = vld [vmem:[%s165 + $0x220] sm:$0xff]
      %v241 = vld [vmem:[%s165 + $0x228] sm:$0xff]
      %v242 = vld [vmem:[%s165 + $0x230] sm:$0xff]
      %v243 = vld [vmem:[%s165 + $0x238] sm:$0xff]
      %v244 = vld [vmem:[%s165 + $0x240] sm:$0x7]
      %v245 = vld [vmem:[%s165 + $0x248] sm:$0x7]
      %v246 = vld [vmem:[%s165 + $0x250] sm:$0x7]
      %v247 = vld [vmem:[%s165 + $0x258] sm:$0x7]
      %v248 = vld [vmem:[%s165 + $0x260] sm:$0x7]
      %v249 = vld [vmem:[%s165 + $0x268] sm:$0x7]
      %v250 = vld [vmem:[%s165 + $0x270] sm:$0x7]
      %v251 = vld [vmem:[%s165 + $0x278] sm:$0x7]
      %vm252 = vcmask 613376
      %v254 = vsel %vm252, %v171, 0
      %vm256 = vcmask 1042432
      %v258 = vsel %vm256, %v244, 0
      %v261 = vsel %vm256, %v245, 0
      %v264 = vsel %vm256, %v246, 0
      %v267 = vsel %vm256, %v247, 0
      %v270 = vsel %vm256, %v248, 0
      %v273 = vsel %vm256, %v249, 0
      %v276 = vsel %vm256, %v250, 0
      %v279 = vsel %vm256, %v251, 0
      %281 = vmatprep.subr.mxu0 0.0
      %282 = vmatpush1.msra.mxu0 0.0
      %283 = vmatprep.subr.mxu0 0.0
      %284 = vmatpush1.msra.mxu0 0.0
      %285 = vmatprep.subr.mxu0 0.0
      %286 = vmatpush1.msra.mxu0 0.0
      %287 = vmatprep.subr.mxu0 0.0
      %288 = vmatpush1.msra.mxu0 0.0
      %289 = vmatprep.subr.mxu0 0.0
      %290 = vmatpush1.msra.mxu0 0.0
      %291 = vmatprep.subr.mxu0 0.0
      %292 = vmatpush1.msra.mxu0 0.0
      %293 = vmatprep.subr.mxu0 %v261
      %294 = vmatpush1.msra.mxu0 %v258
      %295 = vmatprep.subr.mxu0 %v237
      %296 = vmatpush1.msra.mxu0 %v236
      %297 = vmatprep.subr.mxu0 %v229
      %298 = vmatpush1.msra.mxu0 %v228
      %299 = vmatprep.subr.mxu0 %v221
      %300 = vmatpush1.msra.mxu0 %v220
      %301 = vmatprep.subr.mxu0 %v213
      %302 = vmatpush1.msra.mxu0 %v212
      %303 = vmatprep.subr.mxu0 %v205
      %304 = vmatpush1.msra.mxu0 %v204
      %305 = vmatprep.subr.mxu0 %v197
      %306 = vmatpush1.msra.mxu0 %v196
      %307 = vmatprep.subr.mxu0 %v189
      %308 = vmatpush1.msra.mxu0 %v188
      %309 = vmatprep.subr.mxu0 %v181
      %310 = vmatpush1.msra.mxu0 %v180
      %311 = vmatprep.subr.mxu0 %v173
      %312 = vmatpush1.msra.mxu0 %v172
      %313 = vmatprep.subr.mxu0 0.0
      %314 = vmatpush2.msra.mxu0 0.0
      %315 = vmatprep.subr.mxu0 0.0
      %316 = vmatpush2.msra.mxu0 0.0
      %317 = vmatprep.subr.mxu0 0.0
      %318 = vmatpush2.msra.mxu0 0.0
      %319 = vmatprep.subr.mxu0 0.0
      %320 = vmatpush2.msra.mxu0 0.0
      %321 = vmatprep.subr.mxu0 0.0
      %322 = vmatpush2.msra.mxu0 0.0
      %323 = vmatprep.subr.mxu0 0.0
      %324 = vmatpush2.msra.mxu0 0.0
      %325 = vmatprep.subr.mxu0 0.0
      %326 = vmatpush2.msra.mxu0 0.0
      %327 = vmatprep.subr.mxu0 0.0
      %328 = vmatpush2.msra.mxu0 0.0
      %329 = vmatprep.subr.mxu0 0.0
      %330 = vmatpush2.msra.mxu0 0.0
      %331 = vmatprep.subr.mxu0 0.0
      %332 = vmatpush2.msra.mxu0 0.0
      %333 = vmatprep.subr.mxu0 0.0
      %334 = vmatpush2.msra.mxu0 0.0
      %335 = vmatprep.subr.mxu0 0.0
      %336 = vmatpush2.msra.mxu0 0.0
      %337 = vmatprep.subr.mxu0 0.0
      %338 = vmatpush2.msra.mxu0 0.0
      %339 = vmatprep.subr.mxu0 0.0
      %340 = vmatpush2.msra.mxu0 0.0
      %341 = vmatprep.subr.mxu0 0.0
      %342 = vmatpush2.msra.mxu0 0.0
      %343 = vmatprep.subr.mxu0 0.0
      %344 = vmatpush2.msra.mxu0 0.0
      %345 = vmatprep.mubr.f32.mxu0 0.0
      %346 = vmatmul.mubr.f32.gmra.mxu0 %v254
      %v347 = vpop.f32.mrf.mxu0
      %v348 = vadd.f32 0.0, %v347
      %v349 = vpop.f32.mrf.mxu0
      %v350 = vadd.f32 0.0, %v349
      %351 = vdwg.mxu0
      %352 = vmatprep.subr.mxu0 0.0
      %353 = vmatpush1.msra.mxu0 0.0
      %354 = vmatprep.subr.mxu0 0.0
      %355 = vmatpush1.msra.mxu0 0.0
      %356 = vmatprep.subr.mxu0 0.0
      %357 = vmatpush1.msra.mxu0 0.0
      %358 = vmatprep.subr.mxu0 0.0
      %359 = vmatpush1.msra.mxu0 0.0
      %360 = vmatprep.subr.mxu0 0.0
      %361 = vmatpush1.msra.mxu0 0.0
      %362 = vmatprep.subr.mxu0 0.0
      %363 = vmatpush1.msra.mxu0 0.0
      %364 = vmatprep.subr.mxu0 %v267
      %365 = vmatpush1.msra.mxu0 %v264
      %366 = vmatprep.subr.mxu0 %v239
      %367 = vmatpush1.msra.mxu0 %v238
      %368 = vmatprep.subr.mxu0 %v231
      %369 = vmatpush1.msra.mxu0 %v230
      %370 = vmatprep.subr.mxu0 %v223
      %371 = vmatpush1.msra.mxu0 %v222
      %372 = vmatprep.subr.mxu0 %v215
      %373 = vmatpush1.msra.mxu0 %v214
      %374 = vmatprep.subr.mxu0 %v207
      %375 = vmatpush1.msra.mxu0 %v206
      %376 = vmatprep.subr.mxu0 %v199
      %377 = vmatpush1.msra.mxu0 %v198
      %378 = vmatprep.subr.mxu0 %v191
      %379 = vmatpush1.msra.mxu0 %v190
      %380 = vmatprep.subr.mxu0 %v183
      %381 = vmatpush1.msra.mxu0 %v182
      %382 = vmatprep.subr.mxu0 %v175
      %383 = vmatpush1.msra.mxu0 %v174
      %384 = vmatprep.subr.mxu0 0.0
      %385 = vmatpush2.msra.mxu0 0.0
      %386 = vmatprep.subr.mxu0 0.0
      %387 = vmatpush2.msra.mxu0 0.0
      %388 = vmatprep.subr.mxu0 0.0
      %389 = vmatpush2.msra.mxu0 0.0
      %390 = vmatprep.subr.mxu0 0.0
      %391 = vmatpush2.msra.mxu0 0.0
      %392 = vmatprep.subr.mxu0 0.0
      %393 = vmatpush2.msra.mxu0 0.0
      %394 = vmatprep.subr.mxu0 0.0
      %395 = vmatpush2.msra.mxu0 0.0
      %396 = vmatprep.subr.mxu0 0.0
      %397 = vmatpush2.msra.mxu0 0.0
      %398 = vmatprep.subr.mxu0 0.0
      %399 = vmatpush2.msra.mxu0 0.0
      %400 = vmatprep.subr.mxu0 0.0
      %401 = vmatpush2.msra.mxu0 0.0
      %402 = vmatprep.subr.mxu0 0.0
      %403 = vmatpush2.msra.mxu0 0.0
      %404 = vmatprep.subr.mxu0 0.0
      %405 = vmatpush2.msra.mxu0 0.0
      %406 = vmatprep.subr.mxu0 0.0
      %407 = vmatpush2.msra.mxu0 0.0
      %408 = vmatprep.subr.mxu0 0.0
      %409 = vmatpush2.msra.mxu0 0.0
      %410 = vmatprep.subr.mxu0 0.0
      %411 = vmatpush2.msra.mxu0 0.0
      %412 = vmatprep.subr.mxu0 0.0
      %413 = vmatpush2.msra.mxu0 0.0
      %414 = vmatprep.subr.mxu0 0.0
      %415 = vmatpush2.msra.mxu0 0.0
      %416 = vmatprep.mubr.f32.mxu0 0.0
      %417 = vmatmul.mubr.f32.gmra.mxu0 %v254
      %v418 = vpop.f32.mrf.mxu0
      %v419 = vadd.f32 0.0, %v418
      %v420 = vpop.f32.mrf.mxu0
      %v421 = vadd.f32 0.0, %v420
      %422 = vdwg.mxu0
      %423 = vmatprep.subr.mxu0 0.0
      %424 = vmatpush1.msra.mxu0 0.0
      %425 = vmatprep.subr.mxu0 0.0
      %426 = vmatpush1.msra.mxu0 0.0
      %427 = vmatprep.subr.mxu0 0.0
      %428 = vmatpush1.msra.mxu0 0.0
      %429 = vmatprep.subr.mxu0 0.0
      %430 = vmatpush1.msra.mxu0 0.0
      %431 = vmatprep.subr.mxu0 0.0
      %432 = vmatpush1.msra.mxu0 0.0
      %433 = vmatprep.subr.mxu0 0.0
      %434 = vmatpush1.msra.mxu0 0.0
      %435 = vmatprep.subr.mxu0 %v273
      %436 = vmatpush1.msra.mxu0 %v270
      %437 = vmatprep.subr.mxu0 %v241
      %438 = vmatpush1.msra.mxu0 %v240
      %439 = vmatprep.subr.mxu0 %v233
      %440 = vmatpush1.msra.mxu0 %v232
      %441 = vmatprep.subr.mxu0 %v225
      %442 = vmatpush1.msra.mxu0 %v224
      %443 = vmatprep.subr.mxu0 %v217
      %444 = vmatpush1.msra.mxu0 %v216
      %445 = vmatprep.subr.mxu0 %v209
      %446 = vmatpush1.msra.mxu0 %v208
      %447 = vmatprep.subr.mxu0 %v201
      %448 = vmatpush1.msra.mxu0 %v200
      %449 = vmatprep.subr.mxu0 %v193
      %450 = vmatpush1.msra.mxu0 %v192
      %451 = vmatprep.subr.mxu0 %v185
      %452 = vmatpush1.msra.mxu0 %v184
      %453 = vmatprep.subr.mxu0 %v177
      %454 = vmatpush1.msra.mxu0 %v176
      %455 = vmatprep.subr.mxu0 0.0
      %456 = vmatpush2.msra.mxu0 0.0
      %457 = vmatprep.subr.mxu0 0.0
      %458 = vmatpush2.msra.mxu0 0.0
      %459 = vmatprep.subr.mxu0 0.0
      %460 = vmatpush2.msra.mxu0 0.0
      %461 = vmatprep.subr.mxu0 0.0
      %462 = vmatpush2.msra.mxu0 0.0
      %463 = vmatprep.subr.mxu0 0.0
      %464 = vmatpush2.msra.mxu0 0.0
      %465 = vmatprep.subr.mxu0 0.0
      %466 = vmatpush2.msra.mxu0 0.0
      %467 = vmatprep.subr.mxu0 0.0
      %468 = vmatpush2.msra.mxu0 0.0
      %469 = vmatprep.subr.mxu0 0.0
      %470 = vmatpush2.msra.mxu0 0.0
      %471 = vmatprep.subr.mxu0 0.0
      %472 = vmatpush2.msra.mxu0 0.0
      %473 = vmatprep.subr.mxu0 0.0
      %474 = vmatpush2.msra.mxu0 0.0
      %475 = vmatprep.subr.mxu0 0.0
      %476 = vmatpush2.msra.mxu0 0.0
      %477 = vmatprep.subr.mxu0 0.0
      %478 = vmatpush2.msra.mxu0 0.0
      %479 = vmatprep.subr.mxu0 0.0
      %480 = vmatpush2.msra.mxu0 0.0
      %481 = vmatprep.subr.mxu0 0.0
      %482 = vmatpush2.msra.mxu0 0.0
      %483 = vmatprep.subr.mxu0 0.0
      %484 = vmatpush2.msra.mxu0 0.0
      %485 = vmatprep.subr.mxu0 0.0
      %486 = vmatpush2.msra.mxu0 0.0
      %487 = vmatprep.mubr.f32.mxu0 0.0
      %488 = vmatmul.mubr.f32.gmra.mxu0 %v254
      %v489 = vpop.f32.mrf.mxu0
      %v490 = vadd.f32 0.0, %v489
      %v491 = vpop.f32.mrf.mxu0
      %v492 = vadd.f32 0.0, %v491
      %493 = vdwg.mxu0
      %494 = vmatprep.subr.mxu0 0.0
      %495 = vmatpush1.msra.mxu0 0.0
      %496 = vmatprep.subr.mxu0 0.0
      %497 = vmatpush1.msra.mxu0 0.0
      %498 = vmatprep.subr.mxu0 0.0
      %499 = vmatpush1.msra.mxu0 0.0
      %500 = vmatprep.subr.mxu0 0.0
      %501 = vmatpush1.msra.mxu0 0.0
      %502 = vmatprep.subr.mxu0 0.0
      %503 = vmatpush1.msra.mxu0 0.0
      %504 = vmatprep.subr.mxu0 0.0
      %505 = vmatpush1.msra.mxu0 0.0
      %506 = vmatprep.subr.mxu0 %v279
      %507 = vmatpush1.msra.mxu0 %v276
      %508 = vmatprep.subr.mxu0 %v243
      %509 = vmatpush1.msra.mxu0 %v242
      %510 = vmatprep.subr.mxu0 %v235
      %511 = vmatpush1.msra.mxu0 %v234
      %512 = vmatprep.subr.mxu0 %v227
      %513 = vmatpush1.msra.mxu0 %v226
      %514 = vmatprep.subr.mxu0 %v219
      %515 = vmatpush1.msra.mxu0 %v218
      %516 = vmatprep.subr.mxu0 %v211
      %517 = vmatpush1.msra.mxu0 %v210
      %518 = vmatprep.subr.mxu0 %v203
      %519 = vmatpush1.msra.mxu0 %v202
      %520 = vmatprep.subr.mxu0 %v195
      %521 = vmatpush1.msra.mxu0 %v194
      %522 = vmatprep.subr.mxu0 %v187
      %523 = vmatpush1.msra.mxu0 %v186
      %524 = vmatprep.subr.mxu0 %v179
      %525 = vmatpush1.msra.mxu0 %v178
      %526 = vmatprep.subr.mxu0 0.0
      %527 = vmatpush2.msra.mxu0 0.0
      %528 = vmatprep.subr.mxu0 0.0
      %529 = vmatpush2.msra.mxu0 0.0
      %530 = vmatprep.subr.mxu0 0.0
      %531 = vmatpush2.msra.mxu0 0.0
      %532 = vmatprep.subr.mxu0 0.0
      %533 = vmatpush2.msra.mxu0 0.0
      %534 = vmatprep.subr.mxu0 0.0
      %535 = vmatpush2.msra.mxu0 0.0
      %536 = vmatprep.subr.mxu0 0.0
      %537 = vmatpush2.msra.mxu0 0.0
      %538 = vmatprep.subr.mxu0 0.0
      %539 = vmatpush2.msra.mxu0 0.0
      %540 = vmatprep.subr.mxu0 0.0
      %541 = vmatpush2.msra.mxu0 0.0
      %542 = vmatprep.subr.mxu0 0.0
      %543 = vmatpush2.msra.mxu0 0.0
      %544 = vmatprep.subr.mxu0 0.0
      %545 = vmatpush2.msra.mxu0 0.0
      %546 = vmatprep.subr.mxu0 0.0
      %547 = vmatpush2.msra.mxu0 0.0
      %548 = vmatprep.subr.mxu0 0.0
      %549 = vmatpush2.msra.mxu0 0.0
      %550 = vmatprep.subr.mxu0 0.0
      %551 = vmatpush2.msra.mxu0 0.0
      %552 = vmatprep.subr.mxu0 0.0
      %553 = vmatpush2.msra.mxu0 0.0
      %554 = vmatprep.subr.mxu0 0.0
      %555 = vmatpush2.msra.mxu0 0.0
      %556 = vmatprep.subr.mxu0 0.0
      %557 = vmatpush2.msra.mxu0 0.0
      %558 = vmatprep.mubr.f32.mxu0 0.0
      %559 = vmatmul.mubr.f32.gmra.mxu0 %v254
      %v560 = vpop.f32.mrf.mxu0
      %v561 = vadd.f32 0.0, %v560
      %v562 = vpop.f32.mrf.mxu0
      %v563 = vadd.f32 0.0, %v562
      %564 = vdwg.mxu0
      %s565 = scalar_lea.vmem %s165, 640
      %v566 = vld [vmem:[%s565] sm:$0xff]
      %v567 = vld [vmem:[%s565 + $0x8] sm:$0xff]
      %v568 = vld [vmem:[%s565 + $0x10] sm:$0xff]
      %v569 = vld [vmem:[%s565 + $0x18] sm:$0xff]
      %v570 = vld [vmem:[%s565 + $0x20] sm:$0xff]
      %v571 = vld [vmem:[%s565 + $0x28] sm:$0xff]
      %v572 = vld [vmem:[%s565 + $0x30] sm:$0xff]
      %v573 = vld [vmem:[%s565 + $0x38] sm:$0xff]
      %v574 = vld [vmem:[%s565 + $0x40] sm:$0xff]
      %v575 = vld [vmem:[%s565 + $0x48] sm:$0xff]
      %v576 = vld [vmem:[%s565 + $0x50] sm:$0xff]
      %v577 = vld [vmem:[%s565 + $0x58] sm:$0xff]
      %v578 = vld [vmem:[%s565 + $0x60] sm:$0xff]
      %v579 = vld [vmem:[%s565 + $0x68] sm:$0xff]
      %v580 = vld [vmem:[%s565 + $0x70] sm:$0xff]
      %v581 = vld [vmem:[%s565 + $0x78] sm:$0xff]
      %v582 = vld [vmem:[%s565 + $0x80] sm:$0xff]
      %v583 = vld [vmem:[%s565 + $0x88] sm:$0xff]
      %v584 = vld [vmem:[%s565 + $0x90] sm:$0xff]
      %v585 = vld [vmem:[%s565 + $0x98] sm:$0xff]
      %v586 = vld [vmem:[%s565 + $0xa0] sm:$0xff]
      %v587 = vld [vmem:[%s565 + $0xa8] sm:$0xff]
      %v588 = vld [vmem:[%s565 + $0xb0] sm:$0xff]
      %v589 = vld [vmem:[%s565 + $0xb8] sm:$0xff]
      %v590 = vld [vmem:[%s565 + $0xc0] sm:$0xff]
      %v591 = vld [vmem:[%s565 + $0xc8] sm:$0xff]
      %v592 = vld [vmem:[%s565 + $0xd0] sm:$0xff]
      %v593 = vld [vmem:[%s565 + $0xd8] sm:$0xff]
      %v594 = vld [vmem:[%s565 + $0xe0] sm:$0xff]
      %v595 = vld [vmem:[%s565 + $0xe8] sm:$0xff]
      %v596 = vld [vmem:[%s565 + $0xf0] sm:$0xff]
      %v597 = vld [vmem:[%s565 + $0xf8] sm:$0xff]
      %v598 = vld [vmem:[%s565 + $0x100] sm:$0xff]
      %v599 = vld [vmem:[%s565 + $0x108] sm:$0xff]
      %v600 = vld [vmem:[%s565 + $0x110] sm:$0xff]
      %v601 = vld [vmem:[%s565 + $0x118] sm:$0xff]
      %v602 = vld [vmem:[%s565 + $0x120] sm:$0xff]
      %v603 = vld [vmem:[%s565 + $0x128] sm:$0xff]
      %v604 = vld [vmem:[%s565 + $0x130] sm:$0xff]
      %v605 = vld [vmem:[%s565 + $0x138] sm:$0xff]
      %v606 = vld [vmem:[%s565 + $0x140] sm:$0xff]
      %v607 = vld [vmem:[%s565 + $0x148] sm:$0xff]
      %v608 = vld [vmem:[%s565 + $0x150] sm:$0xff]
      %v609 = vld [vmem:[%s565 + $0x158] sm:$0xff]
      %v610 = vld [vmem:[%s565 + $0x160] sm:$0xff]
      %v611 = vld [vmem:[%s565 + $0x168] sm:$0xff]
      %v612 = vld [vmem:[%s565 + $0x170] sm:$0xff]
      %v613 = vld [vmem:[%s565 + $0x178] sm:$0xff]
      %v614 = vld [vmem:[%s565 + $0x180] sm:$0xff]
      %v615 = vld [vmem:[%s565 + $0x188] sm:$0xff]
      %v616 = vld [vmem:[%s565 + $0x190] sm:$0xff]
      %v617 = vld [vmem:[%s565 + $0x198] sm:$0xff]
      %v618 = vld [vmem:[%s565 + $0x1a0] sm:$0xff]
      %v619 = vld [vmem:[%s565 + $0x1a8] sm:$0xff]
      %v620 = vld [vmem:[%s565 + $0x1b0] sm:$0xff]
      %v621 = vld [vmem:[%s565 + $0x1b8] sm:$0xff]
      %v622 = vld [vmem:[%s565 + $0x1c0] sm:$0xff]
      %v623 = vld [vmem:[%s565 + $0x1c8] sm:$0xff]
      %v624 = vld [vmem:[%s565 + $0x1d0] sm:$0xff]
      %v625 = vld [vmem:[%s565 + $0x1d8] sm:$0xff]
      %v626 = vld [vmem:[%s565 + $0x1e0] sm:$0xff]
      %v627 = vld [vmem:[%s565 + $0x1e8] sm:$0xff]
      %v628 = vld [vmem:[%s565 + $0x1f0] sm:$0xff]
      %v629 = vld [vmem:[%s565 + $0x1f8] sm:$0xff]
      %v630 = vld [vmem:[%s565 + $0x200] sm:$0xff]
      %v631 = vld [vmem:[%s565 + $0x208] sm:$0xff]
      %v632 = vld [vmem:[%s565 + $0x210] sm:$0xff]
      %v633 = vld [vmem:[%s565 + $0x218] sm:$0xff]
      %v634 = vld [vmem:[%s565 + $0x220] sm:$0xff]
      %v635 = vld [vmem:[%s565 + $0x228] sm:$0xff]
      %v636 = vld [vmem:[%s565 + $0x230] sm:$0xff]
      %v637 = vld [vmem:[%s565 + $0x238] sm:$0xff]
      %v638 = vld [vmem:[%s565 + $0x240] sm:$0x7]
      %v639 = vld [vmem:[%s565 + $0x248] sm:$0x7]
      %v640 = vld [vmem:[%s565 + $0x250] sm:$0x7]
      %v641 = vld [vmem:[%s565 + $0x258] sm:$0x7]
      %v642 = vld [vmem:[%s565 + $0x260] sm:$0x7]
      %v643 = vld [vmem:[%s565 + $0x268] sm:$0x7]
      %v644 = vld [vmem:[%s565 + $0x270] sm:$0x7]
      %v645 = vld [vmem:[%s565 + $0x278] sm:$0x7]
      %v647 = vsel %vm256, %v638, 0
      %v650 = vsel %vm256, %v639, 0
      %v653 = vsel %vm256, %v640, 0
      %v656 = vsel %vm256, %v641, 0
      %v659 = vsel %vm256, %v642, 0
      %v662 = vsel %vm256, %v643, 0
      %v665 = vsel %vm256, %v644, 0
      %v668 = vsel %vm256, %v645, 0
      %670 = vmatprep.subr.mxu0 0.0
      %671 = vmatpush1.msra.mxu0 0.0
      %672 = vmatprep.subr.mxu0 0.0
      %673 = vmatpush1.msra.mxu0 0.0
      %674 = vmatprep.subr.mxu0 0.0
      %675 = vmatpush1.msra.mxu0 0.0
      %676 = vmatprep.subr.mxu0 0.0
      %677 = vmatpush1.msra.mxu0 0.0
      %678 = vmatprep.subr.mxu0 0.0
      %679 = vmatpush1.msra.mxu0 0.0
      %680 = vmatprep.subr.mxu0 0.0
      %681 = vmatpush1.msra.mxu0 0.0
      %682 = vmatprep.subr.mxu0 %v650
      %683 = vmatpush1.msra.mxu0 %v647
      %684 = vmatprep.subr.mxu0 %v631
      %685 = vmatpush1.msra.mxu0 %v630
      %686 = vmatprep.subr.mxu0 %v623
      %687 = vmatpush1.msra.mxu0 %v622
      %688 = vmatprep.subr.mxu0 %v615
      %689 = vmatpush1.msra.mxu0 %v614
      %690 = vmatprep.subr.mxu0 %v607
      %691 = vmatpush1.msra.mxu0 %v606
      %692 = vmatprep.subr.mxu0 %v599
      %693 = vmatpush1.msra.mxu0 %v598
      %694 = vmatprep.subr.mxu0 %v591
      %695 = vmatpush1.msra.mxu0 %v590
      %696 = vmatprep.subr.mxu0 %v583
      %697 = vmatpush1.msra.mxu0 %v582
      %698 = vmatprep.subr.mxu0 %v575
      %699 = vmatpush1.msra.mxu0 %v574
      %700 = vmatprep.subr.mxu0 %v567
      %701 = vmatpush1.msra.mxu0 %v566
      %702 = vmatprep.subr.mxu0 0.0
      %703 = vmatpush2.msra.mxu0 0.0
      %704 = vmatprep.subr.mxu0 0.0
      %705 = vmatpush2.msra.mxu0 0.0
      %706 = vmatprep.subr.mxu0 0.0
      %707 = vmatpush2.msra.mxu0 0.0
      %708 = vmatprep.subr.mxu0 0.0
      %709 = vmatpush2.msra.mxu0 0.0
      %710 = vmatprep.subr.mxu0 0.0
      %711 = vmatpush2.msra.mxu0 0.0
      %712 = vmatprep.subr.mxu0 0.0
      %713 = vmatpush2.msra.mxu0 0.0
      %714 = vmatprep.subr.mxu0 0.0
      %715 = vmatpush2.msra.mxu0 0.0
      %716 = vmatprep.subr.mxu0 0.0
      %717 = vmatpush2.msra.mxu0 0.0
      %718 = vmatprep.subr.mxu0 0.0
      %719 = vmatpush2.msra.mxu0 0.0
      %720 = vmatprep.subr.mxu0 0.0
      %721 = vmatpush2.msra.mxu0 0.0
      %722 = vmatprep.subr.mxu0 0.0
      %723 = vmatpush2.msra.mxu0 0.0
      %724 = vmatprep.subr.mxu0 0.0
      %725 = vmatpush2.msra.mxu0 0.0
      %726 = vmatprep.subr.mxu0 0.0
      %727 = vmatpush2.msra.mxu0 0.0
      %728 = vmatprep.subr.mxu0 0.0
      %729 = vmatpush2.msra.mxu0 0.0
      %730 = vmatprep.subr.mxu0 0.0
      %731 = vmatpush2.msra.mxu0 0.0
      %732 = vmatprep.subr.mxu0 0.0
      %733 = vmatpush2.msra.mxu0 0.0
      %734 = vmatprep.mubr.f32.mxu0 0.0
      %735 = vmatmul.mubr.f32.gmra.mxu0 %v254
      %v736 = vpop.f32.mrf.mxu0
      %v737 = vadd.f32 0.0, %v736
      %v738 = vpop.f32.mrf.mxu0
      %v739 = vadd.f32 0.0, %v738
      %740 = vdwg.mxu0
      %741 = vmatprep.subr.mxu0 0.0
      %742 = vmatpush1.msra.mxu0 0.0
      %743 = vmatprep.subr.mxu0 0.0
      %744 = vmatpush1.msra.mxu0 0.0
      %745 = vmatprep.subr.mxu0 0.0
      %746 = vmatpush1.msra.mxu0 0.0
      %747 = vmatprep.subr.mxu0 0.0
      %748 = vmatpush1.msra.mxu0 0.0
      %749 = vmatprep.subr.mxu0 0.0
      %750 = vmatpush1.msra.mxu0 0.0
      %751 = vmatprep.subr.mxu0 0.0
      %752 = vmatpush1.msra.mxu0 0.0
      %753 = vmatprep.subr.mxu0 %v656
      %754 = vmatpush1.msra.mxu0 %v653
      %755 = vmatprep.subr.mxu0 %v633
      %756 = vmatpush1.msra.mxu0 %v632
      %757 = vmatprep.subr.mxu0 %v625
      %758 = vmatpush1.msra.mxu0 %v624
      %759 = vmatprep.subr.mxu0 %v617
      %760 = vmatpush1.msra.mxu0 %v616
      %761 = vmatprep.subr.mxu0 %v609
      %762 = vmatpush1.msra.mxu0 %v608
      %763 = vmatprep.subr.mxu0 %v601
      %764 = vmatpush1.msra.mxu0 %v600
      %765 = vmatprep.subr.mxu0 %v593
      %766 = vmatpush1.msra.mxu0 %v592
      %767 = vmatprep.subr.mxu0 %v585
      %768 = vmatpush1.msra.mxu0 %v584
      %769 = vmatprep.subr.mxu0 %v577
      %770 = vmatpush1.msra.mxu0 %v576
      %771 = vmatprep.subr.mxu0 %v569
      %772 = vmatpush1.msra.mxu0 %v568
      %773 = vmatprep.subr.mxu0 0.0
      %774 = vmatpush2.msra.mxu0 0.0
      %775 = vmatprep.subr.mxu0 0.0
      %776 = vmatpush2.msra.mxu0 0.0
      %777 = vmatprep.subr.mxu0 0.0
      %778 = vmatpush2.msra.mxu0 0.0
      %779 = vmatprep.subr.mxu0 0.0
      %780 = vmatpush2.msra.mxu0 0.0
      %781 = vmatprep.subr.mxu0 0.0
      %782 = vmatpush2.msra.mxu0 0.0
      %783 = vmatprep.subr.mxu0 0.0
      %784 = vmatpush2.msra.mxu0 0.0
      %785 = vmatprep.subr.mxu0 0.0
      %786 = vmatpush2.msra.mxu0 0.0
      %787 = vmatprep.subr.mxu0 0.0
      %788 = vmatpush2.msra.mxu0 0.0
      %789 = vmatprep.subr.mxu0 0.0
      %790 = vmatpush2.msra.mxu0 0.0
      %791 = vmatprep.subr.mxu0 0.0
      %792 = vmatpush2.msra.mxu0 0.0
      %793 = vmatprep.subr.mxu0 0.0
      %794 = vmatpush2.msra.mxu0 0.0
      %795 = vmatprep.subr.mxu0 0.0
      %796 = vmatpush2.msra.mxu0 0.0
      %797 = vmatprep.subr.mxu0 0.0
      %798 = vmatpush2.msra.mxu0 0.0
      %799 = vmatprep.subr.mxu0 0.0
      %800 = vmatpush2.msra.mxu0 0.0
      %801 = vmatprep.subr.mxu0 0.0
      %802 = vmatpush2.msra.mxu0 0.0
      %803 = vmatprep.subr.mxu0 0.0
      %804 = vmatpush2.msra.mxu0 0.0
      %805 = vmatprep.mubr.f32.mxu0 0.0
      %806 = vmatmul.mubr.f32.gmra.mxu0 %v254
      %v807 = vpop.f32.mrf.mxu0
      %v808 = vadd.f32 0.0, %v807
      %v809 = vpop.f32.mrf.mxu0
      %v810 = vadd.f32 0.0, %v809
      %811 = vdwg.mxu0
      %812 = vmatprep.subr.mxu0 0.0
      %813 = vmatpush1.msra.mxu0 0.0
      %814 = vmatprep.subr.mxu0 0.0
      %815 = vmatpush1.msra.mxu0 0.0
      %816 = vmatprep.subr.mxu0 0.0
      %817 = vmatpush1.msra.mxu0 0.0
      %818 = vmatprep.subr.mxu0 0.0
      %819 = vmatpush1.msra.mxu0 0.0
      %820 = vmatprep.subr.mxu0 0.0
      %821 = vmatpush1.msra.mxu0 0.0
      %822 = vmatprep.subr.mxu0 0.0
      %823 = vmatpush1.msra.mxu0 0.0
      %824 = vmatprep.subr.mxu0 %v662
      %825 = vmatpush1.msra.mxu0 %v659
      %826 = vmatprep.subr.mxu0 %v635
      %827 = vmatpush1.msra.mxu0 %v634
      %828 = vmatprep.subr.mxu0 %v627
      %829 = vmatpush1.msra.mxu0 %v626
      %830 = vmatprep.subr.mxu0 %v619
      %831 = vmatpush1.msra.mxu0 %v618
      %832 = vmatprep.subr.mxu0 %v611
      %833 = vmatpush1.msra.mxu0 %v610
      %834 = vmatprep.subr.mxu0 %v603
      %835 = vmatpush1.msra.mxu0 %v602
      %836 = vmatprep.subr.mxu0 %v595
      %837 = vmatpush1.msra.mxu0 %v594
      %838 = vmatprep.subr.mxu0 %v587
      %839 = vmatpush1.msra.mxu0 %v586
      %840 = vmatprep.subr.mxu0 %v579
      %841 = vmatpush1.msra.mxu0 %v578
      %842 = vmatprep.subr.mxu0 %v571
      %843 = vmatpush1.msra.mxu0 %v570
      %844 = vmatprep.subr.mxu0 0.0
      %845 = vmatpush2.msra.mxu0 0.0
      %846 = vmatprep.subr.mxu0 0.0
      %847 = vmatpush2.msra.mxu0 0.0
      %848 = vmatprep.subr.mxu0 0.0
      %849 = vmatpush2.msra.mxu0 0.0
      %850 = vmatprep.subr.mxu0 0.0
      %851 = vmatpush2.msra.mxu0 0.0
      %852 = vmatprep.subr.mxu0 0.0
      %853 = vmatpush2.msra.mxu0 0.0
      %854 = vmatprep.subr.mxu0 0.0
      %855 = vmatpush2.msra.mxu0 0.0
      %856 = vmatprep.subr.mxu0 0.0
      %857 = vmatpush2.msra.mxu0 0.0
      %858 = vmatprep.subr.mxu0 0.0
      %859 = vmatpush2.msra.mxu0 0.0
      %860 = vmatprep.subr.mxu0 0.0
      %861 = vmatpush2.msra.mxu0 0.0
      %862 = vmatprep.subr.mxu0 0.0
      %863 = vmatpush2.msra.mxu0 0.0
      %864 = vmatprep.subr.mxu0 0.0
      %865 = vmatpush2.msra.mxu0 0.0
      %866 = vmatprep.subr.mxu0 0.0
      %867 = vmatpush2.msra.mxu0 0.0
      %868 = vmatprep.subr.mxu0 0.0
      %869 = vmatpush2.msra.mxu0 0.0
      %870 = vmatprep.subr.mxu0 0.0
      %871 = vmatpush2.msra.mxu0 0.0
      %872 = vmatprep.subr.mxu0 0.0
      %873 = vmatpush2.msra.mxu0 0.0
      %874 = vmatprep.subr.mxu0 0.0
      %875 = vmatpush2.msra.mxu0 0.0
      %876 = vmatprep.mubr.f32.mxu0 0.0
      %877 = vmatmul.mubr.f32.gmra.mxu0 %v254
      %v878 = vpop.f32.mrf.mxu0
      %v879 = vadd.f32 0.0, %v878
      %v880 = vpop.f32.mrf.mxu0
      %v881 = vadd.f32 0.0, %v880
      %882 = vdwg.mxu0
      %883 = vmatprep.subr.mxu0 0.0
      %884 = vmatpush1.msra.mxu0 0.0
      %885 = vmatprep.subr.mxu0 0.0
      %886 = vmatpush1.msra.mxu0 0.0
      %887 = vmatprep.subr.mxu0 0.0
      %888 = vmatpush1.msra.mxu0 0.0
      %889 = vmatprep.subr.mxu0 0.0
      %890 = vmatpush1.msra.mxu0 0.0
      %891 = vmatprep.subr.mxu0 0.0
      %892 = vmatpush1.msra.mxu0 0.0
      %893 = vmatprep.subr.mxu0 0.0
      %894 = vmatpush1.msra.mxu0 0.0
      %895 = vmatprep.subr.mxu0 %v668
      %896 = vmatpush1.msra.mxu0 %v665
      %897 = vmatprep.subr.mxu0 %v637
      %898 = vmatpush1.msra.mxu0 %v636
      %899 = vmatprep.subr.mxu0 %v629
      %900 = vmatpush1.msra.mxu0 %v628
      %901 = vmatprep.subr.mxu0 %v621
      %902 = vmatpush1.msra.mxu0 %v620
      %903 = vmatprep.subr.mxu0 %v613
      %904 = vmatpush1.msra.mxu0 %v612
      %905 = vmatprep.subr.mxu0 %v605
      %906 = vmatpush1.msra.mxu0 %v604
      %907 = vmatprep.subr.mxu0 %v597
      %908 = vmatpush1.msra.mxu0 %v596
      %909 = vmatprep.subr.mxu0 %v589
      %910 = vmatpush1.msra.mxu0 %v588
      %911 = vmatprep.subr.mxu0 %v581
      %912 = vmatpush1.msra.mxu0 %v580
      %913 = vmatprep.subr.mxu0 %v573
      %914 = vmatpush1.msra.mxu0 %v572
      %915 = vmatprep.subr.mxu0 0.0
      %916 = vmatpush2.msra.mxu0 0.0
      %917 = vmatprep.subr.mxu0 0.0
      %918 = vmatpush2.msra.mxu0 0.0
      %919 = vmatprep.subr.mxu0 0.0
      %920 = vmatpush2.msra.mxu0 0.0
      %921 = vmatprep.subr.mxu0 0.0
      %922 = vmatpush2.msra.mxu0 0.0
      %923 = vmatprep.subr.mxu0 0.0
      %924 = vmatpush2.msra.mxu0 0.0
      %925 = vmatprep.subr.mxu0 0.0
      %926 = vmatpush2.msra.mxu0 0.0
      %927 = vmatprep.subr.mxu0 0.0
      %928 = vmatpush2.msra.mxu0 0.0
      %929 = vmatprep.subr.mxu0 0.0
      %930 = vmatpush2.msra.mxu0 0.0
      %931 = vmatprep.subr.mxu0 0.0
      %932 = vmatpush2.msra.mxu0 0.0
      %933 = vmatprep.subr.mxu0 0.0
      %934 = vmatpush2.msra.mxu0 0.0
      %935 = vmatprep.subr.mxu0 0.0
      %936 = vmatpush2.msra.mxu0 0.0
      %937 = vmatprep.subr.mxu0 0.0
      %938 = vmatpush2.msra.mxu0 0.0
      %939 = vmatprep.subr.mxu0 0.0
      %940 = vmatpush2.msra.mxu0 0.0
      %941 = vmatprep.subr.mxu0 0.0
      %942 = vmatpush2.msra.mxu0 0.0
      %943 = vmatprep.subr.mxu0 0.0
      %944 = vmatpush2.msra.mxu0 0.0
      %945 = vmatprep.subr.mxu0 0.0
      %946 = vmatpush2.msra.mxu0 0.0
      %947 = vmatprep.mubr.f32.mxu0 0.0
      %948 = vmatmul.mubr.f32.gmra.mxu0 %v254
      %v949 = vpop.f32.mrf.mxu0
      %v950 = vadd.f32 0.0, %v949
      %v951 = vpop.f32.mrf.mxu0
      %v952 = vadd.f32 0.0, %v951
      %953 = vdwg.mxu0
      %v954 = vmax.f32 %v348, %v737
      %v955 = vmax.f32 %v350, %v739
      %v956 = vmax.f32 %v419, %v808
      %v957 = vmax.f32 %v421, %v810
      %v958 = vmax.f32 %v490, %v879
      %v959 = vmax.f32 %v492, %v881
      %v960 = vmax.f32 %v561, %v950
      %v961 = vmax.f32 %v563, %v952
      %s962 = scalar_lea.vmem %s165, 1280
      %v963 = vld [vmem:[%s962] sm:$0xff]
      %v964 = vld [vmem:[%s962 + $0x8] sm:$0xff]
      %v965 = vld [vmem:[%s962 + $0x10] sm:$0xff]
      %v966 = vld [vmem:[%s962 + $0x18] sm:$0xff]
      %v967 = vld [vmem:[%s962 + $0x20] sm:$0xff]
      %v968 = vld [vmem:[%s962 + $0x28] sm:$0xff]
      %v969 = vld [vmem:[%s962 + $0x30] sm:$0xff]
      %v970 = vld [vmem:[%s962 + $0x38] sm:$0xff]
      %v971 = vld [vmem:[%s962 + $0x40] sm:$0xff]
      %v972 = vld [vmem:[%s962 + $0x48] sm:$0xff]
      %v973 = vld [vmem:[%s962 + $0x50] sm:$0xff]
      %v974 = vld [vmem:[%s962 + $0x58] sm:$0xff]
      %v975 = vld [vmem:[%s962 + $0x60] sm:$0xff]
      %v976 = vld [vmem:[%s962 + $0x68] sm:$0xff]
      %v977 = vld [vmem:[%s962 + $0x70] sm:$0xff]
      %v978 = vld [vmem:[%s962 + $0x78] sm:$0xff]
      %v979 = vld [vmem:[%s962 + $0x80] sm:$0xff]
      %v980 = vld [vmem:[%s962 + $0x88] sm:$0xff]
      %v981 = vld [vmem:[%s962 + $0x90] sm:$0xff]
      %v982 = vld [vmem:[%s962 + $0x98] sm:$0xff]
      %v983 = vld [vmem:[%s962 + $0xa0] sm:$0xff]
      %v984 = vld [vmem:[%s962 + $0xa8] sm:$0xff]
      %v985 = vld [vmem:[%s962 + $0xb0] sm:$0xff]
      %v986 = vld [vmem:[%s962 + $0xb8] sm:$0xff]
      %v987 = vld [vmem:[%s962 + $0xc0] sm:$0xff]
      %v988 = vld [vmem:[%s962 + $0xc8] sm:$0xff]
      %v989 = vld [vmem:[%s962 + $0xd0] sm:$0xff]
      %v990 = vld [vmem:[%s962 + $0xd8] sm:$0xff]
      %v991 = vld [vmem:[%s962 + $0xe0] sm:$0xff]
      %v992 = vld [vmem:[%s962 + $0xe8] sm:$0xff]
      %v993 = vld [vmem:[%s962 + $0xf0] sm:$0xff]
      %v994 = vld [vmem:[%s962 + $0xf8] sm:$0xff]
      %v995 = vld [vmem:[%s962 + $0x100] sm:$0xff]
      %v996 = vld [vmem:[%s962 + $0x108] sm:$0xff]
      %v997 = vld [vmem:[%s962 + $0x110] sm:$0xff]
      %v998 = vld [vmem:[%s962 + $0x118] sm:$0xff]
      %v999 = vld [vmem:[%s962 + $0x120] sm:$0xff]
      %v1000 = vld [vmem:[%s962 + $0x128] sm:$0xff]
      %v1001 = vld [vmem:[%s962 + $0x130] sm:$0xff]
      %v1002 = vld [vmem:[%s962 + $0x138] sm:$0xff]
      %v1003 = vld [vmem:[%s962 + $0x140] sm:$0xff]
      %v1004 = vld [vmem:[%s962 + $0x148] sm:$0xff]
      %v1005 = vld [vmem:[%s962 + $0x150] sm:$0xff]
      %v1006 = vld [vmem:[%s962 + $0x158] sm:$0xff]
      %v1007 = vld [vmem:[%s962 + $0x160] sm:$0xff]
      %v1008 = vld [vmem:[%s962 + $0x168] sm:$0xff]
      %v1009 = vld [vmem:[%s962 + $0x170] sm:$0xff]
      %v1010 = vld [vmem:[%s962 + $0x178] sm:$0xff]
      %v1011 = vld [vmem:[%s962 + $0x180] sm:$0xff]
      %v1012 = vld [vmem:[%s962 + $0x188] sm:$0xff]
      %v1013 = vld [vmem:[%s962 + $0x190] sm:$0xff]
      %v1014 = vld [vmem:[%s962 + $0x198] sm:$0xff]
      %v1015 = vld [vmem:[%s962 + $0x1a0] sm:$0xff]
      %v1016 = vld [vmem:[%s962 + $0x1a8] sm:$0xff]
      %v1017 = vld [vmem:[%s962 + $0x1b0] sm:$0xff]
      %v1018 = vld [vmem:[%s962 + $0x1b8] sm:$0xff]
      %v1019 = vld [vmem:[%s962 + $0x1c0] sm:$0xff]
      %v1020 = vld [vmem:[%s962 + $0x1c8] sm:$0xff]
      %v1021 = vld [vmem:[%s962 + $0x1d0] sm:$0xff]
      %v1022 = vld [vmem:[%s962 + $0x1d8] sm:$0xff]
      %v1023 = vld [vmem:[%s962 + $0x1e0] sm:$0xff]
      %v1024 = vld [vmem:[%s962 + $0x1e8] sm:$0xff]
      %v1025 = vld [vmem:[%s962 + $0x1f0] sm:$0xff]
      %v1026 = vld [vmem:[%s962 + $0x1f8] sm:$0xff]
      %v1027 = vld [vmem:[%s962 + $0x200] sm:$0xff]
      %v1028 = vld [vmem:[%s962 + $0x208] sm:$0xff]
      %v1029 = vld [vmem:[%s962 + $0x210] sm:$0xff]
      %v1030 = vld [vmem:[%s962 + $0x218] sm:$0xff]
      %v1031 = vld [vmem:[%s962 + $0x220] sm:$0xff]
      %v1032 = vld [vmem:[%s962 + $0x228] sm:$0xff]
      %v1033 = vld [vmem:[%s962 + $0x230] sm:$0xff]
      %v1034 = vld [vmem:[%s962 + $0x238] sm:$0xff]
      %v1035 = vld [vmem:[%s962 + $0x240] sm:$0x7]
      %v1036 = vld [vmem:[%s962 + $0x248] sm:$0x7]
      %v1037 = vld [vmem:[%s962 + $0x250] sm:$0x7]
      %v1038 = vld [vmem:[%s962 + $0x258] sm:$0x7]
      %v1039 = vld [vmem:[%s962 + $0x260] sm:$0x7]
      %v1040 = vld [vmem:[%s962 + $0x268] sm:$0x7]
      %v1041 = vld [vmem:[%s962 + $0x270] sm:$0x7]
      %v1042 = vld [vmem:[%s962 + $0x278] sm:$0x7]
      %v1044 = vsel %vm256, %v1035, 0
      %v1047 = vsel %vm256, %v1036, 0
      %v1050 = vsel %vm256, %v1037, 0
      %v1053 = vsel %vm256, %v1038, 0
      %v1056 = vsel %vm256, %v1039, 0
      %v1059 = vsel %vm256, %v1040, 0
      %v1062 = vsel %vm256, %v1041, 0
      %v1065 = vsel %vm256, %v1042, 0
      %1067 = vmatprep.subr.mxu0 0.0
      %1068 = vmatpush1.msra.mxu0 0.0
      %1069 = vmatprep.subr.mxu0 0.0
      %1070 = vmatpush1.msra.mxu0 0.0
      %1071 = vmatprep.subr.mxu0 0.0
      %1072 = vmatpush1.msra.mxu0 0.0
      %1073 = vmatprep.subr.mxu0 0.0
      %1074 = vmatpush1.msra.mxu0 0.0
      %1075 = vmatprep.subr.mxu0 0.0
      %1076 = vmatpush1.msra.mxu0 0.0
      %1077 = vmatprep.subr.mxu0 0.0
      %1078 = vmatpush1.msra.mxu0 0.0
      %1079 = vmatprep.subr.mxu0 %v1047
      %1080 = vmatpush1.msra.mxu0 %v1044
      %1081 = vmatprep.subr.mxu0 %v1028
      %1082 = vmatpush1.msra.mxu0 %v1027
      %1083 = vmatprep.subr.mxu0 %v1020
      %1084 = vmatpush1.msra.mxu0 %v1019
      %1085 = vmatprep.subr.mxu0 %v1012
      %1086 = vmatpush1.msra.mxu0 %v1011
      %1087 = vmatprep.subr.mxu0 %v1004
      %1088 = vmatpush1.msra.mxu0 %v1003
      %1089 = vmatprep.subr.mxu0 %v996
      %1090 = vmatpush1.msra.mxu0 %v995
      %1091 = vmatprep.subr.mxu0 %v988
      %1092 = vmatpush1.msra.mxu0 %v987
      %1093 = vmatprep.subr.mxu0 %v980
      %1094 = vmatpush1.msra.mxu0 %v979
      %1095 = vmatprep.subr.mxu0 %v972
      %1096 = vmatpush1.msra.mxu0 %v971
      %1097 = vmatprep.subr.mxu0 %v964
      %1098 = vmatpush1.msra.mxu0 %v963
      %1099 = vmatprep.subr.mxu0 0.0
      %1100 = vmatpush2.msra.mxu0 0.0
      %1101 = vmatprep.subr.mxu0 0.0
      %1102 = vmatpush2.msra.mxu0 0.0
      %1103 = vmatprep.subr.mxu0 0.0
      %1104 = vmatpush2.msra.mxu0 0.0
      %1105 = vmatprep.subr.mxu0 0.0
      %1106 = vmatpush2.msra.mxu0 0.0
      %1107 = vmatprep.subr.mxu0 0.0
      %1108 = vmatpush2.msra.mxu0 0.0
      %1109 = vmatprep.subr.mxu0 0.0
      %1110 = vmatpush2.msra.mxu0 0.0
      %1111 = vmatprep.subr.mxu0 0.0
      %1112 = vmatpush2.msra.mxu0 0.0
      %1113 = vmatprep.subr.mxu0 0.0
      %1114 = vmatpush2.msra.mxu0 0.0
      %1115 = vmatprep.subr.mxu0 0.0
      %1116 = vmatpush2.msra.mxu0 0.0
      %1117 = vmatprep.subr.mxu0 0.0
      %1118 = vmatpush2.msra.mxu0 0.0
      %1119 = vmatprep.subr.mxu0 0.0
      %1120 = vmatpush2.msra.mxu0 0.0
      %1121 = vmatprep.subr.mxu0 0.0
      %1122 = vmatpush2.msra.mxu0 0.0
      %1123 = vmatprep.subr.mxu0 0.0
      %1124 = vmatpush2.msra.mxu0 0.0
      %1125 = vmatprep.subr.mxu0 0.0
      %1126 = vmatpush2.msra.mxu0 0.0
      %1127 = vmatprep.subr.mxu0 0.0
      %1128 = vmatpush2.msra.mxu0 0.0
      %1129 = vmatprep.subr.mxu0 0.0
      %1130 = vmatpush2.msra.mxu0 0.0
      %1131 = vmatprep.mubr.f32.mxu0 0.0
      %1132 = vmatmul.mubr.f32.gmra.mxu0 %v254
      %v1133 = vpop.f32.mrf.mxu0
      %v1134 = vadd.f32 0.0, %v1133
      %v1135 = vpop.f32.mrf.mxu0
      %v1136 = vadd.f32 0.0, %v1135
      %1137 = vdwg.mxu0
      %1138 = vmatprep.subr.mxu0 0.0
      %1139 = vmatpush1.msra.mxu0 0.0
      %1140 = vmatprep.subr.mxu0 0.0
      %1141 = vmatpush1.msra.mxu0 0.0
      %1142 = vmatprep.subr.mxu0 0.0
      %1143 = vmatpush1.msra.mxu0 0.0
      %1144 = vmatprep.subr.mxu0 0.0
      %1145 = vmatpush1.msra.mxu0 0.0
      %1146 = vmatprep.subr.mxu0 0.0
      %1147 = vmatpush1.msra.mxu0 0.0
      %1148 = vmatprep.subr.mxu0 0.0
      %1149 = vmatpush1.msra.mxu0 0.0
      %1150 = vmatprep.subr.mxu0 %v1053
      %1151 = vmatpush1.msra.mxu0 %v1050
      %1152 = vmatprep.subr.mxu0 %v1030
      %1153 = vmatpush1.msra.mxu0 %v1029
      %1154 = vmatprep.subr.mxu0 %v1022
      %1155 = vmatpush1.msra.mxu0 %v1021
      %1156 = vmatprep.subr.mxu0 %v1014
      %1157 = vmatpush1.msra.mxu0 %v1013
      %1158 = vmatprep.subr.mxu0 %v1006
      %1159 = vmatpush1.msra.mxu0 %v1005
      %1160 = vmatprep.subr.mxu0 %v998
      %1161 = vmatpush1.msra.mxu0 %v997
      %1162 = vmatprep.subr.mxu0 %v990
      %1163 = vmatpush1.msra.mxu0 %v989
      %1164 = vmatprep.subr.mxu0 %v982
      %1165 = vmatpush1.msra.mxu0 %v981
      %1166 = vmatprep.subr.mxu0 %v974
      %1167 = vmatpush1.msra.mxu0 %v973
      %1168 = vmatprep.subr.mxu0 %v966
      %1169 = vmatpush1.msra.mxu0 %v965
      %1170 = vmatprep.subr.mxu0 0.0
      %1171 = vmatpush2.msra.mxu0 0.0
      %1172 = vmatprep.subr.mxu0 0.0
      %1173 = vmatpush2.msra.mxu0 0.0
      %1174 = vmatprep.subr.mxu0 0.0
      %1175 = vmatpush2.msra.mxu0 0.0
      %1176 = vmatprep.subr.mxu0 0.0
      %1177 = vmatpush2.msra.mxu0 0.0
      %1178 = vmatprep.subr.mxu0 0.0
      %1179 = vmatpush2.msra.mxu0 0.0
      %1180 = vmatprep.subr.mxu0 0.0
      %1181 = vmatpush2.msra.mxu0 0.0
      %1182 = vmatprep.subr.mxu0 0.0
      %1183 = vmatpush2.msra.mxu0 0.0
      %1184 = vmatprep.subr.mxu0 0.0
      %1185 = vmatpush2.msra.mxu0 0.0
      %1186 = vmatprep.subr.mxu0 0.0
      %1187 = vmatpush2.msra.mxu0 0.0
      %1188 = vmatprep.subr.mxu0 0.0
      %1189 = vmatpush2.msra.mxu0 0.0
      %1190 = vmatprep.subr.mxu0 0.0
      %1191 = vmatpush2.msra.mxu0 0.0
      %1192 = vmatprep.subr.mxu0 0.0
      %1193 = vmatpush2.msra.mxu0 0.0
      %1194 = vmatprep.subr.mxu0 0.0
      %1195 = vmatpush2.msra.mxu0 0.0
      %1196 = vmatprep.subr.mxu0 0.0
      %1197 = vmatpush2.msra.mxu0 0.0
      %1198 = vmatprep.subr.mxu0 0.0
      %1199 = vmatpush2.msra.mxu0 0.0
      %1200 = vmatprep.subr.mxu0 0.0
      %1201 = vmatpush2.msra.mxu0 0.0
      %1202 = vmatprep.mubr.f32.mxu0 0.0
      %1203 = vmatmul.mubr.f32.gmra.mxu0 %v254
      %v1204 = vpop.f32.mrf.mxu0
      %v1205 = vadd.f32 0.0, %v1204
      %v1206 = vpop.f32.mrf.mxu0
      %v1207 = vadd.f32 0.0, %v1206
      %1208 = vdwg.mxu0
      %1209 = vmatprep.subr.mxu0 0.0
      %1210 = vmatpush1.msra.mxu0 0.0
      %1211 = vmatprep.subr.mxu0 0.0
      %1212 = vmatpush1.msra.mxu0 0.0
      %1213 = vmatprep.subr.mxu0 0.0
      %1214 = vmatpush1.msra.mxu0 0.0
      %1215 = vmatprep.subr.mxu0 0.0
      %1216 = vmatpush1.msra.mxu0 0.0
      %1217 = vmatprep.subr.mxu0 0.0
      %1218 = vmatpush1.msra.mxu0 0.0
      %1219 = vmatprep.subr.mxu0 0.0
      %1220 = vmatpush1.msra.mxu0 0.0
      %1221 = vmatprep.subr.mxu0 %v1059
      %1222 = vmatpush1.msra.mxu0 %v1056
      %1223 = vmatprep.subr.mxu0 %v1032
      %1224 = vmatpush1.msra.mxu0 %v1031
      %1225 = vmatprep.subr.mxu0 %v1024
      %1226 = vmatpush1.msra.mxu0 %v1023
      %1227 = vmatprep.subr.mxu0 %v1016
      %1228 = vmatpush1.msra.mxu0 %v1015
      %1229 = vmatprep.subr.mxu0 %v1008
      %1230 = vmatpush1.msra.mxu0 %v1007
      %1231 = vmatprep.subr.mxu0 %v1000
      %1232 = vmatpush1.msra.mxu0 %v999
      %1233 = vmatprep.subr.mxu0 %v992
      %1234 = vmatpush1.msra.mxu0 %v991
      %1235 = vmatprep.subr.mxu0 %v984
      %1236 = vmatpush1.msra.mxu0 %v983
      %1237 = vmatprep.subr.mxu0 %v976
      %1238 = vmatpush1.msra.mxu0 %v975
      %1239 = vmatprep.subr.mxu0 %v968
      %1240 = vmatpush1.msra.mxu0 %v967
      %1241 = vmatprep.subr.mxu0 0.0
      %1242 = vmatpush2.msra.mxu0 0.0
      %1243 = vmatprep.subr.mxu0 0.0
      %1244 = vmatpush2.msra.mxu0 0.0
      %1245 = vmatprep.subr.mxu0 0.0
      %1246 = vmatpush2.msra.mxu0 0.0
      %1247 = vmatprep.subr.mxu0 0.0
      %1248 = vmatpush2.msra.mxu0 0.0
      %1249 = vmatprep.subr.mxu0 0.0
      %1250 = vmatpush2.msra.mxu0 0.0
      %1251 = vmatprep.subr.mxu0 0.0
      %1252 = vmatpush2.msra.mxu0 0.0
      %1253 = vmatprep.subr.mxu0 0.0
      %1254 = vmatpush2.msra.mxu0 0.0
      %1255 = vmatprep.subr.mxu0 0.0
      %1256 = vmatpush2.msra.mxu0 0.0
      %1257 = vmatprep.subr.mxu0 0.0
      %1258 = vmatpush2.msra.mxu0 0.0
      %1259 = vmatprep.subr.mxu0 0.0
      %1260 = vmatpush2.msra.mxu0 0.0
      %1261 = vmatprep.subr.mxu0 0.0
      %1262 = vmatpush2.msra.mxu0 0.0
      %1263 = vmatprep.subr.mxu0 0.0
      %1264 = vmatpush2.msra.mxu0 0.0
      %1265 = vmatprep.subr.mxu0 0.0
      %1266 = vmatpush2.msra.mxu0 0.0
      %1267 = vmatprep.subr.mxu0 0.0
      %1268 = vmatpush2.msra.mxu0 0.0
      %1269 = vmatprep.subr.mxu0 0.0
      %1270 = vmatpush2.msra.mxu0 0.0
      %1271 = vmatprep.subr.mxu0 0.0
      %1272 = vmatpush2.msra.mxu0 0.0
      %1273 = vmatprep.mubr.f32.mxu0 0.0
      %1274 = vmatmul.mubr.f32.gmra.mxu0 %v254
      %v1275 = vpop.f32.mrf.mxu0
      %v1276 = vadd.f32 0.0, %v1275
      %v1277 = vpop.f32.mrf.mxu0
      %v1278 = vadd.f32 0.0, %v1277
      %1279 = vdwg.mxu0
      %1280 = vmatprep.subr.mxu0 0.0
      %1281 = vmatpush1.msra.mxu0 0.0
      %1282 = vmatprep.subr.mxu0 0.0
      %1283 = vmatpush1.msra.mxu0 0.0
      %1284 = vmatprep.subr.mxu0 0.0
      %1285 = vmatpush1.msra.mxu0 0.0
      %1286 = vmatprep.subr.mxu0 0.0
      %1287 = vmatpush1.msra.mxu0 0.0
      %1288 = vmatprep.subr.mxu0 0.0
      %1289 = vmatpush1.msra.mxu0 0.0
      %1290 = vmatprep.subr.mxu0 0.0
      %1291 = vmatpush1.msra.mxu0 0.0
      %1292 = vmatprep.subr.mxu0 %v1065
      %1293 = vmatpush1.msra.mxu0 %v1062
      %1294 = vmatprep.subr.mxu0 %v1034
      %1295 = vmatpush1.msra.mxu0 %v1033
      %1296 = vmatprep.subr.mxu0 %v1026
      %1297 = vmatpush1.msra.mxu0 %v1025
      %1298 = vmatprep.subr.mxu0 %v1018
      %1299 = vmatpush1.msra.mxu0 %v1017
      %1300 = vmatprep.subr.mxu0 %v1010
      %1301 = vmatpush1.msra.mxu0 %v1009
      %1302 = vmatprep.subr.mxu0 %v1002
      %1303 = vmatpush1.msra.mxu0 %v1001
      %1304 = vmatprep.subr.mxu0 %v994
      %1305 = vmatpush1.msra.mxu0 %v993
      %1306 = vmatprep.subr.mxu0 %v986
      %1307 = vmatpush1.msra.mxu0 %v985
      %1308 = vmatprep.subr.mxu0 %v978
      %1309 = vmatpush1.msra.mxu0 %v977
      %1310 = vmatprep.subr.mxu0 %v970
      %1311 = vmatpush1.msra.mxu0 %v969
      %1312 = vmatprep.subr.mxu0 0.0
      %1313 = vmatpush2.msra.mxu0 0.0
      %1314 = vmatprep.subr.mxu0 0.0
      %1315 = vmatpush2.msra.mxu0 0.0
      %1316 = vmatprep.subr.mxu0 0.0
      %1317 = vmatpush2.msra.mxu0 0.0
      %1318 = vmatprep.subr.mxu0 0.0
      %1319 = vmatpush2.msra.mxu0 0.0
      %1320 = vmatprep.subr.mxu0 0.0
      %1321 = vmatpush2.msra.mxu0 0.0
      %1322 = vmatprep.subr.mxu0 0.0
      %1323 = vmatpush2.msra.mxu0 0.0
      %1324 = vmatprep.subr.mxu0 0.0
      %1325 = vmatpush2.msra.mxu0 0.0
      %1326 = vmatprep.subr.mxu0 0.0
      %1327 = vmatpush2.msra.mxu0 0.0
      %1328 = vmatprep.subr.mxu0 0.0
      %1329 = vmatpush2.msra.mxu0 0.0
      %1330 = vmatprep.subr.mxu0 0.0
      %1331 = vmatpush2.msra.mxu0 0.0
      %1332 = vmatprep.subr.mxu0 0.0
      %1333 = vmatpush2.msra.mxu0 0.0
      %1334 = vmatprep.subr.mxu0 0.0
      %1335 = vmatpush2.msra.mxu0 0.0
      %1336 = vmatprep.subr.mxu0 0.0
      %1337 = vmatpush2.msra.mxu0 0.0
      %1338 = vmatprep.subr.mxu0 0.0
      %1339 = vmatpush2.msra.mxu0 0.0
      %1340 = vmatprep.subr.mxu0 0.0
      %1341 = vmatpush2.msra.mxu0 0.0
      %1342 = vmatprep.subr.mxu0 0.0
      %1343 = vmatpush2.msra.mxu0 0.0
      %1344 = vmatprep.mubr.f32.mxu0 0.0
      %1345 = vmatmul.mubr.f32.gmra.mxu0 %v254
      %v1346 = vpop.f32.mrf.mxu0
      %v1347 = vadd.f32 0.0, %v1346
      %v1348 = vpop.f32.mrf.mxu0
      %v1349 = vadd.f32 0.0, %v1348
      %1350 = vdwg.mxu0
      %v1351 = vmax.f32 %v954, %v1134
      %v1352 = vmax.f32 %v955, %v1136
      %v1353 = vmax.f32 %v956, %v1205
      %v1354 = vmax.f32 %v957, %v1207
      %v1355 = vmax.f32 %v958, %v1276
      %v1356 = vmax.f32 %v959, %v1278
      %v1357 = vmax.f32 %v960, %v1347
      %v1358 = vmax.f32 %v961, %v1349
      %s1359 = scalar_lea.vmem %s165, 1920
      %v1360 = vld [vmem:[%s1359] sm:$0xff]
      %v1361 = vld [vmem:[%s1359 + $0x8] sm:$0xff]
      %v1362 = vld [vmem:[%s1359 + $0x10] sm:$0xff]
      %v1363 = vld [vmem:[%s1359 + $0x18] sm:$0xff]
      %v1364 = vld [vmem:[%s1359 + $0x20] sm:$0xff]
      %v1365 = vld [vmem:[%s1359 + $0x28] sm:$0xff]
      %v1366 = vld [vmem:[%s1359 + $0x30] sm:$0xff]
      %v1367 = vld [vmem:[%s1359 + $0x38] sm:$0xff]
      %v1368 = vld [vmem:[%s1359 + $0x40] sm:$0xff]
      %v1369 = vld [vmem:[%s1359 + $0x48] sm:$0xff]
      %v1370 = vld [vmem:[%s1359 + $0x50] sm:$0xff]
      %v1371 = vld [vmem:[%s1359 + $0x58] sm:$0xff]
      %v1372 = vld [vmem:[%s1359 + $0x60] sm:$0xff]
      %v1373 = vld [vmem:[%s1359 + $0x68] sm:$0xff]
      %v1374 = vld [vmem:[%s1359 + $0x70] sm:$0xff]
      %v1375 = vld [vmem:[%s1359 + $0x78] sm:$0xff]
      %v1376 = vld [vmem:[%s1359 + $0x80] sm:$0xff]
      %v1377 = vld [vmem:[%s1359 + $0x88] sm:$0xff]
      %v1378 = vld [vmem:[%s1359 + $0x90] sm:$0xff]
      %v1379 = vld [vmem:[%s1359 + $0x98] sm:$0xff]
      %v1380 = vld [vmem:[%s1359 + $0xa0] sm:$0xff]
      %v1381 = vld [vmem:[%s1359 + $0xa8] sm:$0xff]
      %v1382 = vld [vmem:[%s1359 + $0xb0] sm:$0xff]
      %v1383 = vld [vmem:[%s1359 + $0xb8] sm:$0xff]
      %v1384 = vld [vmem:[%s1359 + $0xc0] sm:$0xff]
      %v1385 = vld [vmem:[%s1359 + $0xc8] sm:$0xff]
      %v1386 = vld [vmem:[%s1359 + $0xd0] sm:$0xff]
      %v1387 = vld [vmem:[%s1359 + $0xd8] sm:$0xff]
      %v1388 = vld [vmem:[%s1359 + $0xe0] sm:$0xff]
      %v1389 = vld [vmem:[%s1359 + $0xe8] sm:$0xff]
      %v1390 = vld [vmem:[%s1359 + $0xf0] sm:$0xff]
      %v1391 = vld [vmem:[%s1359 + $0xf8] sm:$0xff]
      %v1392 = vld [vmem:[%s1359 + $0x100] sm:$0xff]
      %v1393 = vld [vmem:[%s1359 + $0x108] sm:$0xff]
      %v1394 = vld [vmem:[%s1359 + $0x110] sm:$0xff]
      %v1395 = vld [vmem:[%s1359 + $0x118] sm:$0xff]
      %v1396 = vld [vmem:[%s1359 + $0x120] sm:$0xff]
      %v1397 = vld [vmem:[%s1359 + $0x128] sm:$0xff]
      %v1398 = vld [vmem:[%s1359 + $0x130] sm:$0xff]
      %v1399 = vld [vmem:[%s1359 + $0x138] sm:$0xff]
      %v1400 = vld [vmem:[%s1359 + $0x140] sm:$0xff]
      %v1401 = vld [vmem:[%s1359 + $0x148] sm:$0xff]
      %v1402 = vld [vmem:[%s1359 + $0x150] sm:$0xff]
      %v1403 = vld [vmem:[%s1359 + $0x158] sm:$0xff]
      %v1404 = vld [vmem:[%s1359 + $0x160] sm:$0xff]
      %v1405 = vld [vmem:[%s1359 + $0x168] sm:$0xff]
      %v1406 = vld [vmem:[%s1359 + $0x170] sm:$0xff]
      %v1407 = vld [vmem:[%s1359 + $0x178] sm:$0xff]
      %v1408 = vld [vmem:[%s1359 + $0x180] sm:$0xff]
      %v1409 = vld [vmem:[%s1359 + $0x188] sm:$0xff]
      %v1410 = vld [vmem:[%s1359 + $0x190] sm:$0xff]
      %v1411 = vld [vmem:[%s1359 + $0x198] sm:$0xff]
      %v1412 = vld [vmem:[%s1359 + $0x1a0] sm:$0xff]
      %v1413 = vld [vmem:[%s1359 + $0x1a8] sm:$0xff]
      %v1414 = vld [vmem:[%s1359 + $0x1b0] sm:$0xff]
      %v1415 = vld [vmem:[%s1359 + $0x1b8] sm:$0xff]
      %v1416 = vld [vmem:[%s1359 + $0x1c0] sm:$0xff]
      %v1417 = vld [vmem:[%s1359 + $0x1c8] sm:$0xff]
      %v1418 = vld [vmem:[%s1359 + $0x1d0] sm:$0xff]
      %v1419 = vld [vmem:[%s1359 + $0x1d8] sm:$0xff]
      %v1420 = vld [vmem:[%s1359 + $0x1e0] sm:$0xff]
      %v1421 = vld [vmem:[%s1359 + $0x1e8] sm:$0xff]
      %v1422 = vld [vmem:[%s1359 + $0x1f0] sm:$0xff]
      %v1423 = vld [vmem:[%s1359 + $0x1f8] sm:$0xff]
      %v1424 = vld [vmem:[%s1359 + $0x200] sm:$0xff]
      %v1425 = vld [vmem:[%s1359 + $0x208] sm:$0xff]
      %v1426 = vld [vmem:[%s1359 + $0x210] sm:$0xff]
      %v1427 = vld [vmem:[%s1359 + $0x218] sm:$0xff]
      %v1428 = vld [vmem:[%s1359 + $0x220] sm:$0xff]
      %v1429 = vld [vmem:[%s1359 + $0x228] sm:$0xff]
      %v1430 = vld [vmem:[%s1359 + $0x230] sm:$0xff]
      %v1431 = vld [vmem:[%s1359 + $0x238] sm:$0xff]
      %v1432 = vld [vmem:[%s1359 + $0x240] sm:$0x7]
      %v1433 = vld [vmem:[%s1359 + $0x248] sm:$0x7]
      %v1434 = vld [vmem:[%s1359 + $0x250] sm:$0x7]
      %v1435 = vld [vmem:[%s1359 + $0x258] sm:$0x7]
      %v1436 = vld [vmem:[%s1359 + $0x260] sm:$0x7]
      %v1437 = vld [vmem:[%s1359 + $0x268] sm:$0x7]
      %v1438 = vld [vmem:[%s1359 + $0x270] sm:$0x7]
      %v1439 = vld [vmem:[%s1359 + $0x278] sm:$0x7]
      %v1441 = vsel %vm256, %v1432, 0
      %v1444 = vsel %vm256, %v1433, 0
      %v1447 = vsel %vm256, %v1434, 0
      %v1450 = vsel %vm256, %v1435, 0
      %v1453 = vsel %vm256, %v1436, 0
      %v1456 = vsel %vm256, %v1437, 0
      %v1459 = vsel %vm256, %v1438, 0
      %v1462 = vsel %vm256, %v1439, 0
      %1464 = vmatprep.subr.mxu0 0.0
      %1465 = vmatpush1.msra.mxu0 0.0
      %1466 = vmatprep.subr.mxu0 0.0
      %1467 = vmatpush1.msra.mxu0 0.0
      %1468 = vmatprep.subr.mxu0 0.0
      %1469 = vmatpush1.msra.mxu0 0.0
      %1470 = vmatprep.subr.mxu0 0.0
      %1471 = vmatpush1.msra.mxu0 0.0
      %1472 = vmatprep.subr.mxu0 0.0
      %1473 = vmatpush1.msra.mxu0 0.0
      %1474 = vmatprep.subr.mxu0 0.0
      %1475 = vmatpush1.msra.mxu0 0.0
      %1476 = vmatprep.subr.mxu0 %v1444
      %1477 = vmatpush1.msra.mxu0 %v1441
      %1478 = vmatprep.subr.mxu0 %v1425
      %1479 = vmatpush1.msra.mxu0 %v1424
      %1480 = vmatprep.subr.mxu0 %v1417
      %1481 = vmatpush1.msra.mxu0 %v1416
      %1482 = vmatprep.subr.mxu0 %v1409
      %1483 = vmatpush1.msra.mxu0 %v1408
      %1484 = vmatprep.subr.mxu0 %v1401
      %1485 = vmatpush1.msra.mxu0 %v1400
      %1486 = vmatprep.subr.mxu0 %v1393
      %1487 = vmatpush1.msra.mxu0 %v1392
      %1488 = vmatprep.subr.mxu0 %v1385
      %1489 = vmatpush1.msra.mxu0 %v1384
      %1490 = vmatprep.subr.mxu0 %v1377
      %1491 = vmatpush1.msra.mxu0 %v1376
      %1492 = vmatprep.subr.mxu0 %v1369
      %1493 = vmatpush1.msra.mxu0 %v1368
      %1494 = vmatprep.subr.mxu0 %v1361
      %1495 = vmatpush1.msra.mxu0 %v1360
      %1496 = vmatprep.subr.mxu0 0.0
      %1497 = vmatpush2.msra.mxu0 0.0
      %1498 = vmatprep.subr.mxu0 0.0
      %1499 = vmatpush2.msra.mxu0 0.0
      %1500 = vmatprep.subr.mxu0 0.0
      %1501 = vmatpush2.msra.mxu0 0.0
      %1502 = vmatprep.subr.mxu0 0.0
      %1503 = vmatpush2.msra.mxu0 0.0
      %1504 = vmatprep.subr.mxu0 0.0
      %1505 = vmatpush2.msra.mxu0 0.0
      %1506 = vmatprep.subr.mxu0 0.0
      %1507 = vmatpush2.msra.mxu0 0.0
      %1508 = vmatprep.subr.mxu0 0.0
      %1509 = vmatpush2.msra.mxu0 0.0
      %1510 = vmatprep.subr.mxu0 0.0
      %1511 = vmatpush2.msra.mxu0 0.0
      %1512 = vmatprep.subr.mxu0 0.0
      %1513 = vmatpush2.msra.mxu0 0.0
      %1514 = vmatprep.subr.mxu0 0.0
      %1515 = vmatpush2.msra.mxu0 0.0
      %1516 = vmatprep.subr.mxu0 0.0
      %1517 = vmatpush2.msra.mxu0 0.0
      %1518 = vmatprep.subr.mxu0 0.0
      %1519 = vmatpush2.msra.mxu0 0.0
      %1520 = vmatprep.subr.mxu0 0.0
      %1521 = vmatpush2.msra.mxu0 0.0
      %1522 = vmatprep.subr.mxu0 0.0
      %1523 = vmatpush2.msra.mxu0 0.0
      %1524 = vmatprep.subr.mxu0 0.0
      %1525 = vmatpush2.msra.mxu0 0.0
      %1526 = vmatprep.subr.mxu0 0.0
      %1527 = vmatpush2.msra.mxu0 0.0
      %1528 = vmatprep.mubr.f32.mxu0 0.0
      %1529 = vmatmul.mubr.f32.gmra.mxu0 %v254
      %v1530 = vpop.f32.mrf.mxu0
      %v1531 = vadd.f32 0.0, %v1530
      %v1532 = vpop.f32.mrf.mxu0
      %v1533 = vadd.f32 0.0, %v1532
      %1534 = vdwg.mxu0
      %1535 = vmatprep.subr.mxu0 0.0
      %1536 = vmatpush1.msra.mxu0 0.0
      %1537 = vmatprep.subr.mxu0 0.0
      %1538 = vmatpush1.msra.mxu0 0.0
      %1539 = vmatprep.subr.mxu0 0.0
      %1540 = vmatpush1.msra.mxu0 0.0
      %1541 = vmatprep.subr.mxu0 0.0
      %1542 = vmatpush1.msra.mxu0 0.0
      %1543 = vmatprep.subr.mxu0 0.0
      %1544 = vmatpush1.msra.mxu0 0.0
      %1545 = vmatprep.subr.mxu0 0.0
      %1546 = vmatpush1.msra.mxu0 0.0
      %1547 = vmatprep.subr.mxu0 %v1450
      %1548 = vmatpush1.msra.mxu0 %v1447
      %1549 = vmatprep.subr.mxu0 %v1427
      %1550 = vmatpush1.msra.mxu0 %v1426
      %1551 = vmatprep.subr.mxu0 %v1419
      %1552 = vmatpush1.msra.mxu0 %v1418
      %1553 = vmatprep.subr.mxu0 %v1411
      %1554 = vmatpush1.msra.mxu0 %v1410
      %1555 = vmatprep.subr.mxu0 %v1403
      %1556 = vmatpush1.msra.mxu0 %v1402
      %1557 = vmatprep.subr.mxu0 %v1395
      %1558 = vmatpush1.msra.mxu0 %v1394
      %1559 = vmatprep.subr.mxu0 %v1387
      %1560 = vmatpush1.msra.mxu0 %v1386
      %1561 = vmatprep.subr.mxu0 %v1379
      %1562 = vmatpush1.msra.mxu0 %v1378
      %1563 = vmatprep.subr.mxu0 %v1371
      %1564 = vmatpush1.msra.mxu0 %v1370
      %1565 = vmatprep.subr.mxu0 %v1363
      %1566 = vmatpush1.msra.mxu0 %v1362
      %1567 = vmatprep.subr.mxu0 0.0
      %1568 = vmatpush2.msra.mxu0 0.0
      %1569 = vmatprep.subr.mxu0 0.0
      %1570 = vmatpush2.msra.mxu0 0.0
      %1571 = vmatprep.subr.mxu0 0.0
      %1572 = vmatpush2.msra.mxu0 0.0
      %1573 = vmatprep.subr.mxu0 0.0
      %1574 = vmatpush2.msra.mxu0 0.0
      %1575 = vmatprep.subr.mxu0 0.0
      %1576 = vmatpush2.msra.mxu0 0.0
      %1577 = vmatprep.subr.mxu0 0.0
      %1578 = vmatpush2.msra.mxu0 0.0
      %1579 = vmatprep.subr.mxu0 0.0
      %1580 = vmatpush2.msra.mxu0 0.0
      %1581 = vmatprep.subr.mxu0 0.0
      %1582 = vmatpush2.msra.mxu0 0.0
      %1583 = vmatprep.subr.mxu0 0.0
      %1584 = vmatpush2.msra.mxu0 0.0
      %1585 = vmatprep.subr.mxu0 0.0
      %1586 = vmatpush2.msra.mxu0 0.0
      %1587 = vmatprep.subr.mxu0 0.0
      %1588 = vmatpush2.msra.mxu0 0.0
      %1589 = vmatprep.subr.mxu0 0.0
      %1590 = vmatpush2.msra.mxu0 0.0
      %1591 = vmatprep.subr.mxu0 0.0
      %1592 = vmatpush2.msra.mxu0 0.0
      %1593 = vmatprep.subr.mxu0 0.0
      %1594 = vmatpush2.msra.mxu0 0.0
      %1595 = vmatprep.subr.mxu0 0.0
      %1596 = vmatpush2.msra.mxu0 0.0
      %1597 = vmatprep.subr.mxu0 0.0
      %1598 = vmatpush2.msra.mxu0 0.0
      %1599 = vmatprep.mubr.f32.mxu0 0.0
      %1600 = vmatmul.mubr.f32.gmra.mxu0 %v254
      %v1601 = vpop.f32.mrf.mxu0
      %v1602 = vadd.f32 0.0, %v1601
      %v1603 = vpop.f32.mrf.mxu0
      %v1604 = vadd.f32 0.0, %v1603
      %1605 = vdwg.mxu0
      %1606 = vmatprep.subr.mxu0 0.0
      %1607 = vmatpush1.msra.mxu0 0.0
      %1608 = vmatprep.subr.mxu0 0.0
      %1609 = vmatpush1.msra.mxu0 0.0
      %1610 = vmatprep.subr.mxu0 0.0
      %1611 = vmatpush1.msra.mxu0 0.0
      %1612 = vmatprep.subr.mxu0 0.0
      %1613 = vmatpush1.msra.mxu0 0.0
      %1614 = vmatprep.subr.mxu0 0.0
      %1615 = vmatpush1.msra.mxu0 0.0
      %1616 = vmatprep.subr.mxu0 0.0
      %1617 = vmatpush1.msra.mxu0 0.0
      %1618 = vmatprep.subr.mxu0 %v1456
      %1619 = vmatpush1.msra.mxu0 %v1453
      %1620 = vmatprep.subr.mxu0 %v1429
      %1621 = vmatpush1.msra.mxu0 %v1428
      %1622 = vmatprep.subr.mxu0 %v1421
      %1623 = vmatpush1.msra.mxu0 %v1420
      %1624 = vmatprep.subr.mxu0 %v1413
      %1625 = vmatpush1.msra.mxu0 %v1412
      %1626 = vmatprep.subr.mxu0 %v1405
      %1627 = vmatpush1.msra.mxu0 %v1404
      %1628 = vmatprep.subr.mxu0 %v1397
      %1629 = vmatpush1.msra.mxu0 %v1396
      %1630 = vmatprep.subr.mxu0 %v1389
      %1631 = vmatpush1.msra.mxu0 %v1388
      %1632 = vmatprep.subr.mxu0 %v1381
      %1633 = vmatpush1.msra.mxu0 %v1380
      %1634 = vmatprep.subr.mxu0 %v1373
      %1635 = vmatpush1.msra.mxu0 %v1372
      %1636 = vmatprep.subr.mxu0 %v1365
      %1637 = vmatpush1.msra.mxu0 %v1364
      %1638 = vmatprep.subr.mxu0 0.0
      %1639 = vmatpush2.msra.mxu0 0.0
      %1640 = vmatprep.subr.mxu0 0.0
      %1641 = vmatpush2.msra.mxu0 0.0
      %1642 = vmatprep.subr.mxu0 0.0
      %1643 = vmatpush2.msra.mxu0 0.0
      %1644 = vmatprep.subr.mxu0 0.0
      %1645 = vmatpush2.msra.mxu0 0.0
      %1646 = vmatprep.subr.mxu0 0.0
      %1647 = vmatpush2.msra.mxu0 0.0
      %1648 = vmatprep.subr.mxu0 0.0
      %1649 = vmatpush2.msra.mxu0 0.0
      %1650 = vmatprep.subr.mxu0 0.0
      %1651 = vmatpush2.msra.mxu0 0.0
      %1652 = vmatprep.subr.mxu0 0.0
      %1653 = vmatpush2.msra.mxu0 0.0
      %1654 = vmatprep.subr.mxu0 0.0
      %1655 = vmatpush2.msra.mxu0 0.0
      %1656 = vmatprep.subr.mxu0 0.0
      %1657 = vmatpush2.msra.mxu0 0.0
      %1658 = vmatprep.subr.mxu0 0.0
      %1659 = vmatpush2.msra.mxu0 0.0
      %1660 = vmatprep.subr.mxu0 0.0
      %1661 = vmatpush2.msra.mxu0 0.0
      %1662 = vmatprep.subr.mxu0 0.0
      %1663 = vmatpush2.msra.mxu0 0.0
      %1664 = vmatprep.subr.mxu0 0.0
      %1665 = vmatpush2.msra.mxu0 0.0
      %1666 = vmatprep.subr.mxu0 0.0
      %1667 = vmatpush2.msra.mxu0 0.0
      %1668 = vmatprep.subr.mxu0 0.0
      %1669 = vmatpush2.msra.mxu0 0.0
      %1670 = vmatprep.mubr.f32.mxu0 0.0
      %1671 = vmatmul.mubr.f32.gmra.mxu0 %v254
      %v1672 = vpop.f32.mrf.mxu0
      %v1673 = vadd.f32 0.0, %v1672
      %v1674 = vpop.f32.mrf.mxu0
      %v1675 = vadd.f32 0.0, %v1674
      %1676 = vdwg.mxu0
      %1677 = vmatprep.subr.mxu0 0.0
      %1678 = vmatpush1.msra.mxu0 0.0
      %1679 = vmatprep.subr.mxu0 0.0
      %1680 = vmatpush1.msra.mxu0 0.0
      %1681 = vmatprep.subr.mxu0 0.0
      %1682 = vmatpush1.msra.mxu0 0.0
      %1683 = vmatprep.subr.mxu0 0.0
      %1684 = vmatpush1.msra.mxu0 0.0
      %1685 = vmatprep.subr.mxu0 0.0
      %1686 = vmatpush1.msra.mxu0 0.0
      %1687 = vmatprep.subr.mxu0 0.0
      %1688 = vmatpush1.msra.mxu0 0.0
      %1689 = vmatprep.subr.mxu0 %v1462
      %1690 = vmatpush1.msra.mxu0 %v1459
      %1691 = vmatprep.subr.mxu0 %v1431
      %1692 = vmatpush1.msra.mxu0 %v1430
      %1693 = vmatprep.subr.mxu0 %v1423
      %1694 = vmatpush1.msra.mxu0 %v1422
      %1695 = vmatprep.subr.mxu0 %v1415
      %1696 = vmatpush1.msra.mxu0 %v1414
      %1697 = vmatprep.subr.mxu0 %v1407
      %1698 = vmatpush1.msra.mxu0 %v1406
      %1699 = vmatprep.subr.mxu0 %v1399
      %1700 = vmatpush1.msra.mxu0 %v1398
      %1701 = vmatprep.subr.mxu0 %v1391
      %1702 = vmatpush1.msra.mxu0 %v1390
      %1703 = vmatprep.subr.mxu0 %v1383
      %1704 = vmatpush1.msra.mxu0 %v1382
      %1705 = vmatprep.subr.mxu0 %v1375
      %1706 = vmatpush1.msra.mxu0 %v1374
      %1707 = vmatprep.subr.mxu0 %v1367
      %1708 = vmatpush1.msra.mxu0 %v1366
      %1709 = vmatprep.subr.mxu0 0.0
      %1710 = vmatpush2.msra.mxu0 0.0
      %1711 = vmatprep.subr.mxu0 0.0
      %1712 = vmatpush2.msra.mxu0 0.0
      %1713 = vmatprep.subr.mxu0 0.0
      %1714 = vmatpush2.msra.mxu0 0.0
      %1715 = vmatprep.subr.mxu0 0.0
      %1716 = vmatpush2.msra.mxu0 0.0
      %1717 = vmatprep.subr.mxu0 0.0
      %1718 = vmatpush2.msra.mxu0 0.0
      %1719 = vmatprep.subr.mxu0 0.0
      %1720 = vmatpush2.msra.mxu0 0.0
      %1721 = vmatprep.subr.mxu0 0.0
      %1722 = vmatpush2.msra.mxu0 0.0
      %1723 = vmatprep.subr.mxu0 0.0
      %1724 = vmatpush2.msra.mxu0 0.0
      %1725 = vmatprep.subr.mxu0 0.0
      %1726 = vmatpush2.msra.mxu0 0.0
      %1727 = vmatprep.subr.mxu0 0.0
      %1728 = vmatpush2.msra.mxu0 0.0
      %1729 = vmatprep.subr.mxu0 0.0
      %1730 = vmatpush2.msra.mxu0 0.0
      %1731 = vmatprep.subr.mxu0 0.0
      %1732 = vmatpush2.msra.mxu0 0.0
      %1733 = vmatprep.subr.mxu0 0.0
      %1734 = vmatpush2.msra.mxu0 0.0
      %1735 = vmatprep.subr.mxu0 0.0
      %1736 = vmatpush2.msra.mxu0 0.0
      %1737 = vmatprep.subr.mxu0 0.0
      %1738 = vmatpush2.msra.mxu0 0.0
      %1739 = vmatprep.subr.mxu0 0.0
      %1740 = vmatpush2.msra.mxu0 0.0
      %1741 = vmatprep.mubr.f32.mxu0 0.0
      %1742 = vmatmul.mubr.f32.gmra.mxu0 %v254
      %v1743 = vpop.f32.mrf.mxu0
      %v1744 = vadd.f32 0.0, %v1743
      %v1745 = vpop.f32.mrf.mxu0
      %v1746 = vadd.f32 0.0, %v1745
      %1747 = vdwg.mxu0
      %v1748 = vmax.f32 %v1351, %v1531
      %v1749 = vmax.f32 %v1352, %v1533
      %v1750 = vmax.f32 %v1353, %v1602
      %v1751 = vmax.f32 %v1354, %v1604
      %v1752 = vmax.f32 %v1355, %v1673
      %v1753 = vmax.f32 %v1356, %v1675
      %v1754 = vmax.f32 %v1357, %v1744
      %v1755 = vmax.f32 %v1358, %v1746
      %v1756 = vld [vmem:[%s2] sm:$0x3f]
      %1758 = vset.pattern.permute.xlu0 0
      %1759 = vperm.xlu0 %1758, %v1756
      %v1760 = vpop.permute.xlu0 %1759
      %v1762 = vadd.f32 %v1748, %v1760
      %v1763 = vadd.f32 %v1749, %v1760
      %v1764 = vadd.f32 %v1750, %v1760
      %v1765 = vadd.f32 %v1751, %v1760
      %v1766 = vadd.f32 %v1752, %v1760
      %v1767 = vadd.f32 %v1753, %v1760
      %v1768 = vadd.f32 %v1754, %v1760
      %v1769 = vadd.f32 %v1755, %v1760
      %v1770 = vmax.f32 %v1762, 0.0
      %v1771 = vmax.f32 %v1763, 0.0
      %v1772 = vmax.f32 %v1764, 0.0
      %v1773 = vmax.f32 %v1765, 0.0
      %v1774 = vmax.f32 %v1766, 0.0
      %v1775 = vmax.f32 %v1767, 0.0
      %v1776 = vmax.f32 %v1768, 0.0
      %v1777 = vmax.f32 %v1769, 0.0
      %1778 = vst [vmem:[%s170] sm:$0x3f] %v1770
      %1779 = vst [vmem:[%s170 + $0x8] sm:$0x3f] %v1771
      %1780 = vst [vmem:[%s170 + $0x10] sm:$0x3f] %v1772
      %1781 = vst [vmem:[%s170 + $0x18] sm:$0x3f] %v1773
      %1782 = vst [vmem:[%s170 + $0x20] sm:$0x3f] %v1774
      %1783 = vst [vmem:[%s170 + $0x28] sm:$0x3f] %v1775
      %1784 = vst [vmem:[%s170 + $0x30] sm:$0x3f] %v1776
      %vm1785 = vcmask 29696
      %1786 = vst.msk [vmem:[%s170 + $0x38] sm:$0x3f] %vm1785, %v1777
      %p1787 = scmp.lt.s32.totalorder %s14, 1
      %s1788 = scalar_select %p1787, %s14, 1
      %s1789 = smul.addr %s1788, 8
      %s1790 = smul.addr %s1789, 8
      %s1791 = scalar_lea.vmem %s3, %s1790
      // Predicated region
      $region33: #{simple_cnn_forward.2} parent=31 // pred_check
        %p1792 = pneg %p100
      $region34: #{simple_cnn_forward.2} parent=31 // pred_check_branch
        %1794 = sbr.rel (%p1792) target = $region36
      $region35: #{simple_cnn_forward.2} parent=31 // pred_region
        _
      $region36: #{simple_cnn_forward.2} parent=31 // pred_fallthru
        _
    $region32: #{simple_cnn_forward.2} parent=5 // pred_fallthru
      _
    %p1795 = scmp.le.s32.totalorder 2, %s9
    // Predicated region
    $region37: #{simple_cnn_forward.2} parent=5 // pred_check
      %p1796 = pneg %p1795
    $region38: #{simple_cnn_forward.2} parent=5 // pred_check_branch
      %1798 = sbr.rel (%p1796) target = $region40
    $region39: #{simple_cnn_forward.2} parent=5 // pred_region
      %s1799 = ssub.s32 %s9, 2
      // Predicated region
      $region41: #{simple_cnn_forward.2} parent=39 // pred_check
        %p1800 = pneg %p106
      $region42: #{simple_cnn_forward.2} parent=39 // pred_check_branch
        %1802 = sbr.rel (%p1800) target = $region44
      $region43: #{simple_cnn_forward.2} parent=39 // pred_region
        %p1803 = scmp.lt.s32.totalorder %s15, 1
        %s1804 = scalar_select %p1803, %s15, 1
        %s1805 = smul.addr %s1804, 8
        %s1806 = smul.addr %s1805, 8
        %s1807 = scalar_lea.vmem %s3, %s1806
      $region44: #{simple_cnn_forward.2} parent=39 // pred_fallthru
        _
    $region40: #{simple_cnn_forward.2} parent=5 // pred_fallthru
      _
  $region6: #{simple_cnn_forward.2} parent=0 // loop_footer
    %s13 = sadd.s32 1, %s9
  $region7: #{simple_cnn_forward.2} parent=0 // loop_footer_branch
    %8 = sbr.rel target = $region3
  $region8: #{simple_cnn_forward.2} parent=0 // loop_exit
    _

// kernel: simple_cnn_forward.3
$region0: #{simple_cnn_forward.3}
  #allocation0 [shape = 'u32[]', space=smem, size = 0x4, offset = 0x4, fixed_abs, tag = 'smem constant byte address 0x4 - core index']
  #allocation1 [shape = 'u32[144,128]{1,0:T(1,128)}', space=vmem, size = 0x12000, scoped, tag = 'internal scratch']
  #allocation2 [shape = 'f32[16,169]{1,0:T(8,128)}', space=vmem, size = 0x4000, scoped, tag = 'scratch operand']
  %s0 = inlined_call_operand.vmem [shape: f32[2,4,150,169], index: 0, kind: input, shape index: {}]
  %s1 = inlined_call_operand.vmem [shape: f32[16,150], index: 1, kind: input, shape index: {}]
  %s2 = inlined_call_operand.vmem [shape: f32[16,1], index: 2, kind: input, shape index: {}]
  %s3 = inlined_call_operand.vmem [shape: f32[16,169,120], index: 3, kind: input, shape index: {}]
  %s4 = inlined_call_operand.vmem [shape: f32[1,120], index: 4, kind: input, shape index: {}]
  %s5 = inlined_call_operand.vmem [shape: f32[120,84], index: 5, kind: input, shape index: {}]
  %s6 = inlined_call_operand.vmem [shape: f32[1,84], index: 6, kind: input, shape index: {}]
  %s7 = inlined_call_operand.vmem [shape: f32[84,2], index: 7, kind: input, shape index: {}]
  %s8 = inlined_call_operand.vmem [shape: f32[1,2], index: 8, kind: input, shape index: {}]
  %s9 = inlined_call_operand.hbm [shape: f32[2,1,2], index: 9, kind: output, shape index: {}]
  %s10 = sld [smem:[#allocation0]]
  $region69: #{simple_cnn_forward.3} parent=0
    _
  %s12 = ssub.s32 1, %s10
  %s13 = scalar_select 0, %s12, %s10
  $region1: #{simple_cnn_forward.3} parent=0
    #allocation3 [shape = 'u8[1024]{0}', space=vmem, size = 0x400, scoped, tag = 'output window, operand 0']
    #allocation4 [shape = 's32[2]{0}', space=sflag, size = 0x8, scoped, tag = 'scoped memory for simple_cnn_forward.3']
    %14 = vsyncpa [#allocation4], 0
    %s15 = scalar_lea.sflag [#allocation4], 1
    %16 = vsyncpa %s15, 0
    loop: start=0, step=1, limit=4
    $region2: #{simple_cnn_forward.3} parent=1 // loop_pre_header
      _
    $region3: #{simple_cnn_forward.3} parent=1 // loop_header
      %s18 = sphi 0, %s22
      %p19 = scmp.ge.s32.totalorder %s18, 4
      %s28 = sphi 0, %s30
      %s31 = sphi 0, %s28
      %s32 = sphi 0, %s31
      %s48 = sphi 0, %s32
      %s52 = sphi 0, %s52
      %s54 = sphi 0, %s52
      %s55 = sphi 0, %s54
      %s69 = sphi 0, %s55
      %s73 = sphi 0, %s73
      %s75 = sphi 0, %s73
      %s76 = sphi 0, %s75
      %s90 = sphi 0, %s76
      %s94 = sphi 0, %s94
      %s96 = sphi 0, %s94
      %s97 = sphi 0, %s96
      %s111 = sphi 0, %s97
      %s115 = sphi 0, %s115
      %s117 = sphi 0, %s115
      %s118 = sphi 0, %s117
      %s132 = sphi 0, %s118
      %s136 = sphi 0, %s136
      %s138 = sphi 0, %s136
      %s139 = sphi 0, %s138
      %s153 = sphi 0, %s139
      %s157 = sphi 0, %s157
      %s159 = sphi 0, %s157
      %s160 = sphi 0, %s159
      %s174 = sphi 0, %s160
      %s178 = sphi 0, %s178
      %s180 = sphi 0, %s178
      %s181 = sphi 0, %s180
      %s195 = sphi 0, %s181
      %s199 = sphi 0, %s199
      %s201 = sphi 0, %s199
      %s202 = sphi 0, %s201
      %s216 = sphi 0, %s202
      %s222 = sphi 0, %s224
      %s225 = sphi 0, %s222
      %s226 = sphi 0, %s225
      %s242 = sphi 0, %s226
    $region4: #{simple_cnn_forward.3} parent=1 // loop_header_branch
      %21 = sbr.rel (%p19) target = $region8
    $region5: #{simple_cnn_forward.3} parent=1 // loop_body
      %s23 = ssub.s32 %s18, 1
      %s24 = ssub.s32 %s18, 2
      %s25 = sadd.s32 %s18, 1
      %s26 = ssub.s32 %s18, %s25
      %p27 = scmp.eq.s32.totalorder %s26, 0
      %s29 = sadd.s32 %s28, 1
      %s30 = scalar_select %p27, %s28, %s29
      %p33 = pneg %p27
      %p34 = scmp.eq.s32.totalorder %s18, 1
      %p35 = por %p33, %p34
      %p36 = scmp.ne.s32.totalorder %s28, %s31
      %p37 = scmp.eq.s32.totalorder %s18, 0
      %p38 = por %p36, %p37
      %p39 = scmp.ne.s32.totalorder %s28, %s31
      %p40 = scmp.eq.s32.totalorder %s23, 1
      %p41 = por %p39, %p40
      %p42 = scmp.ne.s32.totalorder %s31, %s32
      %p43 = scmp.eq.s32.totalorder %s23, 0
      %p44 = por %p42, %p43
      %p45 = scmp.ne.s32.totalorder %s31, %s32
      %p46 = scmp.eq.s32.totalorder %s24, 1
      %p47 = por %p45, %p46
      %p49 = scmp.ne.s32.totalorder %s32, %s48
      %p50 = scmp.eq.s32.totalorder %s24, 0
      %p51 = por %p49, %p50
      %s53 = sadd.s32 %s52, 1
      %p56 = scmp.eq.s32.totalorder %s18, 1
      %p57 = scmp.ne.s32.totalorder %s52, %s54
      %p58 = scmp.eq.s32.totalorder %s18, 0
      %p59 = por %p57, %p58
      %p60 = scmp.ne.s32.totalorder %s52, %s54
      %p61 = scmp.eq.s32.totalorder %s23, 1
      %p62 = por %p60, %p61
      %p63 = scmp.ne.s32.totalorder %s54, %s55
      %p64 = scmp.eq.s32.totalorder %s23, 0
      %p65 = por %p63, %p64
      %p66 = scmp.ne.s32.totalorder %s54, %s55
      %p67 = scmp.eq.s32.totalorder %s24, 1
      %p68 = por %p66, %p67
      %p70 = scmp.ne.s32.totalorder %s55, %s69
      %p71 = scmp.eq.s32.totalorder %s24, 0
      %p72 = por %p70, %p71
      %s74 = sadd.s32 %s73, 1
      %p77 = scmp.eq.s32.totalorder %s18, 1
      %p78 = scmp.ne.s32.totalorder %s73, %s75
      %p79 = scmp.eq.s32.totalorder %s18, 0
      %p80 = por %p78, %p79
      %p81 = scmp.ne.s32.totalorder %s73, %s75
      %p82 = scmp.eq.s32.totalorder %s23, 1
      %p83 = por %p81, %p82
      %p84 = scmp.ne.s32.totalorder %s75, %s76
      %p85 = scmp.eq.s32.totalorder %s23, 0
      %p86 = por %p84, %p85
      %p87 = scmp.ne.s32.totalorder %s75, %s76
      %p88 = scmp.eq.s32.totalorder %s24, 1
      %p89 = por %p87, %p88
      %p91 = scmp.ne.s32.totalorder %s76, %s90
      %p92 = scmp.eq.s32.totalorder %s24, 0
      %p93 = por %p91, %p92
      %s95 = sadd.s32 %s94, 1
      %p98 = scmp.eq.s32.totalorder %s18, 1
      %p99 = scmp.ne.s32.totalorder %s94, %s96
      %p100 = scmp.eq.s32.totalorder %s18, 0
      %p101 = por %p99, %p100
      %p102 = scmp.ne.s32.totalorder %s94, %s96
      %p103 = scmp.eq.s32.totalorder %s23, 1
      %p104 = por %p102, %p103
      %p105 = scmp.ne.s32.totalorder %s96, %s97
      %p106 = scmp.eq.s32.totalorder %s23, 0
      %p107 = por %p105, %p106
      %p108 = scmp.ne.s32.totalorder %s96, %s97
      %p109 = scmp.eq.s32.totalorder %s24, 1
      %p110 = por %p108, %p109
      %p112 = scmp.ne.s32.totalorder %s97, %s111
      %p113 = scmp.eq.s32.totalorder %s24, 0
      %p114 = por %p112, %p113
      %s116 = sadd.s32 %s115, 1
      %p119 = scmp.eq.s32.totalorder %s18, 1
      %p120 = scmp.ne.s32.totalorder %s115, %s117
      %p121 = scmp.eq.s32.totalorder %s18, 0
      %p122 = por %p120, %p121
      %p123 = scmp.ne.s32.totalorder %s115, %s117
      %p124 = scmp.eq.s32.totalorder %s23, 1
      %p125 = por %p123, %p124
      %p126 = scmp.ne.s32.totalorder %s117, %s118
      %p127 = scmp.eq.s32.totalorder %s23, 0
      %p128 = por %p126, %p127
      %p129 = scmp.ne.s32.totalorder %s117, %s118
      %p130 = scmp.eq.s32.totalorder %s24, 1
      %p131 = por %p129, %p130
      %p133 = scmp.ne.s32.totalorder %s118, %s132
      %p134 = scmp.eq.s32.totalorder %s24, 0
      %p135 = por %p133, %p134
      %s137 = sadd.s32 %s136, 1
      %p140 = scmp.eq.s32.totalorder %s18, 1
      %p141 = scmp.ne.s32.totalorder %s136, %s138
      %p142 = scmp.eq.s32.totalorder %s18, 0
      %p143 = por %p141, %p142
      %p144 = scmp.ne.s32.totalorder %s136, %s138
      %p145 = scmp.eq.s32.totalorder %s23, 1
      %p146 = por %p144, %p145
      %p147 = scmp.ne.s32.totalorder %s138, %s139
      %p148 = scmp.eq.s32.totalorder %s23, 0
      %p149 = por %p147, %p148
      %p150 = scmp.ne.s32.totalorder %s138, %s139
      %p151 = scmp.eq.s32.totalorder %s24, 1
      %p152 = por %p150, %p151
      %p154 = scmp.ne.s32.totalorder %s139, %s153
      %p155 = scmp.eq.s32.totalorder %s24, 0
      %p156 = por %p154, %p155
      %s158 = sadd.s32 %s157, 1
      %p161 = scmp.eq.s32.totalorder %s18, 1
      %p162 = scmp.ne.s32.totalorder %s157, %s159
      %p163 = scmp.eq.s32.totalorder %s18, 0
      %p164 = por %p162, %p163
      %p165 = scmp.ne.s32.totalorder %s157, %s159
      %p166 = scmp.eq.s32.totalorder %s23, 1
      %p167 = por %p165, %p166
      %p168 = scmp.ne.s32.totalorder %s159, %s160
      %p169 = scmp.eq.s32.totalorder %s23, 0
      %p170 = por %p168, %p169
      %p171 = scmp.ne.s32.totalorder %s159, %s160
      %p172 = scmp.eq.s32.totalorder %s24, 1
      %p173 = por %p171, %p172
      %p175 = scmp.ne.s32.totalorder %s160, %s174
      %p176 = scmp.eq.s32.totalorder %s24, 0
      %p177 = por %p175, %p176
      %s179 = sadd.s32 %s178, 1
      %p182 = scmp.eq.s32.totalorder %s18, 1
      %p183 = scmp.ne.s32.totalorder %s178, %s180
      %p184 = scmp.eq.s32.totalorder %s18, 0
      %p185 = por %p183, %p184
      %p186 = scmp.ne.s32.totalorder %s178, %s180
      %p187 = scmp.eq.s32.totalorder %s23, 1
      %p188 = por %p186, %p187
      %p189 = scmp.ne.s32.totalorder %s180, %s181
      %p190 = scmp.eq.s32.totalorder %s23, 0
      %p191 = por %p189, %p190
      %p192 = scmp.ne.s32.totalorder %s180, %s181
      %p193 = scmp.eq.s32.totalorder %s24, 1
      %p194 = por %p192, %p193
      %p196 = scmp.ne.s32.totalorder %s181, %s195
      %p197 = scmp.eq.s32.totalorder %s24, 0
      %p198 = por %p196, %p197
      %s200 = sadd.s32 %s199, 1
      %p203 = scmp.eq.s32.totalorder %s18, 1
      %p204 = scmp.ne.s32.totalorder %s199, %s201
      %p205 = scmp.eq.s32.totalorder %s18, 0
      %p206 = por %p204, %p205
      %p207 = scmp.ne.s32.totalorder %s199, %s201
      %p208 = scmp.eq.s32.totalorder %s23, 1
      %p209 = por %p207, %p208
      %p210 = scmp.ne.s32.totalorder %s201, %s202
      %p211 = scmp.eq.s32.totalorder %s23, 0
      %p212 = por %p210, %p211
      %p213 = scmp.ne.s32.totalorder %s201, %s202
      %p214 = scmp.eq.s32.totalorder %s24, 1
      %p215 = por %p213, %p214
      %p217 = scmp.ne.s32.totalorder %s202, %s216
      %p218 = scmp.eq.s32.totalorder %s24, 0
      %p219 = por %p217, %p218
      %s220 = ssub.s32 %s18, %s25
      %p221 = scmp.eq.s32.totalorder %s220, 0
      %s223 = sadd.s32 %s222, 1
      %s224 = scalar_select %p221, %s222, %s223
      %p227 = pneg %p221
      %p228 = scmp.eq.s32.totalorder %s18, 1
      %p229 = por %p227, %p228
      %p230 = scmp.ne.s32.totalorder %s222, %s225
      %p231 = scmp.eq.s32.totalorder %s18, 0
      %p232 = por %p230, %p231
      %p233 = scmp.ne.s32.totalorder %s222, %s225
      %p234 = scmp.eq.s32.totalorder %s23, 1
      %p235 = por %p233, %p234
      %p236 = scmp.ne.s32.totalorder %s225, %s226
      %p237 = scmp.eq.s32.totalorder %s23, 0
      %p238 = por %p236, %p237
      %p239 = scmp.ne.s32.totalorder %s225, %s226
      %p240 = scmp.eq.s32.totalorder %s24, 1
      %p241 = por %p239, %p240
      %p243 = scmp.ne.s32.totalorder %s226, %s242
      %p244 = scmp.eq.s32.totalorder %s24, 0
      %p245 = por %p243, %p244
      %p246 = scmp.le.s32.totalorder 1, %s18
      %p247 = scmp.lt.s32.totalorder %s18, 3
      %p248 = pnand %p246, %p247
      %p249 = pneg %p248
      // Predicated region
      $region9: #{simple_cnn_forward.3} parent=5 // pred_check
        _
      $region10: #{simple_cnn_forward.3} parent=5 // pred_check_branch
        %251 = sbr.rel (%p248) target = $region12
      $region11: #{simple_cnn_forward.3} parent=5 // pred_region
        %s252 = ssub.s32 %s18, 1
        // Predicated region
        $region13: #{simple_cnn_forward.3} parent=11 // pred_check
          %p253 = pneg %p65
        $region14: #{simple_cnn_forward.3} parent=11 // pred_check_branch
          %255 = sbr.rel (%p253) target = $region16
        $region15: #{simple_cnn_forward.3} parent=11 // pred_region
          _
        $region16: #{simple_cnn_forward.3} parent=11 // pred_fallthru
          _
        // Predicated region
        $region17: #{simple_cnn_forward.3} parent=11 // pred_check
          %p256 = pneg %p86
        $region18: #{simple_cnn_forward.3} parent=11 // pred_check_branch
          %258 = sbr.rel (%p256) target = $region20
        $region19: #{simple_cnn_forward.3} parent=11 // pred_region
          _
        $region20: #{simple_cnn_forward.3} parent=11 // pred_fallthru
          _
        // Predicated region
        $region21: #{simple_cnn_forward.3} parent=11 // pred_check
          %p259 = pneg %p107
        $region22: #{simple_cnn_forward.3} parent=11 // pred_check_branch
          %261 = sbr.rel (%p259) target = $region24
        $region23: #{simple_cnn_forward.3} parent=11 // pred_region
          _
        $region24: #{simple_cnn_forward.3} parent=11 // pred_fallthru
          _
        // Predicated region
        $region25: #{simple_cnn_forward.3} parent=11 // pred_check
          %p262 = pneg %p128
        $region26: #{simple_cnn_forward.3} parent=11 // pred_check_branch
          %264 = sbr.rel (%p262) target = $region28
        $region27: #{simple_cnn_forward.3} parent=11 // pred_region
          _
        $region28: #{simple_cnn_forward.3} parent=11 // pred_fallthru
          _
        // Predicated region
        $region29: #{simple_cnn_forward.3} parent=11 // pred_check
          %p265 = pneg %p149
        $region30: #{simple_cnn_forward.3} parent=11 // pred_check_branch
          %267 = sbr.rel (%p265) target = $region32
        $region31: #{simple_cnn_forward.3} parent=11 // pred_region
          _
        $region32: #{simple_cnn_forward.3} parent=11 // pred_fallthru
          _
        // Predicated region
        $region33: #{simple_cnn_forward.3} parent=11 // pred_check
          %p268 = pneg %p170
        $region34: #{simple_cnn_forward.3} parent=11 // pred_check_branch
          %270 = sbr.rel (%p268) target = $region36
        $region35: #{simple_cnn_forward.3} parent=11 // pred_region
          _
        $region36: #{simple_cnn_forward.3} parent=11 // pred_fallthru
          _
        // Predicated region
        $region37: #{simple_cnn_forward.3} parent=11 // pred_check
          %p271 = pneg %p191
        $region38: #{simple_cnn_forward.3} parent=11 // pred_check_branch
          %273 = sbr.rel (%p271) target = $region40
        $region39: #{simple_cnn_forward.3} parent=11 // pred_region
          _
        $region40: #{simple_cnn_forward.3} parent=11 // pred_fallthru
          _
        // Predicated region
        $region41: #{simple_cnn_forward.3} parent=11 // pred_check
          %p274 = pneg %p212
        $region42: #{simple_cnn_forward.3} parent=11 // pred_check_branch
          %276 = sbr.rel (%p274) target = $region44
        $region43: #{simple_cnn_forward.3} parent=11 // pred_region
          _
        $region44: #{simple_cnn_forward.3} parent=11 // pred_fallthru
          _
      $region12: #{simple_cnn_forward.3} parent=5 // pred_fallthru
        _
      %p277 = scmp.lt.s32.totalorder %s18, 2
      // Predicated region
      $region45: #{simple_cnn_forward.3} parent=5 // pred_check
        %p278 = pneg %p277
      $region46: #{simple_cnn_forward.3} parent=5 // pred_check_branch
        %280 = sbr.rel (%p278) target = $region48
      $region47: #{simple_cnn_forward.3} parent=5 // pred_region
        // Predicated region
        $region49: #{simple_cnn_forward.3} parent=47 // pred_check
          %p281 = pneg %p38
        $region50: #{simple_cnn_forward.3} parent=47 // pred_check_branch
          %283 = sbr.rel (%p281) target = $region52
        $region51: #{simple_cnn_forward.3} parent=47 // pred_region
          %p284 = scmp.lt.s32.totalorder %s18, 1
          %s285 = scalar_select %p284, %s18, 1
          %s286 = smul.addr %s285, 152
          %s287 = smul.addr %s286, 8
          %s288 = scalar_lea.vmem %s0, %s287
        $region52: #{simple_cnn_forward.3} parent=47 // pred_fallthru
          _
      $region48: #{simple_cnn_forward.3} parent=5 // pred_fallthru
        _
      %p289 = scmp.le.s32.totalorder 1, %s18
      %p290 = scmp.lt.s32.totalorder %s18, 3
      %p291 = pnand %p289, %p290
      %p292 = pneg %p291
      // Predicated region
      $region53: #{simple_cnn_forward.3} parent=5 // pred_check
        _
      $region54: #{simple_cnn_forward.3} parent=5 // pred_check_branch
        %294 = sbr.rel (%p291) target = $region56
      $region55: #{simple_cnn_forward.3} parent=5 // pred_region
        %s295 = ssub.s32 %s18, 1
        %p296 = scmp.lt.s32.totalorder %s23, 1
        %s297 = scalar_select %p296, %s23, 1
        %s298 = smul.addr %s297, 152
        %s299 = smul.addr %s298, 8
        %s300 = scalar_lea.vmem %s0, %s299
        %p301 = pneg %p44
        %p302 = pneg %p41
        %p303 = pneg %p65
        %p304 = pneg %p62
        %p305 = pneg %p86
        %p306 = pneg %p83
        %p307 = pneg %p107
        %p308 = pneg %p104
        %p309 = pneg %p128
        %p310 = pneg %p125
        %p311 = pneg %p149
        %p312 = pneg %p146
        %p313 = pneg %p170
        %p314 = pneg %p167
        %p315 = pneg %p191
        %p316 = pneg %p188
        %p317 = pneg %p212
        %p318 = pneg %p209
        %p319 = pneg %p238
        %p320 = pneg %p235
        %s321 = sand.u32 %s225, 1
        %s322 = scalar_lea.sflag [#allocation4], %s321
        %s323 = sand.u32 %s225, 1
        %s324 = scalar_lea.vmem [#allocation3], %s323
        %p325 = scmp.lt.s32.totalorder %s23, 1
        %s326 = scalar_select %p325, %s23, 1
        %s327 = smul.addr %s326, 152
        %s328 = smul.addr %s327, 8
        %s329 = scalar_lea.vmem %s0, %s328
        %v330 = vld [vmem:[%s1] sm:$0xff]
        %v331 = vld [vmem:[%s1 + $0x8] sm:$0xff]
        %v332 = vld [vmem:[%s1 + $0x10] sm:$0xff]
        %v333 = vld [vmem:[%s1 + $0x18] sm:$0xff]
        %v334 = vld [vmem:[%s329] sm:$0xff]
        %v335 = vld [vmem:[%s329 + $0x8] sm:$0xff]
        %v336 = vld [vmem:[%s329 + $0x10] sm:$0xff]
        %v337 = vld [vmem:[%s329 + $0x18] sm:$0xff]
        %v338 = vld [vmem:[%s329 + $0x20] sm:$0xff]
        %v339 = vld [vmem:[%s329 + $0x28] sm:$0xff]
        %v340 = vld [vmem:[%s329 + $0x30] sm:$0xff]
        %v341 = vld [vmem:[%s329 + $0x38] sm:$0xff]
        %v342 = vld [vmem:[%s329 + $0x40] sm:$0xff]
        %v343 = vld [vmem:[%s329 + $0x48] sm:$0xff]
        %v344 = vld [vmem:[%s329 + $0x50] sm:$0xff]
        %v345 = vld [vmem:[%s329 + $0x58] sm:$0xff]
        %v346 = vld [vmem:[%s329 + $0x60] sm:$0xff]
        %v347 = vld [vmem:[%s329 + $0x68] sm:$0xff]
        %v348 = vld [vmem:[%s329 + $0x70] sm:$0xff]
        %v349 = vld [vmem:[%s329 + $0x78] sm:$0xff]
        %v350 = vld [vmem:[%s329 + $0x80] sm:$0xff]
        %v351 = vld [vmem:[%s329 + $0x88] sm:$0xff]
        %v352 = vld [vmem:[%s329 + $0x90] sm:$0xff]
        %v353 = vld [vmem:[%s329 + $0x98] sm:$0xff]
        %v354 = vld [vmem:[%s329 + $0xa0] sm:$0xff]
        %v355 = vld [vmem:[%s329 + $0xa8] sm:$0xff]
        %v356 = vld [vmem:[%s329 + $0xb0] sm:$0xff]
        %v357 = vld [vmem:[%s329 + $0xb8] sm:$0xff]
        %v358 = vld [vmem:[%s329 + $0xc0] sm:$0xff]
        %v359 = vld [vmem:[%s329 + $0xc8] sm:$0xff]
        %v360 = vld [vmem:[%s329 + $0xd0] sm:$0xff]
        %v361 = vld [vmem:[%s329 + $0xd8] sm:$0xff]
        %v362 = vld [vmem:[%s329 + $0xe0] sm:$0xff]
        %v363 = vld [vmem:[%s329 + $0xe8] sm:$0xff]
        %v364 = vld [vmem:[%s329 + $0xf0] sm:$0xff]
        %v365 = vld [vmem:[%s329 + $0xf8] sm:$0xff]
        %v366 = vld [vmem:[%s329 + $0x100] sm:$0xff]
        %v367 = vld [vmem:[%s329 + $0x108] sm:$0xff]
        %v368 = vld [vmem:[%s329 + $0x110] sm:$0xff]
        %v369 = vld [vmem:[%s329 + $0x118] sm:$0xff]
        %v370 = vld [vmem:[%s329 + $0x120] sm:$0x3f]
        %v371 = vld [vmem:[%s329 + $0x128] sm:$0x3f]
        %vm372 = vcmask 179200
        %v374 = vsel %vm372, %v331, 0
        %v377 = vsel %vm372, %v333, 0
        %vm379 = vcmask 1045504
        %v381 = vsel %vm379, %v370, 0
        %v384 = vsel %vm379, %v371, 0
        %386 = vmatprep.subr.mxu0 %v365
        %387 = vmatpush1.msra.mxu0 %v364
        %388 = vmatprep.subr.mxu0 %v363
        %389 = vmatpush1.msra.mxu0 %v362
        %390 = vmatprep.subr.mxu0 %v361
        %391 = vmatpush1.msra.mxu0 %v360
        %392 = vmatprep.subr.mxu0 %v359
        %393 = vmatpush1.msra.mxu0 %v358
        %394 = vmatprep.subr.mxu0 %v357
        %395 = vmatpush1.msra.mxu0 %v356
        %396 = vmatprep.subr.mxu0 %v355
        %397 = vmatpush1.msra.mxu0 %v354
        %398 = vmatprep.subr.mxu0 %v353
        %399 = vmatpush1.msra.mxu0 %v352
        %400 = vmatprep.subr.mxu0 %v351
        %401 = vmatpush1.msra.mxu0 %v350
        %402 = vmatprep.subr.mxu0 %v349
        %403 = vmatpush1.msra.mxu0 %v348
        %404 = vmatprep.subr.mxu0 %v347
        %405 = vmatpush1.msra.mxu0 %v346
        %406 = vmatprep.subr.mxu0 %v345
        %407 = vmatpush1.msra.mxu0 %v344
        %408 = vmatprep.subr.mxu0 %v343
        %409 = vmatpush1.msra.mxu0 %v342
        %410 = vmatprep.subr.mxu0 %v341
        %411 = vmatpush1.msra.mxu0 %v340
        %412 = vmatprep.subr.mxu0 %v339
        %413 = vmatpush1.msra.mxu0 %v338
        %414 = vmatprep.subr.mxu0 %v337
        %415 = vmatpush1.msra.mxu0 %v336
        %416 = vmatprep.subr.mxu0 %v335
        %417 = vmatpush1.msra.mxu0 %v334
        %418 = vmatprep.subr.mxu0 0.0
        %419 = vmatpush2.msra.mxu0 0.0
        %420 = vmatprep.subr.mxu0 0.0
        %421 = vmatpush2.msra.mxu0 0.0
        %422 = vmatprep.subr.mxu0 0.0
        %423 = vmatpush2.msra.mxu0 0.0
        %424 = vmatprep.subr.mxu0 0.0
        %425 = vmatpush2.msra.mxu0 0.0
        %426 = vmatprep.subr.mxu0 0.0
        %427 = vmatpush2.msra.mxu0 0.0
        %428 = vmatprep.subr.mxu0 0.0
        %429 = vmatpush2.msra.mxu0 0.0
        %430 = vmatprep.subr.mxu0 0.0
        %431 = vmatpush2.msra.mxu0 0.0
        %432 = vmatprep.subr.mxu0 0.0
        %433 = vmatpush2.msra.mxu0 0.0
        %434 = vmatprep.subr.mxu0 0.0
        %435 = vmatpush2.msra.mxu0 0.0
        %436 = vmatprep.subr.mxu0 0.0
        %437 = vmatpush2.msra.mxu0 0.0
        %438 = vmatprep.subr.mxu0 0.0
        %439 = vmatpush2.msra.mxu0 0.0
        %440 = vmatprep.subr.mxu0 0.0
        %441 = vmatpush2.msra.mxu0 0.0
        %442 = vmatprep.subr.mxu0 0.0
        %443 = vmatpush2.msra.mxu0 0.0
        %444 = vmatprep.subr.mxu0 %v384
        %445 = vmatpush2.msra.mxu0 %v381
        %446 = vmatprep.subr.mxu0 %v369
        %447 = vmatpush2.msra.mxu0 %v368
        %448 = vmatprep.subr.mxu0 %v367
        %449 = vmatpush2.msra.mxu0 %v366
        %450 = vmatprep.mubr.f32.mxu0 %v374
        %451 = vmatmul.mubr.f32.gmra.mxu0 %v330
        %v452 = vpop.f32.mrf.mxu0
        %v453 = vadd.f32 0.0, %v452
        %v454 = vpop.f32.mrf.mxu0
        %v455 = vadd.f32 0.0, %v454
        %456 = vmatprep.mubr.f32.mxu0 %v377
        %457 = vmatmul.mubr.f32.gmra.mxu0 %v332
        %v458 = vpop.f32.mrf.mxu0
        %v459 = vadd.f32 0.0, %v458
        %v460 = vpop.f32.mrf.mxu0
        %v461 = vadd.f32 0.0, %v460
        %462 = vdwg.mxu0
        %s463 = scalar_lea.vmem %s329, 304
        %v464 = vld [vmem:[%s463] sm:$0xff]
        %v465 = vld [vmem:[%s463 + $0x8] sm:$0xff]
        %v466 = vld [vmem:[%s463 + $0x10] sm:$0xff]
        %v467 = vld [vmem:[%s463 + $0x18] sm:$0xff]
        %v468 = vld [vmem:[%s463 + $0x20] sm:$0xff]
        %v469 = vld [vmem:[%s463 + $0x28] sm:$0xff]
        %v470 = vld [vmem:[%s463 + $0x30] sm:$0xff]
        %v471 = vld [vmem:[%s463 + $0x38] sm:$0xff]
        %v472 = vld [vmem:[%s463 + $0x40] sm:$0xff]
        %v473 = vld [vmem:[%s463 + $0x48] sm:$0xff]
        %v474 = vld [vmem:[%s463 + $0x50] sm:$0xff]
        %v475 = vld [vmem:[%s463 + $0x58] sm:$0xff]
        %v476 = vld [vmem:[%s463 + $0x60] sm:$0xff]
        %v477 = vld [vmem:[%s463 + $0x68] sm:$0xff]
        %v478 = vld [vmem:[%s463 + $0x70] sm:$0xff]
        %v479 = vld [vmem:[%s463 + $0x78] sm:$0xff]
        %v480 = vld [vmem:[%s463 + $0x80] sm:$0xff]
        %v481 = vld [vmem:[%s463 + $0x88] sm:$0xff]
        %v482 = vld [vmem:[%s463 + $0x90] sm:$0xff]
        %v483 = vld [vmem:[%s463 + $0x98] sm:$0xff]
        %v484 = vld [vmem:[%s463 + $0xa0] sm:$0xff]
        %v485 = vld [vmem:[%s463 + $0xa8] sm:$0xff]
        %v486 = vld [vmem:[%s463 + $0xb0] sm:$0xff]
        %v487 = vld [vmem:[%s463 + $0xb8] sm:$0xff]
        %v488 = vld [vmem:[%s463 + $0xc0] sm:$0xff]
        %v489 = vld [vmem:[%s463 + $0xc8] sm:$0xff]
        %v490 = vld [vmem:[%s463 + $0xd0] sm:$0xff]
        %v491 = vld [vmem:[%s463 + $0xd8] sm:$0xff]
        %v492 = vld [vmem:[%s463 + $0xe0] sm:$0xff]
        %v493 = vld [vmem:[%s463 + $0xe8] sm:$0xff]
        %v494 = vld [vmem:[%s463 + $0xf0] sm:$0xff]
        %v495 = vld [vmem:[%s463 + $0xf8] sm:$0xff]
        %v496 = vld [vmem:[%s463 + $0x100] sm:$0xff]
        %v497 = vld [vmem:[%s463 + $0x108] sm:$0xff]
        %v498 = vld [vmem:[%s463 + $0x110] sm:$0xff]
        %v499 = vld [vmem:[%s463 + $0x118] sm:$0xff]
        %v500 = vld [vmem:[%s463 + $0x120] sm:$0x3f]
        %v501 = vld [vmem:[%s463 + $0x128] sm:$0x3f]
        %v503 = vsel %vm379, %v500, 0
        %v506 = vsel %vm379, %v501, 0
        %508 = vmatprep.subr.mxu0 %v495
        %509 = vmatpush1.msra.mxu0 %v494
        %510 = vmatprep.subr.mxu0 %v493
        %511 = vmatpush1.msra.mxu0 %v492
        %512 = vmatprep.subr.mxu0 %v491
        %513 = vmatpush1.msra.mxu0 %v490
        %514 = vmatprep.subr.mxu0 %v489
        %515 = vmatpush1.msra.mxu0 %v488
        %516 = vmatprep.subr.mxu0 %v487
        %517 = vmatpush1.msra.mxu0 %v486
        %518 = vmatprep.subr.mxu0 %v485
        %519 = vmatpush1.msra.mxu0 %v484
        %520 = vmatprep.subr.mxu0 %v483
        %521 = vmatpush1.msra.mxu0 %v482
        %522 = vmatprep.subr.mxu0 %v481
        %523 = vmatpush1.msra.mxu0 %v480
        %524 = vmatprep.subr.mxu0 %v479
        %525 = vmatpush1.msra.mxu0 %v478
        %526 = vmatprep.subr.mxu0 %v477
        %527 = vmatpush1.msra.mxu0 %v476
        %528 = vmatprep.subr.mxu0 %v475
        %529 = vmatpush1.msra.mxu0 %v474
        %530 = vmatprep.subr.mxu0 %v473
        %531 = vmatpush1.msra.mxu0 %v472
        %532 = vmatprep.subr.mxu0 %v471
        %533 = vmatpush1.msra.mxu0 %v470
        %534 = vmatprep.subr.mxu0 %v469
        %535 = vmatpush1.msra.mxu0 %v468
        %536 = vmatprep.subr.mxu0 %v467
        %537 = vmatpush1.msra.mxu0 %v466
        %538 = vmatprep.subr.mxu0 %v465
        %539 = vmatpush1.msra.mxu0 %v464
        %540 = vmatprep.subr.mxu0 0.0
        %541 = vmatpush2.msra.mxu0 0.0
        %542 = vmatprep.subr.mxu0 0.0
        %543 = vmatpush2.msra.mxu0 0.0
        %544 = vmatprep.subr.mxu0 0.0
        %545 = vmatpush2.msra.mxu0 0.0
        %546 = vmatprep.subr.mxu0 0.0
        %547 = vmatpush2.msra.mxu0 0.0
        %548 = vmatprep.subr.mxu0 0.0
        %549 = vmatpush2.msra.mxu0 0.0
        %550 = vmatprep.subr.mxu0 0.0
        %551 = vmatpush2.msra.mxu0 0.0
        %552 = vmatprep.subr.mxu0 0.0
        %553 = vmatpush2.msra.mxu0 0.0
        %554 = vmatprep.subr.mxu0 0.0
        %555 = vmatpush2.msra.mxu0 0.0
        %556 = vmatprep.subr.mxu0 0.0
        %557 = vmatpush2.msra.mxu0 0.0
        %558 = vmatprep.subr.mxu0 0.0
        %559 = vmatpush2.msra.mxu0 0.0
        %560 = vmatprep.subr.mxu0 0.0
        %561 = vmatpush2.msra.mxu0 0.0
        %562 = vmatprep.subr.mxu0 0.0
        %563 = vmatpush2.msra.mxu0 0.0
        %564 = vmatprep.subr.mxu0 0.0
        %565 = vmatpush2.msra.mxu0 0.0
        %566 = vmatprep.subr.mxu0 %v506
        %567 = vmatpush2.msra.mxu0 %v503
        %568 = vmatprep.subr.mxu0 %v499
        %569 = vmatpush2.msra.mxu0 %v498
        %570 = vmatprep.subr.mxu0 %v497
        %571 = vmatpush2.msra.mxu0 %v496
        %572 = vmatprep.mubr.f32.mxu0 %v374
        %573 = vmatmul.mubr.f32.gmra.mxu0 %v330
        %v574 = vpop.f32.mrf.mxu0
        %v575 = vadd.f32 0.0, %v574
        %v576 = vpop.f32.mrf.mxu0
        %v577 = vadd.f32 0.0, %v576
        %578 = vmatprep.mubr.f32.mxu0 %v377
        %579 = vmatmul.mubr.f32.gmra.mxu0 %v332
        %v580 = vpop.f32.mrf.mxu0
        %v581 = vadd.f32 0.0, %v580
        %v582 = vpop.f32.mrf.mxu0
        %v583 = vadd.f32 0.0, %v582
        %584 = vdwg.mxu0
        %v585 = vmax.f32 %v453, %v575
        %v586 = vmax.f32 %v455, %v577
        %v587 = vmax.f32 %v459, %v581
        %v588 = vmax.f32 %v461, %v583
        %s589 = scalar_lea.vmem %s329, 608
        %v590 = vld [vmem:[%s589] sm:$0xff]
        %v591 = vld [vmem:[%s589 + $0x8] sm:$0xff]
        %v592 = vld [vmem:[%s589 + $0x10] sm:$0xff]
        %v593 = vld [vmem:[%s589 + $0x18] sm:$0xff]
        %v594 = vld [vmem:[%s589 + $0x20] sm:$0xff]
        %v595 = vld [vmem:[%s589 + $0x28] sm:$0xff]
        %v596 = vld [vmem:[%s589 + $0x30] sm:$0xff]
        %v597 = vld [vmem:[%s589 + $0x38] sm:$0xff]
        %v598 = vld [vmem:[%s589 + $0x40] sm:$0xff]
        %v599 = vld [vmem:[%s589 + $0x48] sm:$0xff]
        %v600 = vld [vmem:[%s589 + $0x50] sm:$0xff]
        %v601 = vld [vmem:[%s589 + $0x58] sm:$0xff]
        %v602 = vld [vmem:[%s589 + $0x60] sm:$0xff]
        %v603 = vld [vmem:[%s589 + $0x68] sm:$0xff]
        %v604 = vld [vmem:[%s589 + $0x70] sm:$0xff]
        %v605 = vld [vmem:[%s589 + $0x78] sm:$0xff]
        %v606 = vld [vmem:[%s589 + $0x80] sm:$0xff]
        %v607 = vld [vmem:[%s589 + $0x88] sm:$0xff]
        %v608 = vld [vmem:[%s589 + $0x90] sm:$0xff]
        %v609 = vld [vmem:[%s589 + $0x98] sm:$0xff]
        %v610 = vld [vmem:[%s589 + $0xa0] sm:$0xff]
        %v611 = vld [vmem:[%s589 + $0xa8] sm:$0xff]
        %v612 = vld [vmem:[%s589 + $0xb0] sm:$0xff]
        %v613 = vld [vmem:[%s589 + $0xb8] sm:$0xff]
        %v614 = vld [vmem:[%s589 + $0xc0] sm:$0xff]
        %v615 = vld [vmem:[%s589 + $0xc8] sm:$0xff]
        %v616 = vld [vmem:[%s589 + $0xd0] sm:$0xff]
        %v617 = vld [vmem:[%s589 + $0xd8] sm:$0xff]
        %v618 = vld [vmem:[%s589 + $0xe0] sm:$0xff]
        %v619 = vld [vmem:[%s589 + $0xe8] sm:$0xff]
        %v620 = vld [vmem:[%s589 + $0xf0] sm:$0xff]
        %v621 = vld [vmem:[%s589 + $0xf8] sm:$0xff]
        %v622 = vld [vmem:[%s589 + $0x100] sm:$0xff]
        %v623 = vld [vmem:[%s589 + $0x108] sm:$0xff]
        %v624 = vld [vmem:[%s589 + $0x110] sm:$0xff]
        %v625 = vld [vmem:[%s589 + $0x118] sm:$0xff]
        %v626 = vld [vmem:[%s589 + $0x120] sm:$0x3f]
        %v627 = vld [vmem:[%s589 + $0x128] sm:$0x3f]
        %v629 = vsel %vm379, %v626, 0
        %v632 = vsel %vm379, %v627, 0
        %634 = vmatprep.subr.mxu0 %v621
        %635 = vmatpush1.msra.mxu0 %v620
        %636 = vmatprep.subr.mxu0 %v619
        %637 = vmatpush1.msra.mxu0 %v618
        %638 = vmatprep.subr.mxu0 %v617
        %639 = vmatpush1.msra.mxu0 %v616
        %640 = vmatprep.subr.mxu0 %v615
        %641 = vmatpush1.msra.mxu0 %v614
        %642 = vmatprep.subr.mxu0 %v613
        %643 = vmatpush1.msra.mxu0 %v612
        %644 = vmatprep.subr.mxu0 %v611
        %645 = vmatpush1.msra.mxu0 %v610
        %646 = vmatprep.subr.mxu0 %v609
        %647 = vmatpush1.msra.mxu0 %v608
        %648 = vmatprep.subr.mxu0 %v607
        %649 = vmatpush1.msra.mxu0 %v606
        %650 = vmatprep.subr.mxu0 %v605
        %651 = vmatpush1.msra.mxu0 %v604
        %652 = vmatprep.subr.mxu0 %v603
        %653 = vmatpush1.msra.mxu0 %v602
        %654 = vmatprep.subr.mxu0 %v601
        %655 = vmatpush1.msra.mxu0 %v600
        %656 = vmatprep.subr.mxu0 %v599
        %657 = vmatpush1.msra.mxu0 %v598
        %658 = vmatprep.subr.mxu0 %v597
        %659 = vmatpush1.msra.mxu0 %v596
        %660 = vmatprep.subr.mxu0 %v595
        %661 = vmatpush1.msra.mxu0 %v594
        %662 = vmatprep.subr.mxu0 %v593
        %663 = vmatpush1.msra.mxu0 %v592
        %664 = vmatprep.subr.mxu0 %v591
        %665 = vmatpush1.msra.mxu0 %v590
        %666 = vmatprep.subr.mxu0 0.0
        %667 = vmatpush2.msra.mxu0 0.0
        %668 = vmatprep.subr.mxu0 0.0
        %669 = vmatpush2.msra.mxu0 0.0
        %670 = vmatprep.subr.mxu0 0.0
        %671 = vmatpush2.msra.mxu0 0.0
        %672 = vmatprep.subr.mxu0 0.0
        %673 = vmatpush2.msra.mxu0 0.0
        %674 = vmatprep.subr.mxu0 0.0
        %675 = vmatpush2.msra.mxu0 0.0
        %676 = vmatprep.subr.mxu0 0.0
        %677 = vmatpush2.msra.mxu0 0.0
        %678 = vmatprep.subr.mxu0 0.0
        %679 = vmatpush2.msra.mxu0 0.0
        %680 = vmatprep.subr.mxu0 0.0
        %681 = vmatpush2.msra.mxu0 0.0
        %682 = vmatprep.subr.mxu0 0.0
        %683 = vmatpush2.msra.mxu0 0.0
        %684 = vmatprep.subr.mxu0 0.0
        %685 = vmatpush2.msra.mxu0 0.0
        %686 = vmatprep.subr.mxu0 0.0
        %687 = vmatpush2.msra.mxu0 0.0
        %688 = vmatprep.subr.mxu0 0.0
        %689 = vmatpush2.msra.mxu0 0.0
        %690 = vmatprep.subr.mxu0 0.0
        %691 = vmatpush2.msra.mxu0 0.0
        %692 = vmatprep.subr.mxu0 %v632
        %693 = vmatpush2.msra.mxu0 %v629
        %694 = vmatprep.subr.mxu0 %v625
        %695 = vmatpush2.msra.mxu0 %v624
        %696 = vmatprep.subr.mxu0 %v623
        %697 = vmatpush2.msra.mxu0 %v622
        %698 = vmatprep.mubr.f32.mxu0 %v374
        %699 = vmatmul.mubr.f32.gmra.mxu0 %v330
        %v700 = vpop.f32.mrf.mxu0
        %v701 = vadd.f32 0.0, %v700
        %v702 = vpop.f32.mrf.mxu0
        %v703 = vadd.f32 0.0, %v702
        %704 = vmatprep.mubr.f32.mxu0 %v377
        %705 = vmatmul.mubr.f32.gmra.mxu0 %v332
        %v706 = vpop.f32.mrf.mxu0
        %v707 = vadd.f32 0.0, %v706
        %v708 = vpop.f32.mrf.mxu0
        %v709 = vadd.f32 0.0, %v708
        %710 = vdwg.mxu0
        %v711 = vmax.f32 %v585, %v701
        %v712 = vmax.f32 %v586, %v703
        %v713 = vmax.f32 %v587, %v707
        %v714 = vmax.f32 %v588, %v709
        %s715 = scalar_lea.vmem %s329, 912
        %v716 = vld [vmem:[%s715] sm:$0xff]
        %v717 = vld [vmem:[%s715 + $0x8] sm:$0xff]
        %v718 = vld [vmem:[%s715 + $0x10] sm:$0xff]
        %v719 = vld [vmem:[%s715 + $0x18] sm:$0xff]
        %v720 = vld [vmem:[%s715 + $0x20] sm:$0xff]
        %v721 = vld [vmem:[%s715 + $0x28] sm:$0xff]
        %v722 = vld [vmem:[%s715 + $0x30] sm:$0xff]
        %v723 = vld [vmem:[%s715 + $0x38] sm:$0xff]
        %v724 = vld [vmem:[%s715 + $0x40] sm:$0xff]
        %v725 = vld [vmem:[%s715 + $0x48] sm:$0xff]
        %v726 = vld [vmem:[%s715 + $0x50] sm:$0xff]
        %v727 = vld [vmem:[%s715 + $0x58] sm:$0xff]
        %v728 = vld [vmem:[%s715 + $0x60] sm:$0xff]
        %v729 = vld [vmem:[%s715 + $0x68] sm:$0xff]
        %v730 = vld [vmem:[%s715 + $0x70] sm:$0xff]
        %v731 = vld [vmem:[%s715 + $0x78] sm:$0xff]
        %v732 = vld [vmem:[%s715 + $0x80] sm:$0xff]
        %v733 = vld [vmem:[%s715 + $0x88] sm:$0xff]
        %v734 = vld [vmem:[%s715 + $0x90] sm:$0xff]
        %v735 = vld [vmem:[%s715 + $0x98] sm:$0xff]
        %v736 = vld [vmem:[%s715 + $0xa0] sm:$0xff]
        %v737 = vld [vmem:[%s715 + $0xa8] sm:$0xff]
        %v738 = vld [vmem:[%s715 + $0xb0] sm:$0xff]
        %v739 = vld [vmem:[%s715 + $0xb8] sm:$0xff]
        %v740 = vld [vmem:[%s715 + $0xc0] sm:$0xff]
        %v741 = vld [vmem:[%s715 + $0xc8] sm:$0xff]
        %v742 = vld [vmem:[%s715 + $0xd0] sm:$0xff]
        %v743 = vld [vmem:[%s715 + $0xd8] sm:$0xff]
        %v744 = vld [vmem:[%s715 + $0xe0] sm:$0xff]
        %v745 = vld [vmem:[%s715 + $0xe8] sm:$0xff]
        %v746 = vld [vmem:[%s715 + $0xf0] sm:$0xff]
        %v747 = vld [vmem:[%s715 + $0xf8] sm:$0xff]
        %v748 = vld [vmem:[%s715 + $0x100] sm:$0xff]
        %v749 = vld [vmem:[%s715 + $0x108] sm:$0xff]
        %v750 = vld [vmem:[%s715 + $0x110] sm:$0xff]
        %v751 = vld [vmem:[%s715 + $0x118] sm:$0xff]
        %v752 = vld [vmem:[%s715 + $0x120] sm:$0x3f]
        %v753 = vld [vmem:[%s715 + $0x128] sm:$0x3f]
        %v755 = vsel %vm379, %v752, 0
        %v758 = vsel %vm379, %v753, 0
        %760 = vmatprep.subr.mxu0 %v747
        %761 = vmatpush1.msra.mxu0 %v746
        %762 = vmatprep.subr.mxu0 %v745
        %763 = vmatpush1.msra.mxu0 %v744
        %764 = vmatprep.subr.mxu0 %v743
        %765 = vmatpush1.msra.mxu0 %v742
        %766 = vmatprep.subr.mxu0 %v741
        %767 = vmatpush1.msra.mxu0 %v740
        %768 = vmatprep.subr.mxu0 %v739
        %769 = vmatpush1.msra.mxu0 %v738
        %770 = vmatprep.subr.mxu0 %v737
        %771 = vmatpush1.msra.mxu0 %v736
        %772 = vmatprep.subr.mxu0 %v735
        %773 = vmatpush1.msra.mxu0 %v734
        %774 = vmatprep.subr.mxu0 %v733
        %775 = vmatpush1.msra.mxu0 %v732
        %776 = vmatprep.subr.mxu0 %v731
        %777 = vmatpush1.msra.mxu0 %v730
        %778 = vmatprep.subr.mxu0 %v729
        %779 = vmatpush1.msra.mxu0 %v728
        %780 = vmatprep.subr.mxu0 %v727
        %781 = vmatpush1.msra.mxu0 %v726
        %782 = vmatprep.subr.mxu0 %v725
        %783 = vmatpush1.msra.mxu0 %v724
        %784 = vmatprep.subr.mxu0 %v723
        %785 = vmatpush1.msra.mxu0 %v722
        %786 = vmatprep.subr.mxu0 %v721
        %787 = vmatpush1.msra.mxu0 %v720
        %788 = vmatprep.subr.mxu0 %v719
        %789 = vmatpush1.msra.mxu0 %v718
        %790 = vmatprep.subr.mxu0 %v717
        %791 = vmatpush1.msra.mxu0 %v716
        %792 = vmatprep.subr.mxu0 0.0
        %793 = vmatpush2.msra.mxu0 0.0
        %794 = vmatprep.subr.mxu0 0.0
        %795 = vmatpush2.msra.mxu0 0.0
        %796 = vmatprep.subr.mxu0 0.0
        %797 = vmatpush2.msra.mxu0 0.0
        %798 = vmatprep.subr.mxu0 0.0
        %799 = vmatpush2.msra.mxu0 0.0
        %800 = vmatprep.subr.mxu0 0.0
        %801 = vmatpush2.msra.mxu0 0.0
        %802 = vmatprep.subr.mxu0 0.0
        %803 = vmatpush2.msra.mxu0 0.0
        %804 = vmatprep.subr.mxu0 0.0
        %805 = vmatpush2.msra.mxu0 0.0
        %806 = vmatprep.subr.mxu0 0.0
        %807 = vmatpush2.msra.mxu0 0.0
        %808 = vmatprep.subr.mxu0 0.0
        %809 = vmatpush2.msra.mxu0 0.0
        %810 = vmatprep.subr.mxu0 0.0
        %811 = vmatpush2.msra.mxu0 0.0
        %812 = vmatprep.subr.mxu0 0.0
        %813 = vmatpush2.msra.mxu0 0.0
        %814 = vmatprep.subr.mxu0 0.0
        %815 = vmatpush2.msra.mxu0 0.0
        %816 = vmatprep.subr.mxu0 0.0
        %817 = vmatpush2.msra.mxu0 0.0
        %818 = vmatprep.subr.mxu0 %v758
        %819 = vmatpush2.msra.mxu0 %v755
        %820 = vmatprep.subr.mxu0 %v751
        %821 = vmatpush2.msra.mxu0 %v750
        %822 = vmatprep.subr.mxu0 %v749
        %823 = vmatpush2.msra.mxu0 %v748
        %824 = vmatprep.mubr.f32.mxu0 %v374
        %825 = vmatmul.mubr.f32.gmra.mxu0 %v330
        %v826 = vpop.f32.mrf.mxu0
        %v827 = vadd.f32 0.0, %v826
        %v828 = vpop.f32.mrf.mxu0
        %v829 = vadd.f32 0.0, %v828
        %830 = vmatprep.mubr.f32.mxu0 %v377
        %831 = vmatmul.mubr.f32.gmra.mxu0 %v332
        %v832 = vpop.f32.mrf.mxu0
        %v833 = vadd.f32 0.0, %v832
        %v834 = vpop.f32.mrf.mxu0
        %v835 = vadd.f32 0.0, %v834
        %836 = vdwg.mxu0
        %v837 = vmax.f32 %v711, %v827
        %v838 = vmax.f32 %v712, %v829
        %v839 = vmax.f32 %v713, %v833
        %v840 = vmax.f32 %v714, %v835
        %v841 = vld [vmem:[%s2] sm:$0xff]
        %v842 = vld [vmem:[%s2 + $0x8] sm:$0xff]
        %844 = vset.pattern.permute.xlu0 0
        %845 = vperm.xlu0 %844, %v841
        %v846 = vpop.permute.xlu0 %845
        %849 = vset.pattern.permute.xlu0 0
        %850 = vperm.xlu0 %849, %v842
        %v851 = vpop.permute.xlu0 %850
        %v853 = vadd.f32 %v837, %v846
        %v854 = vadd.f32 %v838, %v846
        %v855 = vadd.f32 %v839, %v851
        %v856 = vadd.f32 %v840, %v851
        %v857 = vmax.f32 %v853, 0.0
        %v858 = vmax.f32 %v854, 0.0
        %v859 = vmax.f32 %v855, 0.0
        %v860 = vmax.f32 %v856, 0.0
        %861 = vst [vmem:[#allocation2] sm:$0xff] %v857
        %vm862 = vcmask 334848
        %863 = vst.msk [vmem:[#allocation2 + $0x8] sm:$0xff] %vm862, %v858
        %864 = vst [vmem:[#allocation2 + $0x10] sm:$0xff] %v859
        %865 = vst.msk [vmem:[#allocation2 + $0x18] sm:$0xff] %vm862, %v860
        %v866 = vld [vmem:[%s4] sm:$0x1]
        %v867 = vld [vmem:[#allocation2] ss:$8 sm:$0x3]
        %v868 = vld [vmem:[%s3] sm:$0xff]
        %v869 = vld [vmem:[%s3 + $0x8] sm:$0xff]
        %v870 = vld [vmem:[%s3 + $0x10] sm:$0xff]
        %v871 = vld [vmem:[%s3 + $0x18] sm:$0xff]
        %v872 = vld [vmem:[%s3 + $0x20] sm:$0xff]
        %v873 = vld [vmem:[%s3 + $0x28] sm:$0xff]
        %v874 = vld [vmem:[%s3 + $0x30] sm:$0xff]
        %v875 = vld [vmem:[%s3 + $0x38] sm:$0xff]
        %v876 = vld [vmem:[%s3 + $0x40] sm:$0xff]
        %v877 = vld [vmem:[%s3 + $0x48] sm:$0xff]
        %v878 = vld [vmem:[%s3 + $0x50] sm:$0xff]
        %v879 = vld [vmem:[%s3 + $0x58] sm:$0xff]
        %v880 = vld [vmem:[%s3 + $0x60] sm:$0xff]
        %v881 = vld [vmem:[%s3 + $0x68] sm:$0xff]
        %v882 = vld [vmem:[%s3 + $0x70] sm:$0xff]
        %v883 = vld [vmem:[%s3 + $0x78] sm:$0xff]
        %v884 = vld [vmem:[%s3 + $0x80] sm:$0xff]
        %v885 = vld [vmem:[%s3 + $0x88] sm:$0xff]
        %v886 = vld [vmem:[%s3 + $0x90] sm:$0xff]
        %v887 = vld [vmem:[%s3 + $0x98] sm:$0xff]
        %v888 = vld [vmem:[%s3 + $0xa0] sm:$0xff]
        %v889 = vld [vmem:[%s3 + $0xa8] sm:$0x1]
        %v891 = vlaneseq
        %v892 = vshrl.u32 %v891, 7
        %v893 = vsub.s32 0, %v892
        %v894 = vrot.slane %v867, %v893
        %v895 = vlaneseq
        %v896 = vshrl.u32 %v895, 7
        %v897 = vsub.s32 1, %v896
        %v898 = vrot.slane %v867, %v897
        %v900 = vsel %vm862, %v898, 0
        %vm902 = vcmask 1040384
        %v904 = vsel %vm902, %v889, 0
        %906 = vmatprep.subr.mxu0 0.0
        %907 = vmatpush1.msra.mxu0 %v883
        %908 = vmatprep.subr.mxu0 0.0
        %909 = vmatpush1.msra.mxu0 %v882
        %910 = vmatprep.subr.mxu0 0.0
        %911 = vmatpush1.msra.mxu0 %v881
        %912 = vmatprep.subr.mxu0 0.0
        %913 = vmatpush1.msra.mxu0 %v880
        %914 = vmatprep.subr.mxu0 0.0
        %915 = vmatpush1.msra.mxu0 %v879
        %916 = vmatprep.subr.mxu0 0.0
        %917 = vmatpush1.msra.mxu0 %v878
        %918 = vmatprep.subr.mxu0 0.0
        %919 = vmatpush1.msra.mxu0 %v877
        %920 = vmatprep.subr.mxu0 0.0
        %921 = vmatpush1.msra.mxu0 %v876
        %922 = vmatprep.subr.mxu0 0.0
        %923 = vmatpush1.msra.mxu0 %v875
        %924 = vmatprep.subr.mxu0 0.0
        %925 = vmatpush1.msra.mxu0 %v874
        %926 = vmatprep.subr.mxu0 0.0
        %927 = vmatpush1.msra.mxu0 %v873
        %928 = vmatprep.subr.mxu0 0.0
        %929 = vmatpush1.msra.mxu0 %v872
        %930 = vmatprep.subr.mxu0 0.0
        %931 = vmatpush1.msra.mxu0 %v871
        %932 = vmatprep.subr.mxu0 0.0
        %933 = vmatpush1.msra.mxu0 %v870
        %934 = vmatprep.subr.mxu0 0.0
        %935 = vmatpush1.msra.mxu0 %v869
        %936 = vmatprep.subr.mxu0 0.0
        %937 = vmatpush1.msra.mxu0 %v868
        %938 = vmatprep.subr.mxu0 0.0
        %939 = vmatpush2.msra.mxu0 0.0
        %940 = vmatprep.subr.mxu0 0.0
        %941 = vmatpush2.msra.mxu0 0.0
        %942 = vmatprep.subr.mxu0 0.0
        %943 = vmatpush2.msra.mxu0 0.0
        %944 = vmatprep.subr.mxu0 0.0
        %945 = vmatpush2.msra.mxu0 0.0
        %946 = vmatprep.subr.mxu0 0.0
        %947 = vmatpush2.msra.mxu0 0.0
        %948 = vmatprep.subr.mxu0 0.0
        %949 = vmatpush2.msra.mxu0 0.0
        %950 = vmatprep.subr.mxu0 0.0
        %951 = vmatpush2.msra.mxu0 0.0
        %952 = vmatprep.subr.mxu0 0.0
        %953 = vmatpush2.msra.mxu0 0.0
        %954 = vmatprep.subr.mxu0 0.0
        %955 = vmatpush2.msra.mxu0 0.0
        %956 = vmatprep.subr.mxu0 0.0
        %957 = vmatpush2.msra.mxu0 0.0
        %958 = vmatprep.subr.mxu0 0.0
        %959 = vmatpush2.msra.mxu0 %v904
        %960 = vmatprep.subr.mxu0 0.0
        %961 = vmatpush2.msra.mxu0 %v888
        %962 = vmatprep.subr.mxu0 0.0
        %963 = vmatpush2.msra.mxu0 %v887
        %964 = vmatprep.subr.mxu0 0.0
        %965 = vmatpush2.msra.mxu0 %v886
        %966 = vmatprep.subr.mxu0 0.0
        %967 = vmatpush2.msra.mxu0 %v885
        %968 = vmatprep.subr.mxu0 0.0
        %969 = vmatpush2.msra.mxu0 %v884
        %970 = vmatprep.mubr.f32.mxu0 %v900
        %971 = vmatmul.mubr.f32.gmra.mxu0 %v894
        %v972 = vpop.f32.mrf.mxu0
        %v973 = vadd.f32 0.0, %v972
        %v974 = vpop.f32.mrf.mxu0
        %975 = vdwg.mxu0
        %v976 = vadd.f32 %v866, %v973
        %s977 = scalar_lea.vmem [#allocation2], 1
        %v978 = vld [vmem:[%s977] ss:$8 sm:$0x3]
        %s979 = scalar_lea.vmem %s3, 176
        %v980 = vld [vmem:[%s979] sm:$0xff]
        %v981 = vld [vmem:[%s979 + $0x8] sm:$0xff]
        %v982 = vld [vmem:[%s979 + $0x10] sm:$0xff]
        %v983 = vld [vmem:[%s979 + $0x18] sm:$0xff]
        %v984 = vld [vmem:[%s979 + $0x20] sm:$0xff]
        %v985 = vld [vmem:[%s979 + $0x28] sm:$0xff]
        %v986 = vld [vmem:[%s979 + $0x30] sm:$0xff]
        %v987 = vld [vmem:[%s979 + $0x38] sm:$0xff]
        %v988 = vld [vmem:[%s979 + $0x40] sm:$0xff]
        %v989 = vld [vmem:[%s979 + $0x48] sm:$0xff]
        %v990 = vld [vmem:[%s979 + $0x50] sm:$0xff]
        %v991 = vld [vmem:[%s979 + $0x58] sm:$0xff]
        %v992 = vld [vmem:[%s979 + $0x60] sm:$0xff]
        %v993 = vld [vmem:[%s979 + $0x68] sm:$0xff]
        %v994 = vld [vmem:[%s979 + $0x70] sm:$0xff]
        %v995 = vld [vmem:[%s979 + $0x78] sm:$0xff]
        %v996 = vld [vmem:[%s979 + $0x80] sm:$0xff]
        %v997 = vld [vmem:[%s979 + $0x88] sm:$0xff]
        %v998 = vld [vmem:[%s979 + $0x90] sm:$0xff]
        %v999 = vld [vmem:[%s979 + $0x98] sm:$0xff]
        %v1000 = vld [vmem:[%s979 + $0xa0] sm:$0xff]
        %v1001 = vld [vmem:[%s979 + $0xa8] sm:$0x1]
        %v1003 = vlaneseq
        %v1004 = vshrl.u32 %v1003, 7
        %v1005 = vsub.s32 0, %v1004
        %v1006 = vrot.slane %v978, %v1005
        %v1007 = vlaneseq
        %v1008 = vshrl.u32 %v1007, 7
        %v1009 = vsub.s32 1, %v1008
        %v1010 = vrot.slane %v978, %v1009
        %v1012 = vsel %vm862, %v1010, 0
        %v1015 = vsel %vm902, %v1001, 0
        %1017 = vmatprep.subr.mxu0 0.0
        %1018 = vmatpush1.msra.mxu0 %v995
        %1019 = vmatprep.subr.mxu0 0.0
        %1020 = vmatpush1.msra.mxu0 %v994
        %1021 = vmatprep.subr.mxu0 0.0
        %1022 = vmatpush1.msra.mxu0 %v993
        %1023 = vmatprep.subr.mxu0 0.0
        %1024 = vmatpush1.msra.mxu0 %v992
        %1025 = vmatprep.subr.mxu0 0.0
        %1026 = vmatpush1.msra.mxu0 %v991
        %1027 = vmatprep.subr.mxu0 0.0
        %1028 = vmatpush1.msra.mxu0 %v990
        %1029 = vmatprep.subr.mxu0 0.0
        %1030 = vmatpush1.msra.mxu0 %v989
        %1031 = vmatprep.subr.mxu0 0.0
        %1032 = vmatpush1.msra.mxu0 %v988
        %1033 = vmatprep.subr.mxu0 0.0
        %1034 = vmatpush1.msra.mxu0 %v987
        %1035 = vmatprep.subr.mxu0 0.0
        %1036 = vmatpush1.msra.mxu0 %v986
        %1037 = vmatprep.subr.mxu0 0.0
        %1038 = vmatpush1.msra.mxu0 %v985
        %1039 = vmatprep.subr.mxu0 0.0
        %1040 = vmatpush1.msra.mxu0 %v984
        %1041 = vmatprep.subr.mxu0 0.0
        %1042 = vmatpush1.msra.mxu0 %v983
        %1043 = vmatprep.subr.mxu0 0.0
        %1044 = vmatpush1.msra.mxu0 %v982
        %1045 = vmatprep.subr.mxu0 0.0
        %1046 = vmatpush1.msra.mxu0 %v981
        %1047 = vmatprep.subr.mxu0 0.0
        %1048 = vmatpush1.msra.mxu0 %v980
        %1049 = vmatprep.subr.mxu0 0.0
        %1050 = vmatpush2.msra.mxu0 0.0
        %1051 = vmatprep.subr.mxu0 0.0
        %1052 = vmatpush2.msra.mxu0 0.0
        %1053 = vmatprep.subr.mxu0 0.0
        %1054 = vmatpush2.msra.mxu0 0.0
        %1055 = vmatprep.subr.mxu0 0.0
        %1056 = vmatpush2.msra.mxu0 0.0
        %1057 = vmatprep.subr.mxu0 0.0
        %1058 = vmatpush2.msra.mxu0 0.0
        %1059 = vmatprep.subr.mxu0 0.0
        %1060 = vmatpush2.msra.mxu0 0.0
        %1061 = vmatprep.subr.mxu0 0.0
        %1062 = vmatpush2.msra.mxu0 0.0
        %1063 = vmatprep.subr.mxu0 0.0
        %1064 = vmatpush2.msra.mxu0 0.0
        %1065 = vmatprep.subr.mxu0 0.0
        %1066 = vmatpush2.msra.mxu0 0.0
        %1067 = vmatprep.subr.mxu0 0.0
        %1068 = vmatpush2.msra.mxu0 0.0
        %1069 = vmatprep.subr.mxu0 0.0
        %1070 = vmatpush2.msra.mxu0 %v1015
        %1071 = vmatprep.subr.mxu0 0.0
        %1072 = vmatpush2.msra.mxu0 %v1000
        %1073 = vmatprep.subr.mxu0 0.0
        %1074 = vmatpush2.msra.mxu0 %v999
        %1075 = vmatprep.subr.mxu0 0.0
        %1076 = vmatpush2.msra.mxu0 %v998
        %1077 = vmatprep.subr.mxu0 0.0
        %1078 = vmatpush2.msra.mxu0 %v997
        %1079 = vmatprep.subr.mxu0 0.0
        %1080 = vmatpush2.msra.mxu0 %v996
        %1081 = vmatprep.mubr.f32.mxu0 %v1012
        %1082 = vmatmul.mubr.f32.gmra.mxu0 %v1006
        %v1083 = vpop.f32.mrf.mxu0
        %v1084 = vadd.f32 0.0, %v1083
        %v1085 = vpop.f32.mrf.mxu0
        %1086 = vdwg.mxu0
        %v1087 = vadd.f32 %v976, %v1084
        %s1088 = scalar_lea.vmem [#allocation2], 2
        %v1089 = vld [vmem:[%s1088] ss:$8 sm:$0x3]
        %s1090 = scalar_lea.vmem %s3, 352
        %v1091 = vld [vmem:[%s1090] sm:$0xff]
        %v1092 = vld [vmem:[%s1090 + $0x8] sm:$0xff]
        %v1093 = vld [vmem:[%s1090 + $0x10] sm:$0xff]
        %v1094 = vld [vmem:[%s1090 + $0x18] sm:$0xff]
        %v1095 = vld [vmem:[%s1090 + $0x20] sm:$0xff]
        %v1096 = vld [vmem:[%s1090 + $0x28] sm:$0xff]
        %v1097 = vld [vmem:[%s1090 + $0x30] sm:$0xff]
        %v1098 = vld [vmem:[%s1090 + $0x38] sm:$0xff]
        %v1099 = vld [vmem:[%s1090 + $0x40] sm:$0xff]
        %v1100 = vld [vmem:[%s1090 + $0x48] sm:$0xff]
        %v1101 = vld [vmem:[%s1090 + $0x50] sm:$0xff]
        %v1102 = vld [vmem:[%s1090 + $0x58] sm:$0xff]
        %v1103 = vld [vmem:[%s1090 + $0x60] sm:$0xff]
        %v1104 = vld [vmem:[%s1090 + $0x68] sm:$0xff]
        %v1105 = vld [vmem:[%s1090 + $0x70] sm:$0xff]
        %v1106 = vld [vmem:[%s1090 + $0x78] sm:$0xff]
        %v1107 = vld [vmem:[%s1090 + $0x80] sm:$0xff]
        %v1108 = vld [vmem:[%s1090 + $0x88] sm:$0xff]
        %v1109 = vld [vmem:[%s1090 + $0x90] sm:$0xff]
        %v1110 = vld [vmem:[%s1090 + $0x98] sm:$0xff]
        %v1111 = vld [vmem:[%s1090 + $0xa0] sm:$0xff]
        %v1112 = vld [vmem:[%s1090 + $0xa8] sm:$0x1]
        %v1114 = vlaneseq
        %v1115 = vshrl.u32 %v1114, 7
        %v1116 = vsub.s32 0, %v1115
        %v1117 = vrot.slane %v1089, %v1116
        %v1118 = vlaneseq
        %v1119 = vshrl.u32 %v1118, 7
        %v1120 = vsub.s32 1, %v1119
        %v1121 = vrot.slane %v1089, %v1120
        %v1123 = vsel %vm862, %v1121, 0
        %v1126 = vsel %vm902, %v1112, 0
        %1128 = vmatprep.subr.mxu0 0.0
        %1129 = vmatpush1.msra.mxu0 %v1106
        %1130 = vmatprep.subr.mxu0 0.0
        %1131 = vmatpush1.msra.mxu0 %v1105
        %1132 = vmatprep.subr.mxu0 0.0
        %1133 = vmatpush1.msra.mxu0 %v1104
        %1134 = vmatprep.subr.mxu0 0.0
        %1135 = vmatpush1.msra.mxu0 %v1103
        %1136 = vmatprep.subr.mxu0 0.0
        %1137 = vmatpush1.msra.mxu0 %v1102
        %1138 = vmatprep.subr.mxu0 0.0
        %1139 = vmatpush1.msra.mxu0 %v1101
        %1140 = vmatprep.subr.mxu0 0.0
        %1141 = vmatpush1.msra.mxu0 %v1100
        %1142 = vmatprep.subr.mxu0 0.0
        %1143 = vmatpush1.msra.mxu0 %v1099
        %1144 = vmatprep.subr.mxu0 0.0
        %1145 = vmatpush1.msra.mxu0 %v1098
        %1146 = vmatprep.subr.mxu0 0.0
        %1147 = vmatpush1.msra.mxu0 %v1097
        %1148 = vmatprep.subr.mxu0 0.0
        %1149 = vmatpush1.msra.mxu0 %v1096
        %1150 = vmatprep.subr.mxu0 0.0
        %1151 = vmatpush1.msra.mxu0 %v1095
        %1152 = vmatprep.subr.mxu0 0.0
        %1153 = vmatpush1.msra.mxu0 %v1094
        %1154 = vmatprep.subr.mxu0 0.0
        %1155 = vmatpush1.msra.mxu0 %v1093
        %1156 = vmatprep.subr.mxu0 0.0
        %1157 = vmatpush1.msra.mxu0 %v1092
        %1158 = vmatprep.subr.mxu0 0.0
        %1159 = vmatpush1.msra.mxu0 %v1091
        %1160 = vmatprep.subr.mxu0 0.0
        %1161 = vmatpush2.msra.mxu0 0.0
        %1162 = vmatprep.subr.mxu0 0.0
        %1163 = vmatpush2.msra.mxu0 0.0
        %1164 = vmatprep.subr.mxu0 0.0
        %1165 = vmatpush2.msra.mxu0 0.0
        %1166 = vmatprep.subr.mxu0 0.0
        %1167 = vmatpush2.msra.mxu0 0.0
        %1168 = vmatprep.subr.mxu0 0.0
        %1169 = vmatpush2.msra.mxu0 0.0
        %1170 = vmatprep.subr.mxu0 0.0
        %1171 = vmatpush2.msra.mxu0 0.0
        %1172 = vmatprep.subr.mxu0 0.0
        %1173 = vmatpush2.msra.mxu0 0.0
        %1174 = vmatprep.subr.mxu0 0.0
        %1175 = vmatpush2.msra.mxu0 0.0
        %1176 = vmatprep.subr.mxu0 0.0
        %1177 = vmatpush2.msra.mxu0 0.0
        %1178 = vmatprep.subr.mxu0 0.0
        %1179 = vmatpush2.msra.mxu0 0.0
        %1180 = vmatprep.subr.mxu0 0.0
        %1181 = vmatpush2.msra.mxu0 %v1126
        %1182 = vmatprep.subr.mxu0 0.0
        %1183 = vmatpush2.msra.mxu0 %v1111
        %1184 = vmatprep.subr.mxu0 0.0
        %1185 = vmatpush2.msra.mxu0 %v1110
        %1186 = vmatprep.subr.mxu0 0.0
        %1187 = vmatpush2.msra.mxu0 %v1109
        %1188 = vmatprep.subr.mxu0 0.0
        %1189 = vmatpush2.msra.mxu0 %v1108
        %1190 = vmatprep.subr.mxu0 0.0
        %1191 = vmatpush2.msra.mxu0 %v1107
        %1192 = vmatprep.mubr.f32.mxu0 %v1123
        %1193 = vmatmul.mubr.f32.gmra.mxu0 %v1117
        %v1194 = vpop.f32.mrf.mxu0
        %v1195 = vadd.f32 0.0, %v1194
        %v1196 = vpop.f32.mrf.mxu0
        %1197 = vdwg.mxu0
        %v1198 = vadd.f32 %v1087, %v1195
        %s1199 = scalar_lea.vmem [#allocation2], 3
        %v1200 = vld [vmem:[%s1199] ss:$8 sm:$0x3]
        %s1201 = scalar_lea.vmem %s3, 528
        %v1202 = vld [vmem:[%s1201] sm:$0xff]
        %v1203 = vld [vmem:[%s1201 + $0x8] sm:$0xff]
        %v1204 = vld [vmem:[%s1201 + $0x10] sm:$0xff]
        %v1205 = vld [vmem:[%s1201 + $0x18] sm:$0xff]
        %v1206 = vld [vmem:[%s1201 + $0x20] sm:$0xff]
        %v1207 = vld [vmem:[%s1201 + $0x28] sm:$0xff]
        %v1208 = vld [vmem:[%s1201 + $0x30] sm:$0xff]
        %v1209 = vld [vmem:[%s1201 + $0x38] sm:$0xff]
        %v1210 = vld [vmem:[%s1201 + $0x40] sm:$0xff]
        %v1211 = vld [vmem:[%s1201 + $0x48] sm:$0xff]
        %v1212 = vld [vmem:[%s1201 + $0x50] sm:$0xff]
        %v1213 = vld [vmem:[%s1201 + $0x58] sm:$0xff]
        %v1214 = vld [vmem:[%s1201 + $0x60] sm:$0xff]
        %v1215 = vld [vmem:[%s1201 + $0x68] sm:$0xff]
        %v1216 = vld [vmem:[%s1201 + $0x70] sm:$0xff]
        %v1217 = vld [vmem:[%s1201 + $0x78] sm:$0xff]
        %v1218 = vld [vmem:[%s1201 + $0x80] sm:$0xff]
        %v1219 = vld [vmem:[%s1201 + $0x88] sm:$0xff]
        %v1220 = vld [vmem:[%s1201 + $0x90] sm:$0xff]
        %v1221 = vld [vmem:[%s1201 + $0x98] sm:$0xff]
        %v1222 = vld [vmem:[%s1201 + $0xa0] sm:$0xff]
        %v1223 = vld [vmem:[%s1201 + $0xa8] sm:$0x1]
        %v1225 = vlaneseq
        %v1226 = vshrl.u32 %v1225, 7
        %v1227 = vsub.s32 0, %v1226
        %v1228 = vrot.slane %v1200, %v1227
        %v1229 = vlaneseq
        %v1230 = vshrl.u32 %v1229, 7
        %v1231 = vsub.s32 1, %v1230
        %v1232 = vrot.slane %v1200, %v1231
        %v1234 = vsel %vm862, %v1232, 0
        %v1237 = vsel %vm902, %v1223, 0
        %1239 = vmatprep.subr.mxu0 0.0
        %1240 = vmatpush1.msra.mxu0 %v1217
        %1241 = vmatprep.subr.mxu0 0.0
        %1242 = vmatpush1.msra.mxu0 %v1216
        %1243 = vmatprep.subr.mxu0 0.0
        %1244 = vmatpush1.msra.mxu0 %v1215
        %1245 = vmatprep.subr.mxu0 0.0
        %1246 = vmatpush1.msra.mxu0 %v1214
        %1247 = vmatprep.subr.mxu0 0.0
        %1248 = vmatpush1.msra.mxu0 %v1213
        %1249 = vmatprep.subr.mxu0 0.0
        %1250 = vmatpush1.msra.mxu0 %v1212
        %1251 = vmatprep.subr.mxu0 0.0
        %1252 = vmatpush1.msra.mxu0 %v1211
        %1253 = vmatprep.subr.mxu0 0.0
        %1254 = vmatpush1.msra.mxu0 %v1210
        %1255 = vmatprep.subr.mxu0 0.0
        %1256 = vmatpush1.msra.mxu0 %v1209
        %1257 = vmatprep.subr.mxu0 0.0
        %1258 = vmatpush1.msra.mxu0 %v1208
        %1259 = vmatprep.subr.mxu0 0.0
        %1260 = vmatpush1.msra.mxu0 %v1207
        %1261 = vmatprep.subr.mxu0 0.0
        %1262 = vmatpush1.msra.mxu0 %v1206
        %1263 = vmatprep.subr.mxu0 0.0
        %1264 = vmatpush1.msra.mxu0 %v1205
        %1265 = vmatprep.subr.mxu0 0.0
        %1266 = vmatpush1.msra.mxu0 %v1204
        %1267 = vmatprep.subr.mxu0 0.0
        %1268 = vmatpush1.msra.mxu0 %v1203
        %1269 = vmatprep.subr.mxu0 0.0
        %1270 = vmatpush1.msra.mxu0 %v1202
        %1271 = vmatprep.subr.mxu0 0.0
        %1272 = vmatpush2.msra.mxu0 0.0
        %1273 = vmatprep.subr.mxu0 0.0
        %1274 = vmatpush2.msra.mxu0 0.0
        %1275 = vmatprep.subr.mxu0 0.0
        %1276 = vmatpush2.msra.mxu0 0.0
        %1277 = vmatprep.subr.mxu0 0.0
        %1278 = vmatpush2.msra.mxu0 0.0
        %1279 = vmatprep.subr.mxu0 0.0
        %1280 = vmatpush2.msra.mxu0 0.0
        %1281 = vmatprep.subr.mxu0 0.0
        %1282 = vmatpush2.msra.mxu0 0.0
        %1283 = vmatprep.subr.mxu0 0.0
        %1284 = vmatpush2.msra.mxu0 0.0
        %1285 = vmatprep.subr.mxu0 0.0
        %1286 = vmatpush2.msra.mxu0 0.0
        %1287 = vmatprep.subr.mxu0 0.0
        %1288 = vmatpush2.msra.mxu0 0.0
        %1289 = vmatprep.subr.mxu0 0.0
        %1290 = vmatpush2.msra.mxu0 0.0
        %1291 = vmatprep.subr.mxu0 0.0
        %1292 = vmatpush2.msra.mxu0 %v1237
        %1293 = vmatprep.subr.mxu0 0.0
        %1294 = vmatpush2.msra.mxu0 %v1222
        %1295 = vmatprep.subr.mxu0 0.0
        %1296 = vmatpush2.msra.mxu0 %v1221
        %1297 = vmatprep.subr.mxu0 0.0
        %1298 = vmatpush2.msra.mxu0 %v1220
        %1299 = vmatprep.subr.mxu0 0.0
        %1300 = vmatpush2.msra.mxu0 %v1219
        %1301 = vmatprep.subr.mxu0 0.0
        %1302 = vmatpush2.msra.mxu0 %v1218
        %1303 = vmatprep.mubr.f32.mxu0 %v1234
        %1304 = vmatmul.mubr.f32.gmra.mxu0 %v1228
        %v1305 = vpop.f32.mrf.mxu0
        %v1306 = vadd.f32 0.0, %v1305
        %v1307 = vpop.f32.mrf.mxu0
        %1308 = vdwg.mxu0
        %v1309 = vadd.f32 %v1198, %v1306
        %s1310 = scalar_lea.vmem [#allocation2], 4
        %v1311 = vld [vmem:[%s1310] ss:$8 sm:$0x3]
        %s1312 = scalar_lea.vmem %s3, 704
        %v1313 = vld [vmem:[%s1312] sm:$0xff]
        %v1314 = vld [vmem:[%s1312 + $0x8] sm:$0xff]
        %v1315 = vld [vmem:[%s1312 + $0x10] sm:$0xff]
        %v1316 = vld [vmem:[%s1312 + $0x18] sm:$0xff]
        %v1317 = vld [vmem:[%s1312 + $0x20] sm:$0xff]
        %v1318 = vld [vmem:[%s1312 + $0x28] sm:$0xff]
        %v1319 = vld [vmem:[%s1312 + $0x30] sm:$0xff]
        %v1320 = vld [vmem:[%s1312 + $0x38] sm:$0xff]
        %v1321 = vld [vmem:[%s1312 + $0x40] sm:$0xff]
        %v1322 = vld [vmem:[%s1312 + $0x48] sm:$0xff]
        %v1323 = vld [vmem:[%s1312 + $0x50] sm:$0xff]
        %v1324 = vld [vmem:[%s1312 + $0x58] sm:$0xff]
        %v1325 = vld [vmem:[%s1312 + $0x60] sm:$0xff]
        %v1326 = vld [vmem:[%s1312 + $0x68] sm:$0xff]
        %v1327 = vld [vmem:[%s1312 + $0x70] sm:$0xff]
        %v1328 = vld [vmem:[%s1312 + $0x78] sm:$0xff]
        %v1329 = vld [vmem:[%s1312 + $0x80] sm:$0xff]
        %v1330 = vld [vmem:[%s1312 + $0x88] sm:$0xff]
        %v1331 = vld [vmem:[%s1312 + $0x90] sm:$0xff]
        %v1332 = vld [vmem:[%s1312 + $0x98] sm:$0xff]
        %v1333 = vld [vmem:[%s1312 + $0xa0] sm:$0xff]
        %v1334 = vld [vmem:[%s1312 + $0xa8] sm:$0x1]
        %v1336 = vlaneseq
        %v1337 = vshrl.u32 %v1336, 7
        %v1338 = vsub.s32 0, %v1337
        %v1339 = vrot.slane %v1311, %v1338
        %v1340 = vlaneseq
        %v1341 = vshrl.u32 %v1340, 7
        %v1342 = vsub.s32 1, %v1341
        %v1343 = vrot.slane %v1311, %v1342
        %v1345 = vsel %vm862, %v1343, 0
        %v1348 = vsel %vm902, %v1334, 0
        %1350 = vmatprep.subr.mxu0 0.0
        %1351 = vmatpush1.msra.mxu0 %v1328
        %1352 = vmatprep.subr.mxu0 0.0
        %1353 = vmatpush1.msra.mxu0 %v1327
        %1354 = vmatprep.subr.mxu0 0.0
        %1355 = vmatpush1.msra.mxu0 %v1326
        %1356 = vmatprep.subr.mxu0 0.0
        %1357 = vmatpush1.msra.mxu0 %v1325
        %1358 = vmatprep.subr.mxu0 0.0
        %1359 = vmatpush1.msra.mxu0 %v1324
        %1360 = vmatprep.subr.mxu0 0.0
        %1361 = vmatpush1.msra.mxu0 %v1323
        %1362 = vmatprep.subr.mxu0 0.0
        %1363 = vmatpush1.msra.mxu0 %v1322
        %1364 = vmatprep.subr.mxu0 0.0
        %1365 = vmatpush1.msra.mxu0 %v1321
        %1366 = vmatprep.subr.mxu0 0.0
        %1367 = vmatpush1.msra.mxu0 %v1320
        %1368 = vmatprep.subr.mxu0 0.0
        %1369 = vmatpush1.msra.mxu0 %v1319
        %1370 = vmatprep.subr.mxu0 0.0
        %1371 = vmatpush1.msra.mxu0 %v1318
        %1372 = vmatprep.subr.mxu0 0.0
        %1373 = vmatpush1.msra.mxu0 %v1317
        %1374 = vmatprep.subr.mxu0 0.0
        %1375 = vmatpush1.msra.mxu0 %v1316
        %1376 = vmatprep.subr.mxu0 0.0
        %1377 = vmatpush1.msra.mxu0 %v1315
        %1378 = vmatprep.subr.mxu0 0.0
        %1379 = vmatpush1.msra.mxu0 %v1314
        %1380 = vmatprep.subr.mxu0 0.0
        %1381 = vmatpush1.msra.mxu0 %v1313
        %1382 = vmatprep.subr.mxu0 0.0
        %1383 = vmatpush2.msra.mxu0 0.0
        %1384 = vmatprep.subr.mxu0 0.0
        %1385 = vmatpush2.msra.mxu0 0.0
        %1386 = vmatprep.subr.mxu0 0.0
        %1387 = vmatpush2.msra.mxu0 0.0
        %1388 = vmatprep.subr.mxu0 0.0
        %1389 = vmatpush2.msra.mxu0 0.0
        %1390 = vmatprep.subr.mxu0 0.0
        %1391 = vmatpush2.msra.mxu0 0.0
        %1392 = vmatprep.subr.mxu0 0.0
        %1393 = vmatpush2.msra.mxu0 0.0
        %1394 = vmatprep.subr.mxu0 0.0
        %1395 = vmatpush2.msra.mxu0 0.0
        %1396 = vmatprep.subr.mxu0 0.0
        %1397 = vmatpush2.msra.mxu0 0.0
        %1398 = vmatprep.subr.mxu0 0.0
        %1399 = vmatpush2.msra.mxu0 0.0
        %1400 = vmatprep.subr.mxu0 0.0
        %1401 = vmatpush2.msra.mxu0 0.0
        %1402 = vmatprep.subr.mxu0 0.0
        %1403 = vmatpush2.msra.mxu0 %v1348
        %1404 = vmatprep.subr.mxu0 0.0
        %1405 = vmatpush2.msra.mxu0 %v1333
        %1406 = vmatprep.subr.mxu0 0.0
        %1407 = vmatpush2.msra.mxu0 %v1332
        %1408 = vmatprep.subr.mxu0 0.0
        %1409 = vmatpush2.msra.mxu0 %v1331
        %1410 = vmatprep.subr.mxu0 0.0
        %1411 = vmatpush2.msra.mxu0 %v1330
        %1412 = vmatprep.subr.mxu0 0.0
        %1413 = vmatpush2.msra.mxu0 %v1329
        %1414 = vmatprep.mubr.f32.mxu0 %v1345
        %1415 = vmatmul.mubr.f32.gmra.mxu0 %v1339
        %v1416 = vpop.f32.mrf.mxu0
        %v1417 = vadd.f32 0.0, %v1416
        %v1418 = vpop.f32.mrf.mxu0
        %1419 = vdwg.mxu0
        %v1420 = vadd.f32 %v1309, %v1417
        %s1421 = scalar_lea.vmem [#allocation2], 5
        %v1422 = vld [vmem:[%s1421] ss:$8 sm:$0x3]
        %s1423 = scalar_lea.vmem %s3, 880
        %v1424 = vld [vmem:[%s1423] sm:$0xff]
        %v1425 = vld [vmem:[%s1423 + $0x8] sm:$0xff]
        %v1426 = vld [vmem:[%s1423 + $0x10] sm:$0xff]
        %v1427 = vld [vmem:[%s1423 + $0x18] sm:$0xff]
        %v1428 = vld [vmem:[%s1423 + $0x20] sm:$0xff]
        %v1429 = vld [vmem:[%s1423 + $0x28] sm:$0xff]
        %v1430 = vld [vmem:[%s1423 + $0x30] sm:$0xff]
        %v1431 = vld [vmem:[%s1423 + $0x38] sm:$0xff]
        %v1432 = vld [vmem:[%s1423 + $0x40] sm:$0xff]
        %v1433 = vld [vmem:[%s1423 + $0x48] sm:$0xff]
        %v1434 = vld [vmem:[%s1423 + $0x50] sm:$0xff]
        %v1435 = vld [vmem:[%s1423 + $0x58] sm:$0xff]
        %v1436 = vld [vmem:[%s1423 + $0x60] sm:$0xff]
        %v1437 = vld [vmem:[%s1423 + $0x68] sm:$0xff]
        %v1438 = vld [vmem:[%s1423 + $0x70] sm:$0xff]
        %v1439 = vld [vmem:[%s1423 + $0x78] sm:$0xff]
        %v1440 = vld [vmem:[%s1423 + $0x80] sm:$0xff]
        %v1441 = vld [vmem:[%s1423 + $0x88] sm:$0xff]
        %v1442 = vld [vmem:[%s1423 + $0x90] sm:$0xff]
        %v1443 = vld [vmem:[%s1423 + $0x98] sm:$0xff]
        %v1444 = vld [vmem:[%s1423 + $0xa0] sm:$0xff]
        %v1445 = vld [vmem:[%s1423 + $0xa8] sm:$0x1]
        %v1447 = vlaneseq
        %v1448 = vshrl.u32 %v1447, 7
        %v1449 = vsub.s32 0, %v1448
        %v1450 = vrot.slane %v1422, %v1449
        %v1451 = vlaneseq
        %v1452 = vshrl.u32 %v1451, 7
        %v1453 = vsub.s32 1, %v1452
        %v1454 = vrot.slane %v1422, %v1453
        %v1456 = vsel %vm862, %v1454, 0
        %v1459 = vsel %vm902, %v1445, 0
        %1461 = vmatprep.subr.mxu0 0.0
        %1462 = vmatpush1.msra.mxu0 %v1439
        %1463 = vmatprep.subr.mxu0 0.0
        %1464 = vmatpush1.msra.mxu0 %v1438
        %1465 = vmatprep.subr.mxu0 0.0
        %1466 = vmatpush1.msra.mxu0 %v1437
        %1467 = vmatprep.subr.mxu0 0.0
        %1468 = vmatpush1.msra.mxu0 %v1436
        %1469 = vmatprep.subr.mxu0 0.0
        %1470 = vmatpush1.msra.mxu0 %v1435
        %1471 = vmatprep.subr.mxu0 0.0
        %1472 = vmatpush1.msra.mxu0 %v1434
        %1473 = vmatprep.subr.mxu0 0.0
        %1474 = vmatpush1.msra.mxu0 %v1433
        %1475 = vmatprep.subr.mxu0 0.0
        %1476 = vmatpush1.msra.mxu0 %v1432
        %1477 = vmatprep.subr.mxu0 0.0
        %1478 = vmatpush1.msra.mxu0 %v1431
        %1479 = vmatprep.subr.mxu0 0.0
        %1480 = vmatpush1.msra.mxu0 %v1430
        %1481 = vmatprep.subr.mxu0 0.0
        %1482 = vmatpush1.msra.mxu0 %v1429
        %1483 = vmatprep.subr.mxu0 0.0
        %1484 = vmatpush1.msra.mxu0 %v1428
        %1485 = vmatprep.subr.mxu0 0.0
        %1486 = vmatpush1.msra.mxu0 %v1427
        %1487 = vmatprep.subr.mxu0 0.0
        %1488 = vmatpush1.msra.mxu0 %v1426
        %1489 = vmatprep.subr.mxu0 0.0
        %1490 = vmatpush1.msra.mxu0 %v1425
        %1491 = vmatprep.subr.mxu0 0.0
        %1492 = vmatpush1.msra.mxu0 %v1424
        %1493 = vmatprep.subr.mxu0 0.0
        %1494 = vmatpush2.msra.mxu0 0.0
        %1495 = vmatprep.subr.mxu0 0.0
        %1496 = vmatpush2.msra.mxu0 0.0
        %1497 = vmatprep.subr.mxu0 0.0
        %1498 = vmatpush2.msra.mxu0 0.0
        %1499 = vmatprep.subr.mxu0 0.0
        %1500 = vmatpush2.msra.mxu0 0.0
        %1501 = vmatprep.subr.mxu0 0.0
        %1502 = vmatpush2.msra.mxu0 0.0
        %1503 = vmatprep.subr.mxu0 0.0
        %1504 = vmatpush2.msra.mxu0 0.0
        %1505 = vmatprep.subr.mxu0 0.0
        %1506 = vmatpush2.msra.mxu0 0.0
        %1507 = vmatprep.subr.mxu0 0.0
        %1508 = vmatpush2.msra.mxu0 0.0
        %1509 = vmatprep.subr.mxu0 0.0
        %1510 = vmatpush2.msra.mxu0 0.0
        %1511 = vmatprep.subr.mxu0 0.0
        %1512 = vmatpush2.msra.mxu0 0.0
        %1513 = vmatprep.subr.mxu0 0.0
        %1514 = vmatpush2.msra.mxu0 %v1459
        %1515 = vmatprep.subr.mxu0 0.0
        %1516 = vmatpush2.msra.mxu0 %v1444
        %1517 = vmatprep.subr.mxu0 0.0
        %1518 = vmatpush2.msra.mxu0 %v1443
        %1519 = vmatprep.subr.mxu0 0.0
        %1520 = vmatpush2.msra.mxu0 %v1442
        %1521 = vmatprep.subr.mxu0 0.0
        %1522 = vmatpush2.msra.mxu0 %v1441
        %1523 = vmatprep.subr.mxu0 0.0
        %1524 = vmatpush2.msra.mxu0 %v1440
        %1525 = vmatprep.mubr.f32.mxu0 %v1456
        %1526 = vmatmul.mubr.f32.gmra.mxu0 %v1450
        %v1527 = vpop.f32.mrf.mxu0
        %v1528 = vadd.f32 0.0, %v1527
        %v1529 = vpop.f32.mrf.mxu0
        %1530 = vdwg.mxu0
        %v1531 = vadd.f32 %v1420, %v1528
        %s1532 = scalar_lea.vmem [#allocation2], 6
        %v1533 = vld [vmem:[%s1532] ss:$8 sm:$0x3]
        %s1534 = scalar_lea.vmem %s3, 1056
        %v1535 = vld [vmem:[%s1534] sm:$0xff]
        %v1536 = vld [vmem:[%s1534 + $0x8] sm:$0xff]
        %v1537 = vld [vmem:[%s1534 + $0x10] sm:$0xff]
        %v1538 = vld [vmem:[%s1534 + $0x18] sm:$0xff]
        %v1539 = vld [vmem:[%s1534 + $0x20] sm:$0xff]
        %v1540 = vld [vmem:[%s1534 + $0x28] sm:$0xff]
        %v1541 = vld [vmem:[%s1534 + $0x30] sm:$0xff]
        %v1542 = vld [vmem:[%s1534 + $0x38] sm:$0xff]
        %v1543 = vld [vmem:[%s1534 + $0x40] sm:$0xff]
        %v1544 = vld [vmem:[%s1534 + $0x48] sm:$0xff]
        %v1545 = vld [vmem:[%s1534 + $0x50] sm:$0xff]
        %v1546 = vld [vmem:[%s1534 + $0x58] sm:$0xff]
        %v1547 = vld [vmem:[%s1534 + $0x60] sm:$0xff]
        %v1548 = vld [vmem:[%s1534 + $0x68] sm:$0xff]
        %v1549 = vld [vmem:[%s1534 + $0x70] sm:$0xff]
        %v1550 = vld [vmem:[%s1534 + $0x78] sm:$0xff]
        %v1551 = vld [vmem:[%s1534 + $0x80] sm:$0xff]
        %v1552 = vld [vmem:[%s1534 + $0x88] sm:$0xff]
        %v1553 = vld [vmem:[%s1534 + $0x90] sm:$0xff]
        %v1554 = vld [vmem:[%s1534 + $0x98] sm:$0xff]
        %v1555 = vld [vmem:[%s1534 + $0xa0] sm:$0xff]
        %v1556 = vld [vmem:[%s1534 + $0xa8] sm:$0x1]
        %v1558 = vlaneseq
        %v1559 = vshrl.u32 %v1558, 7
        %v1560 = vsub.s32 0, %v1559
        %v1561 = vrot.slane %v1533, %v1560
        %v1562 = vlaneseq
        %v1563 = vshrl.u32 %v1562, 7
        %v1564 = vsub.s32 1, %v1563
        %v1565 = vrot.slane %v1533, %v1564
        %v1567 = vsel %vm862, %v1565, 0
        %v1570 = vsel %vm902, %v1556, 0
        %1572 = vmatprep.subr.mxu0 0.0
        %1573 = vmatpush1.msra.mxu0 %v1550
        %1574 = vmatprep.subr.mxu0 0.0
        %1575 = vmatpush1.msra.mxu0 %v1549
        %1576 = vmatprep.subr.mxu0 0.0
        %1577 = vmatpush1.msra.mxu0 %v1548
        %1578 = vmatprep.subr.mxu0 0.0
        %1579 = vmatpush1.msra.mxu0 %v1547
        %1580 = vmatprep.subr.mxu0 0.0
        %1581 = vmatpush1.msra.mxu0 %v1546
        %1582 = vmatprep.subr.mxu0 0.0
        %1583 = vmatpush1.msra.mxu0 %v1545
        %1584 = vmatprep.subr.mxu0 0.0
        %1585 = vmatpush1.msra.mxu0 %v1544
        %1586 = vmatprep.subr.mxu0 0.0
        %1587 = vmatpush1.msra.mxu0 %v1543
        %1588 = vmatprep.subr.mxu0 0.0
        %1589 = vmatpush1.msra.mxu0 %v1542
        %1590 = vmatprep.subr.mxu0 0.0
        %1591 = vmatpush1.msra.mxu0 %v1541
        %1592 = vmatprep.subr.mxu0 0.0
        %1593 = vmatpush1.msra.mxu0 %v1540
        %1594 = vmatprep.subr.mxu0 0.0
        %1595 = vmatpush1.msra.mxu0 %v1539
        %1596 = vmatprep.subr.mxu0 0.0
        %1597 = vmatpush1.msra.mxu0 %v1538
        %1598 = vmatprep.subr.mxu0 0.0
        %1599 = vmatpush1.msra.mxu0 %v1537
        %1600 = vmatprep.subr.mxu0 0.0
        %1601 = vmatpush1.msra.mxu0 %v1536
        %1602 = vmatprep.subr.mxu0 0.0
        %1603 = vmatpush1.msra.mxu0 %v1535
        %1604 = vmatprep.subr.mxu0 0.0
        %1605 = vmatpush2.msra.mxu0 0.0
        %1606 = vmatprep.subr.mxu0 0.0
        %1607 = vmatpush2.msra.mxu0 0.0
        %1608 = vmatprep.subr.mxu0 0.0
        %1609 = vmatpush2.msra.mxu0 0.0
        %1610 = vmatprep.subr.mxu0 0.0
        %1611 = vmatpush2.msra.mxu0 0.0
        %1612 = vmatprep.subr.mxu0 0.0
        %1613 = vmatpush2.msra.mxu0 0.0
        %1614 = vmatprep.subr.mxu0 0.0
        %1615 = vmatpush2.msra.mxu0 0.0
        %1616 = vmatprep.subr.mxu0 0.0
        %1617 = vmatpush2.msra.mxu0 0.0
        %1618 = vmatprep.subr.mxu0 0.0
        %1619 = vmatpush2.msra.mxu0 0.0
        %1620 = vmatprep.subr.mxu0 0.0
        %1621 = vmatpush2.msra.mxu0 0.0
        %1622 = vmatprep.subr.mxu0 0.0
        %1623 = vmatpush2.msra.mxu0 0.0
        %1624 = vmatprep.subr.mxu0 0.0
        %1625 = vmatpush2.msra.mxu0 %v1570
        %1626 = vmatprep.subr.mxu0 0.0
        %1627 = vmatpush2.msra.mxu0 %v1555
        %1628 = vmatprep.subr.mxu0 0.0
        %1629 = vmatpush2.msra.mxu0 %v1554
        %1630 = vmatprep.subr.mxu0 0.0
        %1631 = vmatpush2.msra.mxu0 %v1553
        %1632 = vmatprep.subr.mxu0 0.0
        %1633 = vmatpush2.msra.mxu0 %v1552
        %1634 = vmatprep.subr.mxu0 0.0
        %1635 = vmatpush2.msra.mxu0 %v1551
        %1636 = vmatprep.mubr.f32.mxu0 %v1567
        %1637 = vmatmul.mubr.f32.gmra.mxu0 %v1561
        %v1638 = vpop.f32.mrf.mxu0
        %v1639 = vadd.f32 0.0, %v1638
        %v1640 = vpop.f32.mrf.mxu0
        %1641 = vdwg.mxu0
        %v1642 = vadd.f32 %v1531, %v1639
        %s1643 = scalar_lea.vmem [#allocation2], 7
        %v1644 = vld [vmem:[%s1643] ss:$8 sm:$0x3]
        %s1645 = scalar_lea.vmem %s3, 1232
        %v1646 = vld [vmem:[%s1645] sm:$0xff]
        %v1647 = vld [vmem:[%s1645 + $0x8] sm:$0xff]
        %v1648 = vld [vmem:[%s1645 + $0x10] sm:$0xff]
        %v1649 = vld [vmem:[%s1645 + $0x18] sm:$0xff]
        %v1650 = vld [vmem:[%s1645 + $0x20] sm:$0xff]
        %v1651 = vld [vmem:[%s1645 + $0x28] sm:$0xff]
        %v1652 = vld [vmem:[%s1645 + $0x30] sm:$0xff]
        %v1653 = vld [vmem:[%s1645 + $0x38] sm:$0xff]
        %v1654 = vld [vmem:[%s1645 + $0x40] sm:$0xff]
        %v1655 = vld [vmem:[%s1645 + $0x48] sm:$0xff]
        %v1656 = vld [vmem:[%s1645 + $0x50] sm:$0xff]
        %v1657 = vld [vmem:[%s1645 + $0x58] sm:$0xff]
        %v1658 = vld [vmem:[%s1645 + $0x60] sm:$0xff]
        %v1659 = vld [vmem:[%s1645 + $0x68] sm:$0xff]
        %v1660 = vld [vmem:[%s1645 + $0x70] sm:$0xff]
        %v1661 = vld [vmem:[%s1645 + $0x78] sm:$0xff]
        %v1662 = vld [vmem:[%s1645 + $0x80] sm:$0xff]
        %v1663 = vld [vmem:[%s1645 + $0x88] sm:$0xff]
        %v1664 = vld [vmem:[%s1645 + $0x90] sm:$0xff]
        %v1665 = vld [vmem:[%s1645 + $0x98] sm:$0xff]
        %v1666 = vld [vmem:[%s1645 + $0xa0] sm:$0xff]
        %v1667 = vld [vmem:[%s1645 + $0xa8] sm:$0x1]
        %v1669 = vlaneseq
        %v1670 = vshrl.u32 %v1669, 7
        %v1671 = vsub.s32 0, %v1670
        %v1672 = vrot.slane %v1644, %v1671
        %v1673 = vlaneseq
        %v1674 = vshrl.u32 %v1673, 7
        %v1675 = vsub.s32 1, %v1674
        %v1676 = vrot.slane %v1644, %v1675
        %v1678 = vsel %vm862, %v1676, 0
        %v1681 = vsel %vm902, %v1667, 0
        %1683 = vmatprep.subr.mxu0 0.0
        %1684 = vmatpush1.msra.mxu0 %v1661
        %1685 = vmatprep.subr.mxu0 0.0
        %1686 = vmatpush1.msra.mxu0 %v1660
        %1687 = vmatprep.subr.mxu0 0.0
        %1688 = vmatpush1.msra.mxu0 %v1659
        %1689 = vmatprep.subr.mxu0 0.0
        %1690 = vmatpush1.msra.mxu0 %v1658
        %1691 = vmatprep.subr.mxu0 0.0
        %1692 = vmatpush1.msra.mxu0 %v1657
        %1693 = vmatprep.subr.mxu0 0.0
        %1694 = vmatpush1.msra.mxu0 %v1656
        %1695 = vmatprep.subr.mxu0 0.0
        %1696 = vmatpush1.msra.mxu0 %v1655
        %1697 = vmatprep.subr.mxu0 0.0
        %1698 = vmatpush1.msra.mxu0 %v1654
        %1699 = vmatprep.subr.mxu0 0.0
        %1700 = vmatpush1.msra.mxu0 %v1653
        %1701 = vmatprep.subr.mxu0 0.0
        %1702 = vmatpush1.msra.mxu0 %v1652
        %1703 = vmatprep.subr.mxu0 0.0
        %1704 = vmatpush1.msra.mxu0 %v1651
        %1705 = vmatprep.subr.mxu0 0.0
        %1706 = vmatpush1.msra.mxu0 %v1650
        %1707 = vmatprep.subr.mxu0 0.0
        %1708 = vmatpush1.msra.mxu0 %v1649
        %1709 = vmatprep.subr.mxu0 0.0
        %1710 = vmatpush1.msra.mxu0 %v1648
        %1711 = vmatprep.subr.mxu0 0.0
        %1712 = vmatpush1.msra.mxu0 %v1647
        %1713 = vmatprep.subr.mxu0 0.0
        %1714 = vmatpush1.msra.mxu0 %v1646
        %1715 = vmatprep.subr.mxu0 0.0
        %1716 = vmatpush2.msra.mxu0 0.0
        %1717 = vmatprep.subr.mxu0 0.0
        %1718 = vmatpush2.msra.mxu0 0.0
        %1719 = vmatprep.subr.mxu0 0.0
        %1720 = vmatpush2.msra.mxu0 0.0
        %1721 = vmatprep.subr.mxu0 0.0
        %1722 = vmatpush2.msra.mxu0 0.0
        %1723 = vmatprep.subr.mxu0 0.0
        %1724 = vmatpush2.msra.mxu0 0.0
        %1725 = vmatprep.subr.mxu0 0.0
        %1726 = vmatpush2.msra.mxu0 0.0
        %1727 = vmatprep.subr.mxu0 0.0
        %1728 = vmatpush2.msra.mxu0 0.0
        %1729 = vmatprep.subr.mxu0 0.0
        %1730 = vmatpush2.msra.mxu0 0.0
        %1731 = vmatprep.subr.mxu0 0.0
        %1732 = vmatpush2.msra.mxu0 0.0
        %1733 = vmatprep.subr.mxu0 0.0
        %1734 = vmatpush2.msra.mxu0 0.0
        %1735 = vmatprep.subr.mxu0 0.0
        %1736 = vmatpush2.msra.mxu0 %v1681
        %1737 = vmatprep.subr.mxu0 0.0
        %1738 = vmatpush2.msra.mxu0 %v1666
        %1739 = vmatprep.subr.mxu0 0.0
        %1740 = vmatpush2.msra.mxu0 %v1665
        %1741 = vmatprep.subr.mxu0 0.0
        %1742 = vmatpush2.msra.mxu0 %v1664
        %1743 = vmatprep.subr.mxu0 0.0
        %1744 = vmatpush2.msra.mxu0 %v1663
        %1745 = vmatprep.subr.mxu0 0.0
        %1746 = vmatpush2.msra.mxu0 %v1662
        %1747 = vmatprep.mubr.f32.mxu0 %v1678
        %1748 = vmatmul.mubr.f32.gmra.mxu0 %v1672
        %v1749 = vpop.f32.mrf.mxu0
        %v1750 = vadd.f32 0.0, %v1749
        %v1751 = vpop.f32.mrf.mxu0
        %1752 = vdwg.mxu0
        %v1753 = vadd.f32 %v1642, %v1750
        %s1754 = scalar_lea.vmem [#allocation2], 16
        %v1755 = vld [vmem:[%s1754] ss:$8 sm:$0x3]
        %s1756 = scalar_lea.vmem %s3, 1408
        %v1757 = vld [vmem:[%s1756] sm:$0xff]
        %v1758 = vld [vmem:[%s1756 + $0x8] sm:$0xff]
        %v1759 = vld [vmem:[%s1756 + $0x10] sm:$0xff]
        %v1760 = vld [vmem:[%s1756 + $0x18] sm:$0xff]
        %v1761 = vld [vmem:[%s1756 + $0x20] sm:$0xff]
        %v1762 = vld [vmem:[%s1756 + $0x28] sm:$0xff]
        %v1763 = vld [vmem:[%s1756 + $0x30] sm:$0xff]
        %v1764 = vld [vmem:[%s1756 + $0x38] sm:$0xff]
        %v1765 = vld [vmem:[%s1756 + $0x40] sm:$0xff]
        %v1766 = vld [vmem:[%s1756 + $0x48] sm:$0xff]
        %v1767 = vld [vmem:[%s1756 + $0x50] sm:$0xff]
        %v1768 = vld [vmem:[%s1756 + $0x58] sm:$0xff]
        %v1769 = vld [vmem:[%s1756 + $0x60] sm:$0xff]
        %v1770 = vld [vmem:[%s1756 + $0x68] sm:$0xff]
        %v1771 = vld [vmem:[%s1756 + $0x70] sm:$0xff]
        %v1772 = vld [vmem:[%s1756 + $0x78] sm:$0xff]
        %v1773 = vld [vmem:[%s1756 + $0x80] sm:$0xff]
        %v1774 = vld [vmem:[%s1756 + $0x88] sm:$0xff]
        %v1775 = vld [vmem:[%s1756 + $0x90] sm:$0xff]
        %v1776 = vld [vmem:[%s1756 + $0x98] sm:$0xff]
        %v1777 = vld [vmem:[%s1756 + $0xa0] sm:$0xff]
        %v1778 = vld [vmem:[%s1756 + $0xa8] sm:$0x1]
        %v1780 = vlaneseq
        %v1781 = vshrl.u32 %v1780, 7
        %v1782 = vsub.s32 0, %v1781
        %v1783 = vrot.slane %v1755, %v1782
        %v1784 = vlaneseq
        %v1785 = vshrl.u32 %v1784, 7
        %v1786 = vsub.s32 1, %v1785
        %v1787 = vrot.slane %v1755, %v1786
        %v1789 = vsel %vm862, %v1787, 0
        %v1792 = vsel %vm902, %v1778, 0
        %1794 = vmatprep.subr.mxu0 0.0
        %1795 = vmatpush1.msra.mxu0 %v1772
        %1796 = vmatprep.subr.mxu0 0.0
        %1797 = vmatpush1.msra.mxu0 %v1771
        %1798 = vmatprep.subr.mxu0 0.0
        %1799 = vmatpush1.msra.mxu0 %v1770
        %1800 = vmatprep.subr.mxu0 0.0
        %1801 = vmatpush1.msra.mxu0 %v1769
        %1802 = vmatprep.subr.mxu0 0.0
        %1803 = vmatpush1.msra.mxu0 %v1768
        %1804 = vmatprep.subr.mxu0 0.0
        %1805 = vmatpush1.msra.mxu0 %v1767
        %1806 = vmatprep.subr.mxu0 0.0
        %1807 = vmatpush1.msra.mxu0 %v1766
        %1808 = vmatprep.subr.mxu0 0.0
        %1809 = vmatpush1.msra.mxu0 %v1765
        %1810 = vmatprep.subr.mxu0 0.0
        %1811 = vmatpush1.msra.mxu0 %v1764
        %1812 = vmatprep.subr.mxu0 0.0
        %1813 = vmatpush1.msra.mxu0 %v1763
        %1814 = vmatprep.subr.mxu0 0.0
        %1815 = vmatpush1.msra.mxu0 %v1762
        %1816 = vmatprep.subr.mxu0 0.0
        %1817 = vmatpush1.msra.mxu0 %v1761
        %1818 = vmatprep.subr.mxu0 0.0
        %1819 = vmatpush1.msra.mxu0 %v1760
        %1820 = vmatprep.subr.mxu0 0.0
        %1821 = vmatpush1.msra.mxu0 %v1759
        %1822 = vmatprep.subr.mxu0 0.0
        %1823 = vmatpush1.msra.mxu0 %v1758
        %1824 = vmatprep.subr.mxu0 0.0
        %1825 = vmatpush1.msra.mxu0 %v1757
        %1826 = vmatprep.subr.mxu0 0.0
        %1827 = vmatpush2.msra.mxu0 0.0
        %1828 = vmatprep.subr.mxu0 0.0
        %1829 = vmatpush2.msra.mxu0 0.0
        %1830 = vmatprep.subr.mxu0 0.0
        %1831 = vmatpush2.msra.mxu0 0.0
        %1832 = vmatprep.subr.mxu0 0.0
        %1833 = vmatpush2.msra.mxu0 0.0
        %1834 = vmatprep.subr.mxu0 0.0
        %1835 = vmatpush2.msra.mxu0 0.0
        %1836 = vmatprep.subr.mxu0 0.0
        %1837 = vmatpush2.msra.mxu0 0.0
        %1838 = vmatprep.subr.mxu0 0.0
        %1839 = vmatpush2.msra.mxu0 0.0
        %1840 = vmatprep.subr.mxu0 0.0
        %1841 = vmatpush2.msra.mxu0 0.0
        %1842 = vmatprep.subr.mxu0 0.0
        %1843 = vmatpush2.msra.mxu0 0.0
        %1844 = vmatprep.subr.mxu0 0.0
        %1845 = vmatpush2.msra.mxu0 0.0
        %1846 = vmatprep.subr.mxu0 0.0
        %1847 = vmatpush2.msra.mxu0 %v1792
        %1848 = vmatprep.subr.mxu0 0.0
        %1849 = vmatpush2.msra.mxu0 %v1777
        %1850 = vmatprep.subr.mxu0 0.0
        %1851 = vmatpush2.msra.mxu0 %v1776
        %1852 = vmatprep.subr.mxu0 0.0
        %1853 = vmatpush2.msra.mxu0 %v1775
        %1854 = vmatprep.subr.mxu0 0.0
        %1855 = vmatpush2.msra.mxu0 %v1774
        %1856 = vmatprep.subr.mxu0 0.0
        %1857 = vmatpush2.msra.mxu0 %v1773
        %1858 = vmatprep.mubr.f32.mxu0 %v1789
        %1859 = vmatmul.mubr.f32.gmra.mxu0 %v1783
        %v1860 = vpop.f32.mrf.mxu0
        %v1861 = vadd.f32 0.0, %v1860
        %v1862 = vpop.f32.mrf.mxu0
        %1863 = vdwg.mxu0
        %v1864 = vadd.f32 %v1753, %v1861
        %s1865 = scalar_lea.vmem [#allocation2], 17
        %v1866 = vld [vmem:[%s1865] ss:$8 sm:$0x3]
        %s1867 = scalar_lea.vmem %s3, 1584
        %v1868 = vld [vmem:[%s1867] sm:$0xff]
        %v1869 = vld [vmem:[%s1867 + $0x8] sm:$0xff]
        %v1870 = vld [vmem:[%s1867 + $0x10] sm:$0xff]
        %v1871 = vld [vmem:[%s1867 + $0x18] sm:$0xff]
        %v1872 = vld [vmem:[%s1867 + $0x20] sm:$0xff]
        %v1873 = vld [vmem:[%s1867 + $0x28] sm:$0xff]
        %v1874 = vld [vmem:[%s1867 + $0x30] sm:$0xff]
        %v1875 = vld [vmem:[%s1867 + $0x38] sm:$0xff]
        %v1876 = vld [vmem:[%s1867 + $0x40] sm:$0xff]
        %v1877 = vld [vmem:[%s1867 + $0x48] sm:$0xff]
        %v1878 = vld [vmem:[%s1867 + $0x50] sm:$0xff]
        %v1879 = vld [vmem:[%s1867 + $0x58] sm:$0xff]
        %v1880 = vld [vmem:[%s1867 + $0x60] sm:$0xff]
        %v1881 = vld [vmem:[%s1867 + $0x68] sm:$0xff]
        %v1882 = vld [vmem:[%s1867 + $0x70] sm:$0xff]
        %v1883 = vld [vmem:[%s1867 + $0x78] sm:$0xff]
        %v1884 = vld [vmem:[%s1867 + $0x80] sm:$0xff]
        %v1885 = vld [vmem:[%s1867 + $0x88] sm:$0xff]
        %v1886 = vld [vmem:[%s1867 + $0x90] sm:$0xff]
        %v1887 = vld [vmem:[%s1867 + $0x98] sm:$0xff]
        %v1888 = vld [vmem:[%s1867 + $0xa0] sm:$0xff]
        %v1889 = vld [vmem:[%s1867 + $0xa8] sm:$0x1]
        %v1891 = vlaneseq
        %v1892 = vshrl.u32 %v1891, 7
        %v1893 = vsub.s32 0, %v1892
        %v1894 = vrot.slane %v1866, %v1893
        %v1895 = vlaneseq
        %v1896 = vshrl.u32 %v1895, 7
        %v1897 = vsub.s32 1, %v1896
        %v1898 = vrot.slane %v1866, %v1897
        %v1900 = vsel %vm862, %v1898, 0
        %v1903 = vsel %vm902, %v1889, 0
        %1905 = vmatprep.subr.mxu0 0.0
        %1906 = vmatpush1.msra.mxu0 %v1883
        %1907 = vmatprep.subr.mxu0 0.0
        %1908 = vmatpush1.msra.mxu0 %v1882
        %1909 = vmatprep.subr.mxu0 0.0
        %1910 = vmatpush1.msra.mxu0 %v1881
        %1911 = vmatprep.subr.mxu0 0.0
        %1912 = vmatpush1.msra.mxu0 %v1880
        %1913 = vmatprep.subr.mxu0 0.0
        %1914 = vmatpush1.msra.mxu0 %v1879
        %1915 = vmatprep.subr.mxu0 0.0
        %1916 = vmatpush1.msra.mxu0 %v1878
        %1917 = vmatprep.subr.mxu0 0.0
        %1918 = vmatpush1.msra.mxu0 %v1877
        %1919 = vmatprep.subr.mxu0 0.0
        %1920 = vmatpush1.msra.mxu0 %v1876
        %1921 = vmatprep.subr.mxu0 0.0
        %1922 = vmatpush1.msra.mxu0 %v1875
        %1923 = vmatprep.subr.mxu0 0.0
        %1924 = vmatpush1.msra.mxu0 %v1874
        %1925 = vmatprep.subr.mxu0 0.0
        %1926 = vmatpush1.msra.mxu0 %v1873
        %1927 = vmatprep.subr.mxu0 0.0
        %1928 = vmatpush1.msra.mxu0 %v1872
        %1929 = vmatprep.subr.mxu0 0.0
        %1930 = vmatpush1.msra.mxu0 %v1871
        %1931 = vmatprep.subr.mxu0 0.0
        %1932 = vmatpush1.msra.mxu0 %v1870
        %1933 = vmatprep.subr.mxu0 0.0
        %1934 = vmatpush1.msra.mxu0 %v1869
        %1935 = vmatprep.subr.mxu0 0.0
        %1936 = vmatpush1.msra.mxu0 %v1868
        %1937 = vmatprep.subr.mxu0 0.0
        %1938 = vmatpush2.msra.mxu0 0.0
        %1939 = vmatprep.subr.mxu0 0.0
        %1940 = vmatpush2.msra.mxu0 0.0
        %1941 = vmatprep.subr.mxu0 0.0
        %1942 = vmatpush2.msra.mxu0 0.0
        %1943 = vmatprep.subr.mxu0 0.0
        %1944 = vmatpush2.msra.mxu0 0.0
        %1945 = vmatprep.subr.mxu0 0.0
        %1946 = vmatpush2.msra.mxu0 0.0
        %1947 = vmatprep.subr.mxu0 0.0
        %1948 = vmatpush2.msra.mxu0 0.0
        %1949 = vmatprep.subr.mxu0 0.0
        %1950 = vmatpush2.msra.mxu0 0.0
        %1951 = vmatprep.subr.mxu0 0.0
        %1952 = vmatpush2.msra.mxu0 0.0
        %1953 = vmatprep.subr.mxu0 0.0
        %1954 = vmatpush2.msra.mxu0 0.0
        %1955 = vmatprep.subr.mxu0 0.0
        %1956 = vmatpush2.msra.mxu0 0.0
        %1957 = vmatprep.subr.mxu0 0.0
        %1958 = vmatpush2.msra.mxu0 %v1903
        %1959 = vmatprep.subr.mxu0 0.0
        %1960 = vmatpush2.msra.mxu0 %v1888
        %1961 = vmatprep.subr.mxu0 0.0
        %1962 = vmatpush2.msra.mxu0 %v1887
        %1963 = vmatprep.subr.mxu0 0.0
        %1964 = vmatpush2.msra.mxu0 %v1886
        %1965 = vmatprep.subr.mxu0 0.0
        %1966 = vmatpush2.msra.mxu0 %v1885
        %1967 = vmatprep.subr.mxu0 0.0
        %1968 = vmatpush2.msra.mxu0 %v1884
        %1969 = vmatprep.mubr.f32.mxu0 %v1900
        %1970 = vmatmul.mubr.f32.gmra.mxu0 %v1894
        %v1971 = vpop.f32.mrf.mxu0
        %v1972 = vadd.f32 0.0, %v1971
        %v1973 = vpop.f32.mrf.mxu0
        %1974 = vdwg.mxu0
        %v1975 = vadd.f32 %v1864, %v1972
        %s1976 = scalar_lea.vmem [#allocation2], 18
        %v1977 = vld [vmem:[%s1976] ss:$8 sm:$0x3]
        %s1978 = scalar_lea.vmem %s3, 1760
        %v1979 = vld [vmem:[%s1978] sm:$0xff]
        %v1980 = vld [vmem:[%s1978 + $0x8] sm:$0xff]
        %v1981 = vld [vmem:[%s1978 + $0x10] sm:$0xff]
        %v1982 = vld [vmem:[%s1978 + $0x18] sm:$0xff]
        %v1983 = vld [vmem:[%s1978 + $0x20] sm:$0xff]
        %v1984 = vld [vmem:[%s1978 + $0x28] sm:$0xff]
        %v1985 = vld [vmem:[%s1978 + $0x30] sm:$0xff]
        %v1986 = vld [vmem:[%s1978 + $0x38] sm:$0xff]
        %v1987 = vld [vmem:[%s1978 + $0x40] sm:$0xff]
        %v1988 = vld [vmem:[%s1978 + $0x48] sm:$0xff]
        %v1989 = vld [vmem:[%s1978 + $0x50] sm:$0xff]
        %v1990 = vld [vmem:[%s1978 + $0x58] sm:$0xff]
        %v1991 = vld [vmem:[%s1978 + $0x60] sm:$0xff]
        %v1992 = vld [vmem:[%s1978 + $0x68] sm:$0xff]
        %v1993 = vld [vmem:[%s1978 + $0x70] sm:$0xff]
        %v1994 = vld [vmem:[%s1978 + $0x78] sm:$0xff]
        %v1995 = vld [vmem:[%s1978 + $0x80] sm:$0xff]
        %v1996 = vld [vmem:[%s1978 + $0x88] sm:$0xff]
        %v1997 = vld [vmem:[%s1978 + $0x90] sm:$0xff]
        %v1998 = vld [vmem:[%s1978 + $0x98] sm:$0xff]
        %v1999 = vld [vmem:[%s1978 + $0xa0] sm:$0xff]
        %v2000 = vld [vmem:[%s1978 + $0xa8] sm:$0x1]
        %v2002 = vlaneseq
        %v2003 = vshrl.u32 %v2002, 7
        %v2004 = vsub.s32 0, %v2003
        %v2005 = vrot.slane %v1977, %v2004
        %v2006 = vlaneseq
        %v2007 = vshrl.u32 %v2006, 7
        %v2008 = vsub.s32 1, %v2007
        %v2009 = vrot.slane %v1977, %v2008
        %v2011 = vsel %vm862, %v2009, 0
        %v2014 = vsel %vm902, %v2000, 0
        %2016 = vmatprep.subr.mxu0 0.0
        %2017 = vmatpush1.msra.mxu0 %v1994
        %2018 = vmatprep.subr.mxu0 0.0
        %2019 = vmatpush1.msra.mxu0 %v1993
        %2020 = vmatprep.subr.mxu0 0.0
        %2021 = vmatpush1.msra.mxu0 %v1992
        %2022 = vmatprep.subr.mxu0 0.0
        %2023 = vmatpush1.msra.mxu0 %v1991
        %2024 = vmatprep.subr.mxu0 0.0
        %2025 = vmatpush1.msra.mxu0 %v1990
        %2026 = vmatprep.subr.mxu0 0.0
        %2027 = vmatpush1.msra.mxu0 %v1989
        %2028 = vmatprep.subr.mxu0 0.0
        %2029 = vmatpush1.msra.mxu0 %v1988
        %2030 = vmatprep.subr.mxu0 0.0
        %2031 = vmatpush1.msra.mxu0 %v1987
        %2032 = vmatprep.subr.mxu0 0.0
        %2033 = vmatpush1.msra.mxu0 %v1986
        %2034 = vmatprep.subr.mxu0 0.0
        %2035 = vmatpush1.msra.mxu0 %v1985
        %2036 = vmatprep.subr.mxu0 0.0
        %2037 = vmatpush1.msra.mxu0 %v1984
        %2038 = vmatprep.subr.mxu0 0.0
        %2039 = vmatpush1.msra.mxu0 %v1983
        %2040 = vmatprep.subr.mxu0 0.0
        %2041 = vmatpush1.msra.mxu0 %v1982
        %2042 = vmatprep.subr.mxu0 0.0
        %2043 = vmatpush1.msra.mxu0 %v1981
        %2044 = vmatprep.subr.mxu0 0.0
        %2045 = vmatpush1.msra.mxu0 %v1980
        %2046 = vmatprep.subr.mxu0 0.0
        %2047 = vmatpush1.msra.mxu0 %v1979
        %2048 = vmatprep.subr.mxu0 0.0
        %2049 = vmatpush2.msra.mxu0 0.0
        %2050 = vmatprep.subr.mxu0 0.0
        %2051 = vmatpush2.msra.mxu0 0.0
        %2052 = vmatprep.subr.mxu0 0.0
        %2053 = vmatpush2.msra.mxu0 0.0
        %2054 = vmatprep.subr.mxu0 0.0
        %2055 = vmatpush2.msra.mxu0 0.0
        %2056 = vmatprep.subr.mxu0 0.0
        %2057 = vmatpush2.msra.mxu0 0.0
        %2058 = vmatprep.subr.mxu0 0.0
        %2059 = vmatpush2.msra.mxu0 0.0
        %2060 = vmatprep.subr.mxu0 0.0
        %2061 = vmatpush2.msra.mxu0 0.0
        %2062 = vmatprep.subr.mxu0 0.0
        %2063 = vmatpush2.msra.mxu0 0.0
        %2064 = vmatprep.subr.mxu0 0.0
        %2065 = vmatpush2.msra.mxu0 0.0
        %2066 = vmatprep.subr.mxu0 0.0
        %2067 = vmatpush2.msra.mxu0 0.0
        %2068 = vmatprep.subr.mxu0 0.0
        %2069 = vmatpush2.msra.mxu0 %v2014
        %2070 = vmatprep.subr.mxu0 0.0
        %2071 = vmatpush2.msra.mxu0 %v1999
        %2072 = vmatprep.subr.mxu0 0.0
        %2073 = vmatpush2.msra.mxu0 %v1998
        %2074 = vmatprep.subr.mxu0 0.0
        %2075 = vmatpush2.msra.mxu0 %v1997
        %2076 = vmatprep.subr.mxu0 0.0
        %2077 = vmatpush2.msra.mxu0 %v1996
        %2078 = vmatprep.subr.mxu0 0.0
        %2079 = vmatpush2.msra.mxu0 %v1995
        %2080 = vmatprep.mubr.f32.mxu0 %v2011
        %2081 = vmatmul.mubr.f32.gmra.mxu0 %v2005
        %v2082 = vpop.f32.mrf.mxu0
        %v2083 = vadd.f32 0.0, %v2082
        %v2084 = vpop.f32.mrf.mxu0
        %2085 = vdwg.mxu0
        %v2086 = vadd.f32 %v1975, %v2083
        %s2087 = scalar_lea.vmem [#allocation2], 19
        %v2088 = vld [vmem:[%s2087] ss:$8 sm:$0x3]
        %s2089 = scalar_lea.vmem %s3, 1936
        %v2090 = vld [vmem:[%s2089] sm:$0xff]
        %v2091 = vld [vmem:[%s2089 + $0x8] sm:$0xff]
        %v2092 = vld [vmem:[%s2089 + $0x10] sm:$0xff]
        %v2093 = vld [vmem:[%s2089 + $0x18] sm:$0xff]
        %v2094 = vld [vmem:[%s2089 + $0x20] sm:$0xff]
        %v2095 = vld [vmem:[%s2089 + $0x28] sm:$0xff]
        %v2096 = vld [vmem:[%s2089 + $0x30] sm:$0xff]
        %v2097 = vld [vmem:[%s2089 + $0x38] sm:$0xff]
        %v2098 = vld [vmem:[%s2089 + $0x40] sm:$0xff]
        %v2099 = vld [vmem:[%s2089 + $0x48] sm:$0xff]
        %v2100 = vld [vmem:[%s2089 + $0x50] sm:$0xff]
        %v2101 = vld [vmem:[%s2089 + $0x58] sm:$0xff]
        %v2102 = vld [vmem:[%s2089 + $0x60] sm:$0xff]
        %v2103 = vld [vmem:[%s2089 + $0x68] sm:$0xff]
        %v2104 = vld [vmem:[%s2089 + $0x70] sm:$0xff]
        %v2105 = vld [vmem:[%s2089 + $0x78] sm:$0xff]
        %v2106 = vld [vmem:[%s2089 + $0x80] sm:$0xff]
        %v2107 = vld [vmem:[%s2089 + $0x88] sm:$0xff]
        %v2108 = vld [vmem:[%s2089 + $0x90] sm:$0xff]
        %v2109 = vld [vmem:[%s2089 + $0x98] sm:$0xff]
        %v2110 = vld [vmem:[%s2089 + $0xa0] sm:$0xff]
        %v2111 = vld [vmem:[%s2089 + $0xa8] sm:$0x1]
        %v2113 = vlaneseq
        %v2114 = vshrl.u32 %v2113, 7
        %v2115 = vsub.s32 0, %v2114
        %v2116 = vrot.slane %v2088, %v2115
        %v2117 = vlaneseq
        %v2118 = vshrl.u32 %v2117, 7
        %v2119 = vsub.s32 1, %v2118
        %v2120 = vrot.slane %v2088, %v2119
        %v2122 = vsel %vm862, %v2120, 0
        %v2125 = vsel %vm902, %v2111, 0
        %2127 = vmatprep.subr.mxu0 0.0
        %2128 = vmatpush1.msra.mxu0 %v2105
        %2129 = vmatprep.subr.mxu0 0.0
        %2130 = vmatpush1.msra.mxu0 %v2104
        %2131 = vmatprep.subr.mxu0 0.0
        %2132 = vmatpush1.msra.mxu0 %v2103
        %2133 = vmatprep.subr.mxu0 0.0
        %2134 = vmatpush1.msra.mxu0 %v2102
        %2135 = vmatprep.subr.mxu0 0.0
        %2136 = vmatpush1.msra.mxu0 %v2101
        %2137 = vmatprep.subr.mxu0 0.0
        %2138 = vmatpush1.msra.mxu0 %v2100
        %2139 = vmatprep.subr.mxu0 0.0
        %2140 = vmatpush1.msra.mxu0 %v2099
        %2141 = vmatprep.subr.mxu0 0.0
        %2142 = vmatpush1.msra.mxu0 %v2098
        %2143 = vmatprep.subr.mxu0 0.0
        %2144 = vmatpush1.msra.mxu0 %v2097
        %2145 = vmatprep.subr.mxu0 0.0
        %2146 = vmatpush1.msra.mxu0 %v2096
        %2147 = vmatprep.subr.mxu0 0.0
        %2148 = vmatpush1.msra.mxu0 %v2095
        %2149 = vmatprep.subr.mxu0 0.0
        %2150 = vmatpush1.msra.mxu0 %v2094
        %2151 = vmatprep.subr.mxu0 0.0
        %2152 = vmatpush1.msra.mxu0 %v2093
        %2153 = vmatprep.subr.mxu0 0.0
        %2154 = vmatpush1.msra.mxu0 %v2092
        %2155 = vmatprep.subr.mxu0 0.0
        %2156 = vmatpush1.msra.mxu0 %v2091
        %2157 = vmatprep.subr.mxu0 0.0
        %2158 = vmatpush1.msra.mxu0 %v2090
        %2159 = vmatprep.subr.mxu0 0.0
        %2160 = vmatpush2.msra.mxu0 0.0
        %2161 = vmatprep.subr.mxu0 0.0
        %2162 = vmatpush2.msra.mxu0 0.0
        %2163 = vmatprep.subr.mxu0 0.0
        %2164 = vmatpush2.msra.mxu0 0.0
        %2165 = vmatprep.subr.mxu0 0.0
        %2166 = vmatpush2.msra.mxu0 0.0
        %2167 = vmatprep.subr.mxu0 0.0
        %2168 = vmatpush2.msra.mxu0 0.0
        %2169 = vmatprep.subr.mxu0 0.0
        %2170 = vmatpush2.msra.mxu0 0.0
        %2171 = vmatprep.subr.mxu0 0.0
        %2172 = vmatpush2.msra.mxu0 0.0
        %2173 = vmatprep.subr.mxu0 0.0
        %2174 = vmatpush2.msra.mxu0 0.0
        %2175 = vmatprep.subr.mxu0 0.0
        %2176 = vmatpush2.msra.mxu0 0.0
        %2177 = vmatprep.subr.mxu0 0.0
        %2178 = vmatpush2.msra.mxu0 0.0
        %2179 = vmatprep.subr.mxu0 0.0
        %2180 = vmatpush2.msra.mxu0 %v2125
        %2181 = vmatprep.subr.mxu0 0.0
        %2182 = vmatpush2.msra.mxu0 %v2110
        %2183 = vmatprep.subr.mxu0 0.0
        %2184 = vmatpush2.msra.mxu0 %v2109
        %2185 = vmatprep.subr.mxu0 0.0
        %2186 = vmatpush2.msra.mxu0 %v2108
        %2187 = vmatprep.subr.mxu0 0.0
        %2188 = vmatpush2.msra.mxu0 %v2107
        %2189 = vmatprep.subr.mxu0 0.0
        %2190 = vmatpush2.msra.mxu0 %v2106
        %2191 = vmatprep.mubr.f32.mxu0 %v2122
        %2192 = vmatmul.mubr.f32.gmra.mxu0 %v2116
        %v2193 = vpop.f32.mrf.mxu0
        %v2194 = vadd.f32 0.0, %v2193
        %v2195 = vpop.f32.mrf.mxu0
        %2196 = vdwg.mxu0
        %v2197 = vadd.f32 %v2086, %v2194
        %s2198 = scalar_lea.vmem [#allocation2], 20
        %v2199 = vld [vmem:[%s2198] ss:$8 sm:$0x3]
        %s2200 = scalar_lea.vmem %s3, 2112
        %v2201 = vld [vmem:[%s2200] sm:$0xff]
        %v2202 = vld [vmem:[%s2200 + $0x8] sm:$0xff]
        %v2203 = vld [vmem:[%s2200 + $0x10] sm:$0xff]
        %v2204 = vld [vmem:[%s2200 + $0x18] sm:$0xff]
        %v2205 = vld [vmem:[%s2200 + $0x20] sm:$0xff]
        %v2206 = vld [vmem:[%s2200 + $0x28] sm:$0xff]
        %v2207 = vld [vmem:[%s2200 + $0x30] sm:$0xff]
        %v2208 = vld [vmem:[%s2200 + $0x38] sm:$0xff]
        %v2209 = vld [vmem:[%s2200 + $0x40] sm:$0xff]
        %v2210 = vld [vmem:[%s2200 + $0x48] sm:$0xff]
        %v2211 = vld [vmem:[%s2200 + $0x50] sm:$0xff]
        %v2212 = vld [vmem:[%s2200 + $0x58] sm:$0xff]
        %v2213 = vld [vmem:[%s2200 + $0x60] sm:$0xff]
        %v2214 = vld [vmem:[%s2200 + $0x68] sm:$0xff]
        %v2215 = vld [vmem:[%s2200 + $0x70] sm:$0xff]
        %v2216 = vld [vmem:[%s2200 + $0x78] sm:$0xff]
        %v2217 = vld [vmem:[%s2200 + $0x80] sm:$0xff]
        %v2218 = vld [vmem:[%s2200 + $0x88] sm:$0xff]
        %v2219 = vld [vmem:[%s2200 + $0x90] sm:$0xff]
        %v2220 = vld [vmem:[%s2200 + $0x98] sm:$0xff]
        %v2221 = vld [vmem:[%s2200 + $0xa0] sm:$0xff]
        %v2222 = vld [vmem:[%s2200 + $0xa8] sm:$0x1]
        %v2224 = vlaneseq
        %v2225 = vshrl.u32 %v2224, 7
        %v2226 = vsub.s32 0, %v2225
        %v2227 = vrot.slane %v2199, %v2226
        %v2228 = vlaneseq
        %v2229 = vshrl.u32 %v2228, 7
        %v2230 = vsub.s32 1, %v2229
        %v2231 = vrot.slane %v2199, %v2230
        %v2233 = vsel %vm862, %v2231, 0
        %v2236 = vsel %vm902, %v2222, 0
        %2238 = vmatprep.subr.mxu0 0.0
        %2239 = vmatpush1.msra.mxu0 %v2216
        %2240 = vmatprep.subr.mxu0 0.0
        %2241 = vmatpush1.msra.mxu0 %v2215
        %2242 = vmatprep.subr.mxu0 0.0
        %2243 = vmatpush1.msra.mxu0 %v2214
        %2244 = vmatprep.subr.mxu0 0.0
        %2245 = vmatpush1.msra.mxu0 %v2213
        %2246 = vmatprep.subr.mxu0 0.0
        %2247 = vmatpush1.msra.mxu0 %v2212
        %2248 = vmatprep.subr.mxu0 0.0
        %2249 = vmatpush1.msra.mxu0 %v2211
        %2250 = vmatprep.subr.mxu0 0.0
        %2251 = vmatpush1.msra.mxu0 %v2210
        %2252 = vmatprep.subr.mxu0 0.0
        %2253 = vmatpush1.msra.mxu0 %v2209
        %2254 = vmatprep.subr.mxu0 0.0
        %2255 = vmatpush1.msra.mxu0 %v2208
        %2256 = vmatprep.subr.mxu0 0.0
        %2257 = vmatpush1.msra.mxu0 %v2207
        %2258 = vmatprep.subr.mxu0 0.0
        %2259 = vmatpush1.msra.mxu0 %v2206
        %2260 = vmatprep.subr.mxu0 0.0
        %2261 = vmatpush1.msra.mxu0 %v2205
        %2262 = vmatprep.subr.mxu0 0.0
        %2263 = vmatpush1.msra.mxu0 %v2204
        %2264 = vmatprep.subr.mxu0 0.0
        %2265 = vmatpush1.msra.mxu0 %v2203
        %2266 = vmatprep.subr.mxu0 0.0
        %2267 = vmatpush1.msra.mxu0 %v2202
        %2268 = vmatprep.subr.mxu0 0.0
        %2269 = vmatpush1.msra.mxu0 %v2201
        %2270 = vmatprep.subr.mxu0 0.0
        %2271 = vmatpush2.msra.mxu0 0.0
        %2272 = vmatprep.subr.mxu0 0.0
        %2273 = vmatpush2.msra.mxu0 0.0
        %2274 = vmatprep.subr.mxu0 0.0
        %2275 = vmatpush2.msra.mxu0 0.0
        %2276 = vmatprep.subr.mxu0 0.0
        %2277 = vmatpush2.msra.mxu0 0.0
        %2278 = vmatprep.subr.mxu0 0.0
        %2279 = vmatpush2.msra.mxu0 0.0
        %2280 = vmatprep.subr.mxu0 0.0
        %2281 = vmatpush2.msra.mxu0 0.0
        %2282 = vmatprep.subr.mxu0 0.0
        %2283 = vmatpush2.msra.mxu0 0.0
        %2284 = vmatprep.subr.mxu0 0.0
        %2285 = vmatpush2.msra.mxu0 0.0
        %2286 = vmatprep.subr.mxu0 0.0
        %2287 = vmatpush2.msra.mxu0 0.0
        %2288 = vmatprep.subr.mxu0 0.0
        %2289 = vmatpush2.msra.mxu0 0.0
        %2290 = vmatprep.subr.mxu0 0.0
        %2291 = vmatpush2.msra.mxu0 %v2236
        %2292 = vmatprep.subr.mxu0 0.0
        %2293 = vmatpush2.msra.mxu0 %v2221
        %2294 = vmatprep.subr.mxu0 0.0
        %2295 = vmatpush2.msra.mxu0 %v2220
        %2296 = vmatprep.subr.mxu0 0.0
        %2297 = vmatpush2.msra.mxu0 %v2219
        %2298 = vmatprep.subr.mxu0 0.0
        %2299 = vmatpush2.msra.mxu0 %v2218
        %2300 = vmatprep.subr.mxu0 0.0
        %2301 = vmatpush2.msra.mxu0 %v2217
        %2302 = vmatprep.mubr.f32.mxu0 %v2233
        %2303 = vmatmul.mubr.f32.gmra.mxu0 %v2227
        %v2304 = vpop.f32.mrf.mxu0
        %v2305 = vadd.f32 0.0, %v2304
        %v2306 = vpop.f32.mrf.mxu0
        %2307 = vdwg.mxu0
        %v2308 = vadd.f32 %v2197, %v2305
        %s2309 = scalar_lea.vmem [#allocation2], 21
        %v2310 = vld [vmem:[%s2309] ss:$8 sm:$0x3]
        %s2311 = scalar_lea.vmem %s3, 2288
        %v2312 = vld [vmem:[%s2311] sm:$0xff]
        %v2313 = vld [vmem:[%s2311 + $0x8] sm:$0xff]
        %v2314 = vld [vmem:[%s2311 + $0x10] sm:$0xff]
        %v2315 = vld [vmem:[%s2311 + $0x18] sm:$0xff]
        %v2316 = vld [vmem:[%s2311 + $0x20] sm:$0xff]
        %v2317 = vld [vmem:[%s2311 + $0x28] sm:$0xff]
        %v2318 = vld [vmem:[%s2311 + $0x30] sm:$0xff]
        %v2319 = vld [vmem:[%s2311 + $0x38] sm:$0xff]
        %v2320 = vld [vmem:[%s2311 + $0x40] sm:$0xff]
        %v2321 = vld [vmem:[%s2311 + $0x48] sm:$0xff]
        %v2322 = vld [vmem:[%s2311 + $0x50] sm:$0xff]
        %v2323 = vld [vmem:[%s2311 + $0x58] sm:$0xff]
        %v2324 = vld [vmem:[%s2311 + $0x60] sm:$0xff]
        %v2325 = vld [vmem:[%s2311 + $0x68] sm:$0xff]
        %v2326 = vld [vmem:[%s2311 + $0x70] sm:$0xff]
        %v2327 = vld [vmem:[%s2311 + $0x78] sm:$0xff]
        %v2328 = vld [vmem:[%s2311 + $0x80] sm:$0xff]
        %v2329 = vld [vmem:[%s2311 + $0x88] sm:$0xff]
        %v2330 = vld [vmem:[%s2311 + $0x90] sm:$0xff]
        %v2331 = vld [vmem:[%s2311 + $0x98] sm:$0xff]
        %v2332 = vld [vmem:[%s2311 + $0xa0] sm:$0xff]
        %v2333 = vld [vmem:[%s2311 + $0xa8] sm:$0x1]
        %v2335 = vlaneseq
        %v2336 = vshrl.u32 %v2335, 7
        %v2337 = vsub.s32 0, %v2336
        %v2338 = vrot.slane %v2310, %v2337
        %v2339 = vlaneseq
        %v2340 = vshrl.u32 %v2339, 7
        %v2341 = vsub.s32 1, %v2340
        %v2342 = vrot.slane %v2310, %v2341
        %v2344 = vsel %vm862, %v2342, 0
        %v2347 = vsel %vm902, %v2333, 0
        %2349 = vmatprep.subr.mxu0 0.0
        %2350 = vmatpush1.msra.mxu0 %v2327
        %2351 = vmatprep.subr.mxu0 0.0
        %2352 = vmatpush1.msra.mxu0 %v2326
        %2353 = vmatprep.subr.mxu0 0.0
        %2354 = vmatpush1.msra.mxu0 %v2325
        %2355 = vmatprep.subr.mxu0 0.0
        %2356 = vmatpush1.msra.mxu0 %v2324
        %2357 = vmatprep.subr.mxu0 0.0
        %2358 = vmatpush1.msra.mxu0 %v2323
        %2359 = vmatprep.subr.mxu0 0.0
        %2360 = vmatpush1.msra.mxu0 %v2322
        %2361 = vmatprep.subr.mxu0 0.0
        %2362 = vmatpush1.msra.mxu0 %v2321
        %2363 = vmatprep.subr.mxu0 0.0
        %2364 = vmatpush1.msra.mxu0 %v2320
        %2365 = vmatprep.subr.mxu0 0.0
        %2366 = vmatpush1.msra.mxu0 %v2319
        %2367 = vmatprep.subr.mxu0 0.0
        %2368 = vmatpush1.msra.mxu0 %v2318
        %2369 = vmatprep.subr.mxu0 0.0
        %2370 = vmatpush1.msra.mxu0 %v2317
        %2371 = vmatprep.subr.mxu0 0.0
        %2372 = vmatpush1.msra.mxu0 %v2316
        %2373 = vmatprep.subr.mxu0 0.0
        %2374 = vmatpush1.msra.mxu0 %v2315
        %2375 = vmatprep.subr.mxu0 0.0
        %2376 = vmatpush1.msra.mxu0 %v2314
        %2377 = vmatprep.subr.mxu0 0.0
        %2378 = vmatpush1.msra.mxu0 %v2313
        %2379 = vmatprep.subr.mxu0 0.0
        %2380 = vmatpush1.msra.mxu0 %v2312
        %2381 = vmatprep.subr.mxu0 0.0
        %2382 = vmatpush2.msra.mxu0 0.0
        %2383 = vmatprep.subr.mxu0 0.0
        %2384 = vmatpush2.msra.mxu0 0.0
        %2385 = vmatprep.subr.mxu0 0.0
        %2386 = vmatpush2.msra.mxu0 0.0
        %2387 = vmatprep.subr.mxu0 0.0
        %2388 = vmatpush2.msra.mxu0 0.0
        %2389 = vmatprep.subr.mxu0 0.0
        %2390 = vmatpush2.msra.mxu0 0.0
        %2391 = vmatprep.subr.mxu0 0.0
        %2392 = vmatpush2.msra.mxu0 0.0
        %2393 = vmatprep.subr.mxu0 0.0
        %2394 = vmatpush2.msra.mxu0 0.0
        %2395 = vmatprep.subr.mxu0 0.0
        %2396 = vmatpush2.msra.mxu0 0.0
        %2397 = vmatprep.subr.mxu0 0.0
        %2398 = vmatpush2.msra.mxu0 0.0
        %2399 = vmatprep.subr.mxu0 0.0
        %2400 = vmatpush2.msra.mxu0 0.0
        %2401 = vmatprep.subr.mxu0 0.0
        %2402 = vmatpush2.msra.mxu0 %v2347
        %2403 = vmatprep.subr.mxu0 0.0
        %2404 = vmatpush2.msra.mxu0 %v2332
        %2405 = vmatprep.subr.mxu0 0.0
        %2406 = vmatpush2.msra.mxu0 %v2331
        %2407 = vmatprep.subr.mxu0 0.0
        %2408 = vmatpush2.msra.mxu0 %v2330
        %2409 = vmatprep.subr.mxu0 0.0
        %2410 = vmatpush2.msra.mxu0 %v2329
        %2411 = vmatprep.subr.mxu0 0.0
        %2412 = vmatpush2.msra.mxu0 %v2328
        %2413 = vmatprep.mubr.f32.mxu0 %v2344
        %2414 = vmatmul.mubr.f32.gmra.mxu0 %v2338
        %v2415 = vpop.f32.mrf.mxu0
        %v2416 = vadd.f32 0.0, %v2415
        %v2417 = vpop.f32.mrf.mxu0
        %2418 = vdwg.mxu0
        %v2419 = vadd.f32 %v2308, %v2416
        %s2420 = scalar_lea.vmem [#allocation2], 22
        %v2421 = vld [vmem:[%s2420] ss:$8 sm:$0x3]
        %s2422 = scalar_lea.vmem %s3, 2464
        %v2423 = vld [vmem:[%s2422] sm:$0xff]
        %v2424 = vld [vmem:[%s2422 + $0x8] sm:$0xff]
        %v2425 = vld [vmem:[%s2422 + $0x10] sm:$0xff]
        %v2426 = vld [vmem:[%s2422 + $0x18] sm:$0xff]
        %v2427 = vld [vmem:[%s2422 + $0x20] sm:$0xff]
        %v2428 = vld [vmem:[%s2422 + $0x28] sm:$0xff]
        %v2429 = vld [vmem:[%s2422 + $0x30] sm:$0xff]
        %v2430 = vld [vmem:[%s2422 + $0x38] sm:$0xff]
        %v2431 = vld [vmem:[%s2422 + $0x40] sm:$0xff]
        %v2432 = vld [vmem:[%s2422 + $0x48] sm:$0xff]
        %v2433 = vld [vmem:[%s2422 + $0x50] sm:$0xff]
        %v2434 = vld [vmem:[%s2422 + $0x58] sm:$0xff]
        %v2435 = vld [vmem:[%s2422 + $0x60] sm:$0xff]
        %v2436 = vld [vmem:[%s2422 + $0x68] sm:$0xff]
        %v2437 = vld [vmem:[%s2422 + $0x70] sm:$0xff]
        %v2438 = vld [vmem:[%s2422 + $0x78] sm:$0xff]
        %v2439 = vld [vmem:[%s2422 + $0x80] sm:$0xff]
        %v2440 = vld [vmem:[%s2422 + $0x88] sm:$0xff]
        %v2441 = vld [vmem:[%s2422 + $0x90] sm:$0xff]
        %v2442 = vld [vmem:[%s2422 + $0x98] sm:$0xff]
        %v2443 = vld [vmem:[%s2422 + $0xa0] sm:$0xff]
        %v2444 = vld [vmem:[%s2422 + $0xa8] sm:$0x1]
        %v2446 = vlaneseq
        %v2447 = vshrl.u32 %v2446, 7
        %v2448 = vsub.s32 0, %v2447
        %v2449 = vrot.slane %v2421, %v2448
        %v2450 = vlaneseq
        %v2451 = vshrl.u32 %v2450, 7
        %v2452 = vsub.s32 1, %v2451
        %v2453 = vrot.slane %v2421, %v2452
        %v2455 = vsel %vm862, %v2453, 0
        %v2458 = vsel %vm902, %v2444, 0
        %2460 = vmatprep.subr.mxu0 0.0
        %2461 = vmatpush1.msra.mxu0 %v2438
        %2462 = vmatprep.subr.mxu0 0.0
        %2463 = vmatpush1.msra.mxu0 %v2437
        %2464 = vmatprep.subr.mxu0 0.0
        %2465 = vmatpush1.msra.mxu0 %v2436
        %2466 = vmatprep.subr.mxu0 0.0
        %2467 = vmatpush1.msra.mxu0 %v2435
        %2468 = vmatprep.subr.mxu0 0.0
        %2469 = vmatpush1.msra.mxu0 %v2434
        %2470 = vmatprep.subr.mxu0 0.0
        %2471 = vmatpush1.msra.mxu0 %v2433
        %2472 = vmatprep.subr.mxu0 0.0
        %2473 = vmatpush1.msra.mxu0 %v2432
        %2474 = vmatprep.subr.mxu0 0.0
        %2475 = vmatpush1.msra.mxu0 %v2431
        %2476 = vmatprep.subr.mxu0 0.0
        %2477 = vmatpush1.msra.mxu0 %v2430
        %2478 = vmatprep.subr.mxu0 0.0
        %2479 = vmatpush1.msra.mxu0 %v2429
        %2480 = vmatprep.subr.mxu0 0.0
        %2481 = vmatpush1.msra.mxu0 %v2428
        %2482 = vmatprep.subr.mxu0 0.0
        %2483 = vmatpush1.msra.mxu0 %v2427
        %2484 = vmatprep.subr.mxu0 0.0
        %2485 = vmatpush1.msra.mxu0 %v2426
        %2486 = vmatprep.subr.mxu0 0.0
        %2487 = vmatpush1.msra.mxu0 %v2425
        %2488 = vmatprep.subr.mxu0 0.0
        %2489 = vmatpush1.msra.mxu0 %v2424
        %2490 = vmatprep.subr.mxu0 0.0
        %2491 = vmatpush1.msra.mxu0 %v2423
        %2492 = vmatprep.subr.mxu0 0.0
        %2493 = vmatpush2.msra.mxu0 0.0
        %2494 = vmatprep.subr.mxu0 0.0
        %2495 = vmatpush2.msra.mxu0 0.0
        %2496 = vmatprep.subr.mxu0 0.0
        %2497 = vmatpush2.msra.mxu0 0.0
        %2498 = vmatprep.subr.mxu0 0.0
        %2499 = vmatpush2.msra.mxu0 0.0
        %2500 = vmatprep.subr.mxu0 0.0
        %2501 = vmatpush2.msra.mxu0 0.0
        %2502 = vmatprep.subr.mxu0 0.0
        %2503 = vmatpush2.msra.mxu0 0.0
        %2504 = vmatprep.subr.mxu0 0.0
        %2505 = vmatpush2.msra.mxu0 0.0
        %2506 = vmatprep.subr.mxu0 0.0
        %2507 = vmatpush2.msra.mxu0 0.0
        %2508 = vmatprep.subr.mxu0 0.0
        %2509 = vmatpush2.msra.mxu0 0.0
        %2510 = vmatprep.subr.mxu0 0.0
        %2511 = vmatpush2.msra.mxu0 0.0
        %2512 = vmatprep.subr.mxu0 0.0
        %2513 = vmatpush2.msra.mxu0 %v2458
        %2514 = vmatprep.subr.mxu0 0.0
        %2515 = vmatpush2.msra.mxu0 %v2443
        %2516 = vmatprep.subr.mxu0 0.0
        %2517 = vmatpush2.msra.mxu0 %v2442
        %2518 = vmatprep.subr.mxu0 0.0
        %2519 = vmatpush2.msra.mxu0 %v2441
        %2520 = vmatprep.subr.mxu0 0.0
        %2521 = vmatpush2.msra.mxu0 %v2440
        %2522 = vmatprep.subr.mxu0 0.0
        %2523 = vmatpush2.msra.mxu0 %v2439
        %2524 = vmatprep.mubr.f32.mxu0 %v2455
        %2525 = vmatmul.mubr.f32.gmra.mxu0 %v2449
        %v2526 = vpop.f32.mrf.mxu0
        %v2527 = vadd.f32 0.0, %v2526
        %v2528 = vpop.f32.mrf.mxu0
        %2529 = vdwg.mxu0
        %v2530 = vadd.f32 %v2419, %v2527
        %s2531 = scalar_lea.vmem [#allocation2], 23
        %v2532 = vld [vmem:[%s2531] ss:$8 sm:$0x3]
        %s2533 = scalar_lea.vmem %s3, 2640
        %v2534 = vld [vmem:[%s2533] sm:$0xff]
        %v2535 = vld [vmem:[%s2533 + $0x8] sm:$0xff]
        %v2536 = vld [vmem:[%s2533 + $0x10] sm:$0xff]
        %v2537 = vld [vmem:[%s2533 + $0x18] sm:$0xff]
        %v2538 = vld [vmem:[%s2533 + $0x20] sm:$0xff]
        %v2539 = vld [vmem:[%s2533 + $0x28] sm:$0xff]
        %v2540 = vld [vmem:[%s2533 + $0x30] sm:$0xff]
        %v2541 = vld [vmem:[%s2533 + $0x38] sm:$0xff]
        %v2542 = vld [vmem:[%s2533 + $0x40] sm:$0xff]
        %v2543 = vld [vmem:[%s2533 + $0x48] sm:$0xff]
        %v2544 = vld [vmem:[%s2533 + $0x50] sm:$0xff]
        %v2545 = vld [vmem:[%s2533 + $0x58] sm:$0xff]
        %v2546 = vld [vmem:[%s2533 + $0x60] sm:$0xff]
        %v2547 = vld [vmem:[%s2533 + $0x68] sm:$0xff]
        %v2548 = vld [vmem:[%s2533 + $0x70] sm:$0xff]
        %v2549 = vld [vmem:[%s2533 + $0x78] sm:$0xff]
        %v2550 = vld [vmem:[%s2533 + $0x80] sm:$0xff]
        %v2551 = vld [vmem:[%s2533 + $0x88] sm:$0xff]
        %v2552 = vld [vmem:[%s2533 + $0x90] sm:$0xff]
        %v2553 = vld [vmem:[%s2533 + $0x98] sm:$0xff]
        %v2554 = vld [vmem:[%s2533 + $0xa0] sm:$0xff]
        %v2555 = vld [vmem:[%s2533 + $0xa8] sm:$0x1]
        %v2557 = vlaneseq
        %v2558 = vshrl.u32 %v2557, 7
        %v2559 = vsub.s32 0, %v2558
        %v2560 = vrot.slane %v2532, %v2559
        %v2561 = vlaneseq
        %v2562 = vshrl.u32 %v2561, 7
        %v2563 = vsub.s32 1, %v2562
        %v2564 = vrot.slane %v2532, %v2563
        %v2566 = vsel %vm862, %v2564, 0
        %v2569 = vsel %vm902, %v2555, 0
        %2571 = vmatprep.subr.mxu0 0.0
        %2572 = vmatpush1.msra.mxu0 %v2549
        %2573 = vmatprep.subr.mxu0 0.0
        %2574 = vmatpush1.msra.mxu0 %v2548
        %2575 = vmatprep.subr.mxu0 0.0
        %2576 = vmatpush1.msra.mxu0 %v2547
        %2577 = vmatprep.subr.mxu0 0.0
        %2578 = vmatpush1.msra.mxu0 %v2546
        %2579 = vmatprep.subr.mxu0 0.0
        %2580 = vmatpush1.msra.mxu0 %v2545
        %2581 = vmatprep.subr.mxu0 0.0
        %2582 = vmatpush1.msra.mxu0 %v2544
        %2583 = vmatprep.subr.mxu0 0.0
        %2584 = vmatpush1.msra.mxu0 %v2543
        %2585 = vmatprep.subr.mxu0 0.0
        %2586 = vmatpush1.msra.mxu0 %v2542
        %2587 = vmatprep.subr.mxu0 0.0
        %2588 = vmatpush1.msra.mxu0 %v2541
        %2589 = vmatprep.subr.mxu0 0.0
        %2590 = vmatpush1.msra.mxu0 %v2540
        %2591 = vmatprep.subr.mxu0 0.0
        %2592 = vmatpush1.msra.mxu0 %v2539
        %2593 = vmatprep.subr.mxu0 0.0
        %2594 = vmatpush1.msra.mxu0 %v2538
        %2595 = vmatprep.subr.mxu0 0.0
        %2596 = vmatpush1.msra.mxu0 %v2537
        %2597 = vmatprep.subr.mxu0 0.0
        %2598 = vmatpush1.msra.mxu0 %v2536
        %2599 = vmatprep.subr.mxu0 0.0
        %2600 = vmatpush1.msra.mxu0 %v2535
        %2601 = vmatprep.subr.mxu0 0.0
        %2602 = vmatpush1.msra.mxu0 %v2534
        %2603 = vmatprep.subr.mxu0 0.0
        %2604 = vmatpush2.msra.mxu0 0.0
        %2605 = vmatprep.subr.mxu0 0.0
        %2606 = vmatpush2.msra.mxu0 0.0
        %2607 = vmatprep.subr.mxu0 0.0
        %2608 = vmatpush2.msra.mxu0 0.0
        %2609 = vmatprep.subr.mxu0 0.0
        %2610 = vmatpush2.msra.mxu0 0.0
        %2611 = vmatprep.subr.mxu0 0.0
        %2612 = vmatpush2.msra.mxu0 0.0
        %2613 = vmatprep.subr.mxu0 0.0
        %2614 = vmatpush2.msra.mxu0 0.0
        %2615 = vmatprep.subr.mxu0 0.0
        %2616 = vmatpush2.msra.mxu0 0.0
        %2617 = vmatprep.subr.mxu0 0.0
        %2618 = vmatpush2.msra.mxu0 0.0
        %2619 = vmatprep.subr.mxu0 0.0
        %2620 = vmatpush2.msra.mxu0 0.0
        %2621 = vmatprep.subr.mxu0 0.0
        %2622 = vmatpush2.msra.mxu0 0.0
        %2623 = vmatprep.subr.mxu0 0.0
        %2624 = vmatpush2.msra.mxu0 %v2569
        %2625 = vmatprep.subr.mxu0 0.0
        %2626 = vmatpush2.msra.mxu0 %v2554
        %2627 = vmatprep.subr.mxu0 0.0
        %2628 = vmatpush2.msra.mxu0 %v2553
        %2629 = vmatprep.subr.mxu0 0.0
        %2630 = vmatpush2.msra.mxu0 %v2552
        %2631 = vmatprep.subr.mxu0 0.0
        %2632 = vmatpush2.msra.mxu0 %v2551
        %2633 = vmatprep.subr.mxu0 0.0
        %2634 = vmatpush2.msra.mxu0 %v2550
        %2635 = vmatprep.mubr.f32.mxu0 %v2566
        %2636 = vmatmul.mubr.f32.gmra.mxu0 %v2560
        %v2637 = vpop.f32.mrf.mxu0
        %v2638 = vadd.f32 0.0, %v2637
        %v2639 = vpop.f32.mrf.mxu0
        %2640 = vdwg.mxu0
        %v2641 = vadd.f32 %v2530, %v2638
        %v2642 = vmax.f32 %v2641, 0.0
        %v2643 = vld [vmem:[%s5] sm:$0xff]
        %v2644 = vld [vmem:[%s5 + $0x8] sm:$0xff]
        %v2645 = vld [vmem:[%s5 + $0x10] sm:$0xff]
        %v2646 = vld [vmem:[%s5 + $0x18] sm:$0xff]
        %v2647 = vld [vmem:[%s5 + $0x20] sm:$0xff]
        %v2648 = vld [vmem:[%s5 + $0x28] sm:$0xff]
        %v2649 = vld [vmem:[%s5 + $0x30] sm:$0xff]
        %v2650 = vld [vmem:[%s5 + $0x38] sm:$0xff]
        %v2651 = vld [vmem:[%s5 + $0x40] sm:$0xff]
        %v2652 = vld [vmem:[%s5 + $0x48] sm:$0xff]
        %v2653 = vld [vmem:[%s5 + $0x50] sm:$0xff]
        %v2654 = vld [vmem:[%s5 + $0x58] sm:$0xff]
        %v2655 = vld [vmem:[%s5 + $0x60] sm:$0xff]
        %v2656 = vld [vmem:[%s5 + $0x68] sm:$0xff]
        %v2657 = vld [vmem:[%s5 + $0x70] sm:$0xff]
        %v2658 = vld [vmem:[%s6] sm:$0x1]
        %vm2659 = vcmask 982016
        %v2661 = vsel %vm2659, %v2642, 0
        %2663 = vmatprep.subr.mxu0 0.0
        %2664 = vmatpush1.msra.mxu0 0.0
        %2665 = vmatprep.subr.mxu0 0.0
        %2666 = vmatpush1.msra.mxu0 %v2657
        %2667 = vmatprep.subr.mxu0 0.0
        %2668 = vmatpush1.msra.mxu0 %v2656
        %2669 = vmatprep.subr.mxu0 0.0
        %2670 = vmatpush1.msra.mxu0 %v2655
        %2671 = vmatprep.subr.mxu0 0.0
        %2672 = vmatpush1.msra.mxu0 %v2654
        %2673 = vmatprep.subr.mxu0 0.0
        %2674 = vmatpush1.msra.mxu0 %v2653
        %2675 = vmatprep.subr.mxu0 0.0
        %2676 = vmatpush1.msra.mxu0 %v2652
        %2677 = vmatprep.subr.mxu0 0.0
        %2678 = vmatpush1.msra.mxu0 %v2651
        %2679 = vmatprep.subr.mxu0 0.0
        %2680 = vmatpush1.msra.mxu0 %v2650
        %2681 = vmatprep.subr.mxu0 0.0
        %2682 = vmatpush1.msra.mxu0 %v2649
        %2683 = vmatprep.subr.mxu0 0.0
        %2684 = vmatpush1.msra.mxu0 %v2648
        %2685 = vmatprep.subr.mxu0 0.0
        %2686 = vmatpush1.msra.mxu0 %v2647
        %2687 = vmatprep.subr.mxu0 0.0
        %2688 = vmatpush1.msra.mxu0 %v2646
        %2689 = vmatprep.subr.mxu0 0.0
        %2690 = vmatpush1.msra.mxu0 %v2645
        %2691 = vmatprep.subr.mxu0 0.0
        %2692 = vmatpush1.msra.mxu0 %v2644
        %2693 = vmatprep.subr.mxu0 0.0
        %2694 = vmatpush1.msra.mxu0 %v2643
        %2695 = vmatprep.subr.mxu0 0.0
        %2696 = vmatpush2.msra.mxu0 0.0
        %2697 = vmatprep.subr.mxu0 0.0
        %2698 = vmatpush2.msra.mxu0 0.0
        %2699 = vmatprep.subr.mxu0 0.0
        %2700 = vmatpush2.msra.mxu0 0.0
        %2701 = vmatprep.subr.mxu0 0.0
        %2702 = vmatpush2.msra.mxu0 0.0
        %2703 = vmatprep.subr.mxu0 0.0
        %2704 = vmatpush2.msra.mxu0 0.0
        %2705 = vmatprep.subr.mxu0 0.0
        %2706 = vmatpush2.msra.mxu0 0.0
        %2707 = vmatprep.subr.mxu0 0.0
        %2708 = vmatpush2.msra.mxu0 0.0
        %2709 = vmatprep.subr.mxu0 0.0
        %2710 = vmatpush2.msra.mxu0 0.0
        %2711 = vmatprep.subr.mxu0 0.0
        %2712 = vmatpush2.msra.mxu0 0.0
        %2713 = vmatprep.subr.mxu0 0.0
        %2714 = vmatpush2.msra.mxu0 0.0
        %2715 = vmatprep.subr.mxu0 0.0
        %2716 = vmatpush2.msra.mxu0 0.0
        %2717 = vmatprep.subr.mxu0 0.0
        %2718 = vmatpush2.msra.mxu0 0.0
        %2719 = vmatprep.subr.mxu0 0.0
        %2720 = vmatpush2.msra.mxu0 0.0
        %2721 = vmatprep.subr.mxu0 0.0
        %2722 = vmatpush2.msra.mxu0 0.0
        %2723 = vmatprep.subr.mxu0 0.0
        %2724 = vmatpush2.msra.mxu0 0.0
        %2725 = vmatprep.subr.mxu0 0.0
        %2726 = vmatpush2.msra.mxu0 0.0
        %2727 = vmatprep.mubr.f32.mxu0 0.0
        %2728 = vmatmul.mubr.f32.gmra.mxu0 %v2661
        %v2729 = vpop.f32.mrf.mxu0
        %v2730 = vadd.f32 %v2658, %v2729
        %v2731 = vpop.f32.mrf.mxu0
        %2732 = vdwg.mxu0
        %v2733 = vmax.f32 %v2730, 0.0
        %v2734 = vld [vmem:[%s7] sm:$0xff]
        %v2735 = vld [vmem:[%s7 + $0x8] sm:$0xff]
        %v2736 = vld [vmem:[%s7 + $0x10] sm:$0xff]
        %v2737 = vld [vmem:[%s7 + $0x18] sm:$0xff]
        %v2738 = vld [vmem:[%s7 + $0x20] sm:$0xff]
        %v2739 = vld [vmem:[%s7 + $0x28] sm:$0xff]
        %v2740 = vld [vmem:[%s7 + $0x30] sm:$0xff]
        %v2741 = vld [vmem:[%s7 + $0x38] sm:$0xff]
        %v2742 = vld [vmem:[%s7 + $0x40] sm:$0xff]
        %v2743 = vld [vmem:[%s7 + $0x48] sm:$0xff]
        %v2744 = vld [vmem:[%s7 + $0x50] sm:$0xf]
        %v2745 = vld [vmem:[%s8] sm:$0x1]
        %vm2746 = vcmask 687104
        %v2748 = vsel %vm2746, %v2733, 0
        %vm2750 = vcmask 1043456
        %v2752 = vsel %vm2750, %v2744, 0
        %2754 = vmatprep.subr.mxu0 0.0
        %2755 = vmatpush1.msra.mxu0 0.0
        %2756 = vmatprep.subr.mxu0 0.0
        %2757 = vmatpush1.msra.mxu0 0.0
        %2758 = vmatprep.subr.mxu0 0.0
        %2759 = vmatpush1.msra.mxu0 0.0
        %2760 = vmatprep.subr.mxu0 0.0
        %2761 = vmatpush1.msra.mxu0 0.0
        %2762 = vmatprep.subr.mxu0 0.0
        %2763 = vmatpush1.msra.mxu0 0.0
        %2764 = vmatprep.subr.mxu0 0.0
        %2765 = vmatpush1.msra.mxu0 %v2752
        %2766 = vmatprep.subr.mxu0 0.0
        %2767 = vmatpush1.msra.mxu0 %v2743
        %2768 = vmatprep.subr.mxu0 0.0
        %2769 = vmatpush1.msra.mxu0 %v2742
        %2770 = vmatprep.subr.mxu0 0.0
        %2771 = vmatpush1.msra.mxu0 %v2741
        %2772 = vmatprep.subr.mxu0 0.0
        %2773 = vmatpush1.msra.mxu0 %v2740
        %2774 = vmatprep.subr.mxu0 0.0
        %2775 = vmatpush1.msra.mxu0 %v2739
        %2776 = vmatprep.subr.mxu0 0.0
        %2777 = vmatpush1.msra.mxu0 %v2738
        %2778 = vmatprep.subr.mxu0 0.0
        %2779 = vmatpush1.msra.mxu0 %v2737
        %2780 = vmatprep.subr.mxu0 0.0
        %2781 = vmatpush1.msra.mxu0 %v2736
        %2782 = vmatprep.subr.mxu0 0.0
        %2783 = vmatpush1.msra.mxu0 %v2735
        %2784 = vmatprep.subr.mxu0 0.0
        %2785 = vmatpush1.msra.mxu0 %v2734
        %2786 = vmatprep.subr.mxu0 0.0
        %2787 = vmatpush2.msra.mxu0 0.0
        %2788 = vmatprep.subr.mxu0 0.0
        %2789 = vmatpush2.msra.mxu0 0.0
        %2790 = vmatprep.subr.mxu0 0.0
        %2791 = vmatpush2.msra.mxu0 0.0
        %2792 = vmatprep.subr.mxu0 0.0
        %2793 = vmatpush2.msra.mxu0 0.0
        %2794 = vmatprep.subr.mxu0 0.0
        %2795 = vmatpush2.msra.mxu0 0.0
        %2796 = vmatprep.subr.mxu0 0.0
        %2797 = vmatpush2.msra.mxu0 0.0
        %2798 = vmatprep.subr.mxu0 0.0
        %2799 = vmatpush2.msra.mxu0 0.0
        %2800 = vmatprep.subr.mxu0 0.0
        %2801 = vmatpush2.msra.mxu0 0.0
        %2802 = vmatprep.subr.mxu0 0.0
        %2803 = vmatpush2.msra.mxu0 0.0
        %2804 = vmatprep.subr.mxu0 0.0
        %2805 = vmatpush2.msra.mxu0 0.0
        %2806 = vmatprep.subr.mxu0 0.0
        %2807 = vmatpush2.msra.mxu0 0.0
        %2808 = vmatprep.subr.mxu0 0.0
        %2809 = vmatpush2.msra.mxu0 0.0
        %2810 = vmatprep.subr.mxu0 0.0
        %2811 = vmatpush2.msra.mxu0 0.0
        %2812 = vmatprep.subr.mxu0 0.0
        %2813 = vmatpush2.msra.mxu0 0.0
        %2814 = vmatprep.subr.mxu0 0.0
        %2815 = vmatpush2.msra.mxu0 0.0
        %2816 = vmatprep.subr.mxu0 0.0
        %2817 = vmatpush2.msra.mxu0 0.0
        %2818 = vmatprep.mubr.f32.mxu0 0.0
        %2819 = vmatmul.mubr.f32.gmra.mxu0 %v2748
        %v2820 = vpop.f32.mrf.mxu0
        %v2821 = vadd.f32 %v2745, %v2820
        %v2822 = vpop.f32.mrf.mxu0
        %2823 = vdwg.mxu0
        %vm2824 = vcmask 8192
        %2825 = vst.msk [vmem:[%s324] sm:$0x1] %vm2824, %v2821
        %s2826 = sand.u32 %s225, 1
        %s2827 = scalar_lea.sflag [#allocation4], %s2826
        %s2828 = sand.u32 %s225, 1
        %s2829 = scalar_lea.vmem [#allocation3], %s2828
        // Predicated region
        $region57: #{simple_cnn_forward.3} parent=55 // pred_check
          %p2830 = pneg %p235
        $region58: #{simple_cnn_forward.3} parent=55 // pred_check_branch
          %2832 = sbr.rel (%p2830) target = $region60
        $region59: #{simple_cnn_forward.3} parent=55 // pred_region
          %s2834 = ssub.s32 16, 16
          %2835 = vsyncadd %s2827, %s2834
          %s2836 = smul.addr %s23, 16
          %s2837 = scalar_lea.hbm %s9, %s2836
          %s2839 = sshll.u32 %s2829, 4
          %s2840 = int_to_ptr.vmem [resolvable:$true] %s2839
          %2842 = dma.vmem_to_hbm [thread:$0]  %s2840, 16, %s2837, %s2827
        $region60: #{simple_cnn_forward.3} parent=55 // pred_fallthru
          _
      $region56: #{simple_cnn_forward.3} parent=5 // pred_fallthru
        _
      %p2843 = scmp.le.s32.totalorder 2, %s18
      // Predicated region
      $region61: #{simple_cnn_forward.3} parent=5 // pred_check
        %p2844 = pneg %p2843
      $region62: #{simple_cnn_forward.3} parent=5 // pred_check_branch
        %2846 = sbr.rel (%p2844) target = $region64
      $region63: #{simple_cnn_forward.3} parent=5 // pred_region
        %s2847 = ssub.s32 %s18, 2
        // Predicated region
        $region65: #{simple_cnn_forward.3} parent=63 // pred_check
          %p2848 = pneg %p241
        $region66: #{simple_cnn_forward.3} parent=63 // pred_check_branch
          %2850 = sbr.rel (%p2848) target = $region68
        $region67: #{simple_cnn_forward.3} parent=63 // pred_region
          %s2851 = sand.u32 %s226, 1
          %s2852 = scalar_lea.sflag [#allocation4], %s2851
          %s2853 = sand.u32 %s226, 1
          %s2854 = scalar_lea.vmem [#allocation3], %s2853
          %2855 = dma.done %s2852, 16
        $region68: #{simple_cnn_forward.3} parent=63 // pred_fallthru
          _
      $region64: #{simple_cnn_forward.3} parent=5 // pred_fallthru
        _
    $region6: #{simple_cnn_forward.3} parent=1 // loop_footer
      %s22 = sadd.s32 1, %s18
    $region7: #{simple_cnn_forward.3} parent=1 // loop_footer_branch
      %17 = sbr.rel target = $region3
    $region8: #{simple_cnn_forward.3} parent=1 // loop_exit
      _
    %2856 = vsyncpa [#allocation4], 1
    %s2857 = scalar_lea.sflag [#allocation4], 1
    %2858 = vsyncpa %s2857, 1

</llo_original>
